<compile_context>
chip_gen: v6e
topology: v6e:2x2x1
jax: 0.10.0
libtpu: 0.0.40
codegen_flags: <defaults>
</compile_context>

<pallas_src>
import functools

import jax
import jax.numpy as jnp
from jax.experimental import pallas as pl
from jax.experimental.pallas import tpu as pltpu


def _pick_tk(k_dim):
    """Largest K-tile (rows of W2 per grid step) that divides k_dim and keeps
    the double-buffered weight tile <= 8 MiB on every TPU generation."""
    for tk in (512, 256, 128):
        if k_dim % tk == 0:
            return tk
    return k_dim


# -----------------------------------------------------------------------------
# Fused kernel. Grid = (inter_dim // tk,) over the K axis of layer 2 only.
#   step 0      : h1 = sigmoid(x @ W1 + b1)   (layer 1, whole weight resident)
#   every step  : acc2 += h1[:, k*tk:(k+1)*tk] @ W2[k*tk:(k+1)*tk, :]
#   last step   : h2 = sigmoid(acc2 + b2); z3 = h2 @ W3 + b3; out = softmax(z3)
# -----------------------------------------------------------------------------
def _fused_mlp_kernel(x_ref, w1_ref, b1_ref, w2_ref, b2_ref, w3_ref, b3_ref,
                      o_ref, h1_ref, acc2_ref, *, tk):
    k = pl.program_id(0)

    @pl.when(k == 0)
    def _():
        # Layer 1: small K, done in one shot; result kept resident in VMEM.
        z1 = jnp.dot(x_ref[...], w1_ref[...], preferred_element_type=jnp.float32)
        h1_ref[...] = jax.nn.sigmoid(z1 + b1_ref[...])
        acc2_ref[...] = jnp.zeros_like(acc2_ref)

    # Layer 2 (dominant, weight-streaming bound): one (tk, inter) slab of W2
    # per grid step, accumulated into VMEM scratch.
    kk = pl.multiple_of(k * tk, tk)
    acc2_ref[...] += jnp.dot(
        h1_ref[:, pl.ds(kk, tk)], w2_ref[...],
        preferred_element_type=jnp.float32,
    )

    @pl.when(k == pl.num_programs(0) - 1)
    def _():
        h2 = jax.nn.sigmoid(acc2_ref[...] + b2_ref[...])
        # Layer 3 + softmax(dim=1) epilogue on the tiny (B, C_out) tile.
        z3 = jnp.dot(h2, w3_ref[...], preferred_element_type=jnp.float32) + b3_ref[...]
        m = jnp.max(z3, axis=-1, keepdims=True)
        e = jnp.exp(z3 - m)
        s = jnp.sum(e, axis=-1, keepdims=True)
        # approx=False keeps the f32 result within 1e-5 of the reference; the
        # epilogue is a single (B, C_out) tile so the exact divide is free.
        o_ref[...] = (e * pl.reciprocal(s, approx=False)).astype(o_ref.dtype)


def mlp_forward_pallas(x, params):
    """x: (B, C_in) f32. params: ((W1t,b1),(W2t,b2),(W3t,b3)) with Wt stored
    (in, out) and b stored (1, out)."""
    (w1t, b1), (w2t, b2), (w3t, b3) = params
    B, C_in = x.shape
    K1, H = w1t.shape
    H2a, H2b = w2t.shape
    H3, C_out = w3t.shape
    assert C_in == K1 and H == H2a == H2b == H3

    tk = _pick_tk(H)
    nk = H // tk

    kernel = functools.partial(_fused_mlp_kernel, tk=tk)
    return pl.pallas_call(
        kernel,
        out_shape=jax.ShapeDtypeStruct((B, C_out), jnp.float32),
        grid_spec=pltpu.PrefetchScalarGridSpec(
            num_scalar_prefetch=0,
            grid=(nk,),
            in_specs=[
                pl.BlockSpec((B, C_in), lambda k: (0, 0)),      # x     (resident)
                pl.BlockSpec((C_in, H), lambda k: (0, 0)),      # W1^T  (resident)
                pl.BlockSpec((1, H), lambda k: (0, 0)),         # b1    (resident)
                pl.BlockSpec((tk, H), lambda k: (k, 0)),        # W2^T  (streamed over K)
                pl.BlockSpec((1, H), lambda k: (0, 0)),         # b2    (resident)
                pl.BlockSpec((H, C_out), lambda k: (0, 0)),     # W3^T  (resident)
                pl.BlockSpec((1, C_out), lambda k: (0, 0)),     # b3    (resident)
            ],
            out_specs=pl.BlockSpec((B, C_out), lambda k: (0, 0)),
            scratch_shapes=[
                pltpu.VMEM((B, H), jnp.float32),   # h1 (layer-1 activations)
                pltpu.VMEM((B, H), jnp.float32),   # layer-2 accumulator
            ],
        ),
        compiler_params=pltpu.CompilerParams(
            dimension_semantics=("arbitrary",),        # K axis is a reduction
            vmem_limit_bytes=40 * 1024 * 1024,         # headroom on v5e/v6e, safe on v7x (64 MiB phys)
        ),
    )(x, w1t, b1, w2t, b2, w3t, b3)


def init_mlp_params(key, in_dim, inter_dim, out_dim):
    """nn.Linear-style U(-1/sqrt(fan_in), +1/sqrt(fan_in)) init, stored
    pre-transposed: W as (in, out), b as (1, out).  Mathematically identical to
    PyTorch's (out, in) weight used as x @ W.T + b, but with zero per-forward
    transpose traffic."""
    def linear_init(k, fan_in, fan_out):
        kw, kb = jax.random.split(k)
        bound = float(fan_in) ** -0.5
        w_t = jax.random.uniform(kw, (fan_in, fan_out), jnp.float32, -bound, bound)
        b = jax.random.uniform(kb, (1, fan_out), jnp.float32, -bound, bound)
        return w_t, b

    k1, k2, k3 = jax.random.split(key, 3)
    return (
        linear_init(k1, in_dim, inter_dim),
        linear_init(k2, inter_dim, inter_dim),
        linear_init(k3, inter_dim, out_dim),
    )


def mlp_reference(x, params):
    (w1t, b1), (w2t, b2), (w3t, b3) = params
    h = jax.nn.sigmoid(x @ w1t + b1)
    h = jax.nn.sigmoid(h @ w2t + b2)
    h = h @ w3t + b3
    return jax.nn.softmax(h, axis=1)


if __name__ == "__main__":
    B, C_in, INTER, C_out = 8, 256, 2048, 16

    key = jax.random.PRNGKey(0)
    kx, kp = jax.random.split(key)
    x = jax.random.normal(kx, (B, C_in), jnp.float32)
    params = init_mlp_params(kp, C_in, INTER, C_out)

    fwd = jax.jit(mlp_forward_pallas)
    y = fwd(x, params)
    jax.block_until_ready(y)

    y_ref = mlp_reference(x, params)
    assert y.shape == (B, C_out)
    assert jnp.allclose(y, y_ref, atol=1e-5, rtol=1e-5)
    assert jnp.allclose(jnp.sum(y, axis=1), jnp.ones((B,)), atol=1e-5)

    print("KERNEL_OK")
</pallas_src>

<mosaic_0001>
module attributes {stable_mosaic.version = 11 : i64} {
  func.func @_fused_mlp_kernel(%arg0: i32, %arg1: memref<8x256xf32, #tpu.memory_space<vmem>>, %arg2: memref<256x2048xf32, #tpu.memory_space<vmem>>, %arg3: memref<1x2048xf32, #tpu.memory_space<vmem>>, %arg4: memref<512x2048xf32, #tpu.memory_space<vmem>>, %arg5: memref<1x2048xf32, #tpu.memory_space<vmem>>, %arg6: memref<2048x16xf32, #tpu.memory_space<vmem>>, %arg7: memref<1x16xf32, #tpu.memory_space<vmem>>, %arg8: memref<8x16xf32, #tpu.memory_space<vmem>>, %arg9: memref<8x2048xf32, #tpu.memory_space<vmem>>, %arg10: memref<8x2048xf32, #tpu.memory_space<vmem>>) attributes {dimension_semantics = [#tpu.dimension_semantics<arbitrary>], iteration_bounds = array<i64: 4>, scalar_prefetch = 0 : i64, scratch_operands = 2 : i64, tpu.core_type = #tpu.core_type<tc>, window_params = [{pipeline_mode = #tpu.pipeline_mode<synchronous>, transform_indices = @transform_0, window_bounds = array<i64: 8, 256>}, {pipeline_mode = #tpu.pipeline_mode<synchronous>, transform_indices = @transform_1, window_bounds = array<i64: 256, 2048>}, {pipeline_mode = #tpu.pipeline_mode<synchronous>, transform_indices = @transform_2, window_bounds = array<i64: 1, 2048>}, {transform_indices = @transform_3, window_bounds = array<i64: 512, 2048>}, {pipeline_mode = #tpu.pipeline_mode<synchronous>, transform_indices = @transform_4, window_bounds = array<i64: 1, 2048>}, {pipeline_mode = #tpu.pipeline_mode<synchronous>, transform_indices = @transform_5, window_bounds = array<i64: 2048, 16>}, {pipeline_mode = #tpu.pipeline_mode<synchronous>, transform_indices = @transform_6, window_bounds = array<i64: 1, 16>}, {pipeline_mode = #tpu.pipeline_mode<synchronous>, transform_indices = @transform_7, window_bounds = array<i64: 8, 16>}]} {
    %c0_i32 = arith.constant 0 : i32
    %0 = arith.cmpi eq, %arg0, %c0_i32 : i32
    %1 = arith.extui %0 : i1 to i32
    %c0_i32_0 = arith.constant 0 : i32
    %2 = arith.cmpi ne, %1, %c0_i32_0 : i32
    scf.if %2 {
      %c0_8 = arith.constant 0 : index
      %c0_9 = arith.constant 0 : index
      %15 = vector.load %arg1[%c0_8, %c0_9] : memref<8x256xf32, #tpu.memory_space<vmem>>, vector<8x256xf32>
      %c0_10 = arith.constant 0 : index
      %c0_11 = arith.constant 0 : index
      %16 = vector.load %arg2[%c0_10, %c0_11] : memref<256x2048xf32, #tpu.memory_space<vmem>>, vector<256x2048xf32>
      %cst_12 = arith.constant dense<0.000000e+00> : vector<8x2048xf32>
      %17 = tpu.matmul %15, %16, %cst_12 {dimension_numbers = #tpu.dot_dimension_numbers<[1], [0], [0], [1], [0, 0, 1, 1], [], []>} : vector<8x256xf32>, vector<256x2048xf32>, vector<8x2048xf32> -> vector<8x2048xf32>
      %c0_13 = arith.constant 0 : index
      %c0_14 = arith.constant 0 : index
      %18 = vector.load %arg3[%c0_13, %c0_14] : memref<1x2048xf32, #tpu.memory_space<vmem>>, vector<1x2048xf32>
      %19 = vector.broadcast %18 : vector<1x2048xf32> to vector<8x2048xf32>
      %20 = arith.addf %17, %19 : vector<8x2048xf32>
      %21 = arith.negf %20 : vector<8x2048xf32>
      %22 = math.exp %21 : vector<8x2048xf32>
      %cst_15 = arith.constant 1.000000e+00 : f32
      %23 = vector.broadcast %cst_15 : f32 to vector<8x2048xf32>
      %24 = arith.addf %23, %22 : vector<8x2048xf32>
      %25 = arith.divf %23, %24 : vector<8x2048xf32>
      %c0_16 = arith.constant 0 : index
      %c0_17 = arith.constant 0 : index
      %26 = vector.load %arg9[%c0_16, %c0_17] : memref<8x2048xf32, #tpu.memory_space<vmem>>, vector<8x2048xf32>
      tpu.vector_store %arg9[%c0_16, %c0_17], %25 {strides = array<i32>} : memref<8x2048xf32, #tpu.memory_space<vmem>>, vector<8x2048xf32>,
      %cst_18 = arith.constant 0.000000e+00 : f32
      %27 = vector.broadcast %cst_18 : f32 to vector<8x2048xf32>
      %c0_19 = arith.constant 0 : index
      %c0_20 = arith.constant 0 : index
      %28 = vector.load %arg10[%c0_19, %c0_20] : memref<8x2048xf32, #tpu.memory_space<vmem>>, vector<8x2048xf32>
      tpu.vector_store %arg10[%c0_19, %c0_20], %27 {strides = array<i32>} : memref<8x2048xf32, #tpu.memory_space<vmem>>, vector<8x2048xf32>,
    } else {
    }
    %c512_i32 = arith.constant 512 : i32
    %3 = arith.muli %arg0, %c512_i32 : i32
    %4 = tpu.assume_multiple %3, 512 : i32
    %c0 = arith.constant 0 : index
    %c0_1 = arith.constant 0 : index
    %5 = vector.load %arg10[%c0, %c0_1] : memref<8x2048xf32, #tpu.memory_space<vmem>>, vector<8x2048xf32>
    %c0_2 = arith.constant 0 : index
    %6 = arith.index_cast %4 : i32 to index
    %7 = vector.load %arg9[%c0_2, %6] : memref<8x2048xf32, #tpu.memory_space<vmem>>, vector<8x512xf32>
    %c0_3 = arith.constant 0 : index
    %c0_4 = arith.constant 0 : index
    %8 = vector.load %arg4[%c0_3, %c0_4] : memref<512x2048xf32, #tpu.memory_space<vmem>>, vector<512x2048xf32>
    %cst = arith.constant dense<0.000000e+00> : vector<8x2048xf32>
    %9 = tpu.matmul %7, %8, %cst {dimension_numbers = #tpu.dot_dimension_numbers<[1], [0], [0], [1], [0, 0, 1, 1], [], []>} : vector<8x512xf32>, vector<512x2048xf32>, vector<8x2048xf32> -> vector<8x2048xf32>
    %10 = arith.addf %5, %9 : vector<8x2048xf32>
    %c0_5 = arith.constant 0 : index
    %c0_6 = arith.constant 0 : index
    %11 = vector.load %arg10[%c0_5, %c0_6] : memref<8x2048xf32, #tpu.memory_space<vmem>>, vector<8x2048xf32>
    tpu.vector_store %arg10[%c0_5, %c0_6], %10 {strides = array<i32>} : memref<8x2048xf32, #tpu.memory_space<vmem>>, vector<8x2048xf32>,
    %c3_i32 = arith.constant 3 : i32
    %12 = arith.cmpi eq, %arg0, %c3_i32 : i32
    %13 = arith.extui %12 : i1 to i32
    %c0_i32_7 = arith.constant 0 : i32
    %14 = arith.cmpi ne, %13, %c0_i32_7 : i32
    scf.if %14 {
      %c0_8 = arith.constant 0 : index
      %c0_9 = arith.constant 0 : index
      %15 = vector.load %arg10[%c0_8, %c0_9] : memref<8x2048xf32, #tpu.memory_space<vmem>>, vector<8x2048xf32>
      %c0_10 = arith.constant 0 : index
      %c0_11 = arith.constant 0 : index
      %16 = vector.load %arg5[%c0_10, %c0_11] : memref<1x2048xf32, #tpu.memory_space<vmem>>, vector<1x2048xf32>
      %17 = vector.broadcast %16 : vector<1x2048xf32> to vector<8x2048xf32>
      %18 = arith.addf %15, %17 : vector<8x2048xf32>
      %19 = arith.negf %18 : vector<8x2048xf32>
      %20 = math.exp %19 : vector<8x2048xf32>
      %cst_12 = arith.constant 1.000000e+00 : f32
      %21 = vector.broadcast %cst_12 : f32 to vector<8x2048xf32>
      %22 = arith.addf %21, %20 : vector<8x2048xf32>
      %23 = arith.divf %21, %22 : vector<8x2048xf32>
      %c0_13 = arith.constant 0 : index
      %c0_14 = arith.constant 0 : index
      %24 = vector.load %arg6[%c0_13, %c0_14] : memref<2048x16xf32, #tpu.memory_space<vmem>>, vector<2048x16xf32>
      %cst_15 = arith.constant dense<0.000000e+00> : vector<8x16xf32>
      %25 = tpu.matmul %23, %24, %cst_15 {dimension_numbers = #tpu.dot_dimension_numbers<[1], [0], [0], [1], [0, 0, 1, 1], [], []>} : vector<8x2048xf32>, vector<2048x16xf32>, vector<8x16xf32> -> vector<8x16xf32>
      %c0_16 = arith.constant 0 : index
      %c0_17 = arith.constant 0 : index
      %26 = vector.load %arg7[%c0_16, %c0_17] : memref<1x16xf32, #tpu.memory_space<vmem>>, vector<1x16xf32>
      %27 = vector.broadcast %26 : vector<1x16xf32> to vector<8x16xf32>
      %28 = arith.addf %25, %27 : vector<8x16xf32>
      %cst_18 = arith.constant dense<0xFF800000> : vector<8xf32>
      %29 = vector.multi_reduction <maximumf>, %28, %cst_18 [1] : vector<8x16xf32> to vector<8xf32>
      %30 = vector.shape_cast %29 : vector<8xf32> to vector<8x1xf32>
      %31 = vector.broadcast %30 : vector<8x1xf32> to vector<8x16xf32>
      %32 = arith.subf %28, %31 : vector<8x16xf32>
      %33 = math.exp %32 : vector<8x16xf32>
      %cst_19 = arith.constant dense<0.000000e+00> : vector<8xf32>
      %34 = vector.multi_reduction <add>, %33, %cst_19 [1] : vector<8x16xf32> to vector<8xf32>
      %35 = vector.shape_cast %34 : vector<8xf32> to vector<8x1xf32>
      %36 = tpu.reciprocal %35 : vector<8x1xf32> -> vector<8x1xf32>
      %37 = vector.broadcast %36 : vector<8x1xf32> to vector<8x16xf32>
      %38 = arith.mulf %33, %37 : vector<8x16xf32>
      %c0_20 = arith.constant 0 : index
      %c0_21 = arith.constant 0 : index
      %39 = vector.load %arg8[%c0_20, %c0_21] : memref<8x16xf32, #tpu.memory_space<vmem>>, vector<8x16xf32>
      tpu.vector_store %arg8[%c0_20, %c0_21], %38 {strides = array<i32>} : memref<8x16xf32, #tpu.memory_space<vmem>>, vector<8x16xf32>,
    } else {
    }
    return
  }
  func.func @transform_0(%arg0: i32) -> (i32, i32) {
    %c0_i32 = arith.constant 0 : i32
    %c0_i32_0 = arith.constant 0 : i32
    %c0_i32_1 = arith.constant 0 : i32
    return %c0_i32, %c0_i32_0 : i32, i32
  }
  func.func @transform_1(%arg0: i32) -> (i32, i32) {
    %c0_i32 = arith.constant 0 : i32
    %c0_i32_0 = arith.constant 0 : i32
    %c0_i32_1 = arith.constant 0 : i32
    return %c0_i32, %c0_i32_0 : i32, i32
  }
  func.func @transform_2(%arg0: i32) -> (i32, i32) {
    %c0_i32 = arith.constant 0 : i32
    %c0_i32_0 = arith.constant 0 : i32
    %c0_i32_1 = arith.constant 0 : i32
    return %c0_i32, %c0_i32_0 : i32, i32
  }
  func.func @transform_3(%arg0: i32) -> (i32, i32) {
    %c0_i32 = arith.constant 0 : i32
    %c0_i32_0 = arith.constant 0 : i32
    return %arg0, %c0_i32 : i32, i32
  }
  func.func @transform_4(%arg0: i32) -> (i32, i32) {
    %c0_i32 = arith.constant 0 : i32
    %c0_i32_0 = arith.constant 0 : i32
    %c0_i32_1 = arith.constant 0 : i32
    return %c0_i32, %c0_i32_0 : i32, i32
  }
  func.func @transform_5(%arg0: i32) -> (i32, i32) {
    %c0_i32 = arith.constant 0 : i32
    %c0_i32_0 = arith.constant 0 : i32
    %c0_i32_1 = arith.constant 0 : i32
    return %c0_i32, %c0_i32_0 : i32, i32
  }
  func.func @transform_6(%arg0: i32) -> (i32, i32) {
    %c0_i32 = arith.constant 0 : i32
    %c0_i32_0 = arith.constant 0 : i32
    %c0_i32_1 = arith.constant 0 : i32
    return %c0_i32, %c0_i32_0 : i32, i32
  }
  func.func @transform_7(%arg0: i32) -> (i32, i32) {
    %c0_i32 = arith.constant 0 : i32
    %c0_i32_0 = arith.constant 0 : i32
    %c0_i32_1 = arith.constant 0 : i32
    return %c0_i32, %c0_i32_0 : i32, i32
  }
}

</mosaic_0001>

<llo_original>
// kernel: mlp_forward_pallas.1
$region0: #{mlp_forward_pallas.1}
  #allocation0 [shape = 'u32[]', space=smem, size = 0x4, offset = 0x4, fixed_abs, tag = 'smem constant byte address 0x4 - core index']
  #allocation1 [shape = 'u32[144,128]{1,0:T(1,128)}', space=vmem, size = 0x12000, scoped, tag = 'internal scratch']
  #allocation2 [shape = 'f32[8,2048]{1,0:T(8,128)}', space=vmem, size = 0x10000, scoped, tag = 'scratch operand']
  #allocation3 [shape = 'f32[8,2048]{1,0:T(8,128)}', space=vmem, size = 0x10000, scoped, tag = 'scratch operand']
  %s0 = inlined_call_operand.hbm [shape: f32[8,256], index: 0, kind: input, shape index: {}]
  %s1 = inlined_call_operand.hbm [shape: f32[256,2048], index: 1, kind: input, shape index: {}]
  %s2 = inlined_call_operand.hbm [shape: f32[1,2048], index: 2, kind: input, shape index: {}]
  %s3 = inlined_call_operand.hbm [shape: f32[2048,2048], index: 3, kind: input, shape index: {}]
  %s4 = inlined_call_operand.hbm [shape: f32[1,2048], index: 4, kind: input, shape index: {}]
  %s5 = inlined_call_operand.vmem [shape: f32[2048,16], index: 5, kind: input, shape index: {}]
  %s6 = inlined_call_operand.hbm [shape: f32[1,16], index: 6, kind: input, shape index: {}]
  %s7 = inlined_call_operand.hbm [shape: f32[8,16], index: 7, kind: output, shape index: {}]
  %s8 = sld [smem:[#allocation0]]
  $region93: #{mlp_forward_pallas.1} parent=0
    _
  %s10 = ssub.s32 1, %s8
  %s11 = scalar_select 0, %s10, %s8
  $region1: #{mlp_forward_pallas.1} parent=0
    #allocation4 [shape = 'u8[8192]{0}', space=vmem, size = 0x2000, scoped, tag = 'input window, operand 0, single buffered']
    #allocation5 [shape = 's32[2]{0}', space=sflag, size = 0x8, scoped, tag = 'scoped memory for mlp_forward_pallas.1']
    #allocation6 [shape = 's32[2]{0}', space=sflag, size = 0x8, scoped, tag = 'scoped memory for mlp_forward_pallas.1']
    #allocation7 [shape = 'u8[2097152]{0}', space=vmem, size = 0x200000, scoped, tag = 'input window, operand 1, single buffered']
    #allocation8 [shape = 's32[1]{0}', space=sflag, size = 0x4, scoped, tag = 'scoped memory for mlp_forward_pallas.1']
    #allocation9 [shape = 'u8[8192]{0}', space=vmem, size = 0x2000, scoped, tag = 'input window, operand 2, single buffered']
    #allocation10 [shape = 'u8[8388608]{0}', space=vmem, size = 0x800000, scoped, tag = 'input window, operand 3']
    #allocation11 [shape = 's32[2]{0}', space=sflag, size = 0x8, scoped, tag = 'scoped memory for mlp_forward_pallas.1']
    #allocation12 [shape = 'u8[8192]{0}', space=vmem, size = 0x2000, scoped, tag = 'input window, operand 4, single buffered']
    #allocation13 [shape = 'u8[512]{0}', space=vmem, size = 0x400, scoped, tag = 'input window, operand 6, single buffered']
    #allocation14 [shape = 's32[1]{0}', space=sflag, size = 0x4, scoped, tag = 'scoped memory for mlp_forward_pallas.1']
    #allocation15 [shape = 'u8[4096]{0}', space=vmem, size = 0x1000, scoped, tag = 'output window, operand 0, single buffered']
    %12 = vsyncpa [#allocation5], 0
    %13 = vsyncpa [#allocation8], 0
    %14 = vsyncpa [#allocation11], 0
    %s15 = scalar_lea.sflag [#allocation11], 1
    %16 = vsyncpa %s15, 0
    %17 = vsyncpa [#allocation14], 0
    %18 = vsyncpa [#allocation6], 0
    loop: start=0, step=1, limit=6
    $region2: #{mlp_forward_pallas.1} parent=1 // loop_pre_header
      _
    $region3: #{mlp_forward_pallas.1} parent=1 // loop_header
      %s20 = sphi 0, %s24
      %p21 = scmp.ge.s32.totalorder %s20, 6
      %s28 = sphi 0, %s28
      %s30 = sphi 0, %s28
      %s31 = sphi 0, %s30
      %s45 = sphi 0, %s31
      %s49 = sphi 0, %s49
      %s51 = sphi 0, %s49
      %s52 = sphi 0, %s51
      %s66 = sphi 0, %s52
      %s70 = sphi 0, %s70
      %s72 = sphi 0, %s70
      %s73 = sphi 0, %s72
      %s87 = sphi 0, %s73
      %s93 = sphi 0, %s95
      %s96 = sphi 0, %s93
      %s97 = sphi 0, %s96
      %s113 = sphi 0, %s97
      %s117 = sphi 0, %s117
      %s119 = sphi 0, %s117
      %s120 = sphi 0, %s119
      %s134 = sphi 0, %s120
      %s138 = sphi 0, %s138
      %s140 = sphi 0, %s138
      %s141 = sphi 0, %s140
      %s155 = sphi 0, %s141
      %s159 = sphi 0, %s159
      %s161 = sphi 0, %s159
      %s162 = sphi 0, %s161
      %s176 = sphi 0, %s162
      %s180 = sphi 0, %s180
      %s182 = sphi 0, %s180
      %s183 = sphi 0, %s182
      %s197 = sphi 0, %s183
    $region4: #{mlp_forward_pallas.1} parent=1 // loop_header_branch
      %23 = sbr.rel (%p21) target = $region8
    $region5: #{mlp_forward_pallas.1} parent=1 // loop_body
      %s25 = ssub.s32 %s20, 1
      %s26 = ssub.s32 %s20, 2
      %s27 = sadd.s32 %s20, 1
      %s29 = sadd.s32 %s28, 1
      %p32 = scmp.eq.s32.totalorder %s20, 3
      %p33 = scmp.ne.s32.totalorder %s28, %s30
      %p34 = scmp.eq.s32.totalorder %s20, 0
      %p35 = por %p33, %p34
      %p36 = scmp.ne.s32.totalorder %s28, %s30
      %p37 = scmp.eq.s32.totalorder %s25, 3
      %p38 = por %p36, %p37
      %p39 = scmp.ne.s32.totalorder %s30, %s31
      %p40 = scmp.eq.s32.totalorder %s25, 0
      %p41 = por %p39, %p40
      %p42 = scmp.ne.s32.totalorder %s30, %s31
      %p43 = scmp.eq.s32.totalorder %s26, 3
      %p44 = por %p42, %p43
      %p46 = scmp.ne.s32.totalorder %s31, %s45
      %p47 = scmp.eq.s32.totalorder %s26, 0
      %p48 = por %p46, %p47
      %s50 = sadd.s32 %s49, 1
      %p53 = scmp.eq.s32.totalorder %s20, 3
      %p54 = scmp.ne.s32.totalorder %s49, %s51
      %p55 = scmp.eq.s32.totalorder %s20, 0
      %p56 = por %p54, %p55
      %p57 = scmp.ne.s32.totalorder %s49, %s51
      %p58 = scmp.eq.s32.totalorder %s25, 3
      %p59 = por %p57, %p58
      %p60 = scmp.ne.s32.totalorder %s51, %s52
      %p61 = scmp.eq.s32.totalorder %s25, 0
      %p62 = por %p60, %p61
      %p63 = scmp.ne.s32.totalorder %s51, %s52
      %p64 = scmp.eq.s32.totalorder %s26, 3
      %p65 = por %p63, %p64
      %p67 = scmp.ne.s32.totalorder %s52, %s66
      %p68 = scmp.eq.s32.totalorder %s26, 0
      %p69 = por %p67, %p68
      %s71 = sadd.s32 %s70, 1
      %p74 = scmp.eq.s32.totalorder %s20, 3
      %p75 = scmp.ne.s32.totalorder %s70, %s72
      %p76 = scmp.eq.s32.totalorder %s20, 0
      %p77 = por %p75, %p76
      %p78 = scmp.ne.s32.totalorder %s70, %s72
      %p79 = scmp.eq.s32.totalorder %s25, 3
      %p80 = por %p78, %p79
      %p81 = scmp.ne.s32.totalorder %s72, %s73
      %p82 = scmp.eq.s32.totalorder %s25, 0
      %p83 = por %p81, %p82
      %p84 = scmp.ne.s32.totalorder %s72, %s73
      %p85 = scmp.eq.s32.totalorder %s26, 3
      %p86 = por %p84, %p85
      %p88 = scmp.ne.s32.totalorder %s73, %s87
      %p89 = scmp.eq.s32.totalorder %s26, 0
      %p90 = por %p88, %p89
      %s91 = ssub.s32 %s20, %s27
      %p92 = scmp.eq.s32.totalorder %s91, 0
      %s94 = sadd.s32 %s93, 1
      %s95 = scalar_select %p92, %s93, %s94
      %p98 = pneg %p92
      %p99 = scmp.eq.s32.totalorder %s20, 3
      %p100 = por %p98, %p99
      %p101 = scmp.ne.s32.totalorder %s93, %s96
      %p102 = scmp.eq.s32.totalorder %s20, 0
      %p103 = por %p101, %p102
      %p104 = scmp.ne.s32.totalorder %s93, %s96
      %p105 = scmp.eq.s32.totalorder %s25, 3
      %p106 = por %p104, %p105
      %p107 = scmp.ne.s32.totalorder %s96, %s97
      %p108 = scmp.eq.s32.totalorder %s25, 0
      %p109 = por %p107, %p108
      %p110 = scmp.ne.s32.totalorder %s96, %s97
      %p111 = scmp.eq.s32.totalorder %s26, 3
      %p112 = por %p110, %p111
      %p114 = scmp.ne.s32.totalorder %s97, %s113
      %p115 = scmp.eq.s32.totalorder %s26, 0
      %p116 = por %p114, %p115
      %s118 = sadd.s32 %s117, 1
      %p121 = scmp.eq.s32.totalorder %s20, 3
      %p122 = scmp.ne.s32.totalorder %s117, %s119
      %p123 = scmp.eq.s32.totalorder %s20, 0
      %p124 = por %p122, %p123
      %p125 = scmp.ne.s32.totalorder %s117, %s119
      %p126 = scmp.eq.s32.totalorder %s25, 3
      %p127 = por %p125, %p126
      %p128 = scmp.ne.s32.totalorder %s119, %s120
      %p129 = scmp.eq.s32.totalorder %s25, 0
      %p130 = por %p128, %p129
      %p131 = scmp.ne.s32.totalorder %s119, %s120
      %p132 = scmp.eq.s32.totalorder %s26, 3
      %p133 = por %p131, %p132
      %p135 = scmp.ne.s32.totalorder %s120, %s134
      %p136 = scmp.eq.s32.totalorder %s26, 0
      %p137 = por %p135, %p136
      %s139 = sadd.s32 %s138, 1
      %p142 = scmp.eq.s32.totalorder %s20, 3
      %p143 = scmp.ne.s32.totalorder %s138, %s140
      %p144 = scmp.eq.s32.totalorder %s20, 0
      %p145 = por %p143, %p144
      %p146 = scmp.ne.s32.totalorder %s138, %s140
      %p147 = scmp.eq.s32.totalorder %s25, 3
      %p148 = por %p146, %p147
      %p149 = scmp.ne.s32.totalorder %s140, %s141
      %p150 = scmp.eq.s32.totalorder %s25, 0
      %p151 = por %p149, %p150
      %p152 = scmp.ne.s32.totalorder %s140, %s141
      %p153 = scmp.eq.s32.totalorder %s26, 3
      %p154 = por %p152, %p153
      %p156 = scmp.ne.s32.totalorder %s141, %s155
      %p157 = scmp.eq.s32.totalorder %s26, 0
      %p158 = por %p156, %p157
      %s160 = sadd.s32 %s159, 1
      %p163 = scmp.eq.s32.totalorder %s20, 3
      %p164 = scmp.ne.s32.totalorder %s159, %s161
      %p165 = scmp.eq.s32.totalorder %s20, 0
      %p166 = por %p164, %p165
      %p167 = scmp.ne.s32.totalorder %s159, %s161
      %p168 = scmp.eq.s32.totalorder %s25, 3
      %p169 = por %p167, %p168
      %p170 = scmp.ne.s32.totalorder %s161, %s162
      %p171 = scmp.eq.s32.totalorder %s25, 0
      %p172 = por %p170, %p171
      %p173 = scmp.ne.s32.totalorder %s161, %s162
      %p174 = scmp.eq.s32.totalorder %s26, 3
      %p175 = por %p173, %p174
      %p177 = scmp.ne.s32.totalorder %s162, %s176
      %p178 = scmp.eq.s32.totalorder %s26, 0
      %p179 = por %p177, %p178
      %s181 = sadd.s32 %s180, 1
      %p184 = scmp.eq.s32.totalorder %s20, 3
      %p185 = scmp.ne.s32.totalorder %s180, %s182
      %p186 = scmp.eq.s32.totalorder %s20, 0
      %p187 = por %p185, %p186
      %p188 = scmp.ne.s32.totalorder %s180, %s182
      %p189 = scmp.eq.s32.totalorder %s25, 3
      %p190 = por %p188, %p189
      %p191 = scmp.ne.s32.totalorder %s182, %s183
      %p192 = scmp.eq.s32.totalorder %s25, 0
      %p193 = por %p191, %p192
      %p194 = scmp.ne.s32.totalorder %s182, %s183
      %p195 = scmp.eq.s32.totalorder %s26, 3
      %p196 = por %p194, %p195
      %p198 = scmp.ne.s32.totalorder %s183, %s197
      %p199 = scmp.eq.s32.totalorder %s26, 0
      %p200 = por %p198, %p199
      %p201 = scmp.le.s32.totalorder 1, %s20
      %p202 = scmp.lt.s32.totalorder %s20, 5
      %p203 = pnand %p201, %p202
      %p204 = pneg %p203
      // Predicated region
      $region9: #{mlp_forward_pallas.1} parent=5 // pred_check
        _
      $region10: #{mlp_forward_pallas.1} parent=5 // pred_check_branch
        %206 = sbr.rel (%p203) target = $region12
      $region11: #{mlp_forward_pallas.1} parent=5 // pred_region
        %s207 = ssub.s32 %s20, 1
        // Predicated region
        $region13: #{mlp_forward_pallas.1} parent=11 // pred_check
          %p208 = pneg %p41
        $region14: #{mlp_forward_pallas.1} parent=11 // pred_check_branch
          %210 = sbr.rel (%p208) target = $region16
        $region15: #{mlp_forward_pallas.1} parent=11 // pred_region
          %s212 = ssub.s32 256, 256
          %213 = vsyncadd [#allocation5], %s212
          %s215 = sshll.u32 [#allocation4], 4
          %s216 = int_to_ptr.vmem [resolvable:$true] %s215
          %218 = dma.hbm_to_vmem [thread:$0]  %s0, 256, %s216, [#allocation5]
        $region16: #{mlp_forward_pallas.1} parent=11 // pred_fallthru
          _
        // Predicated region
        $region17: #{mlp_forward_pallas.1} parent=11 // pred_check
          %p219 = pneg %p62
        $region18: #{mlp_forward_pallas.1} parent=11 // pred_check_branch
          %221 = sbr.rel (%p219) target = $region20
        $region19: #{mlp_forward_pallas.1} parent=11 // pred_region
          %s223 = ssub.s32 65536, 65536
          %224 = vsyncadd [#allocation8], %s223
          %s225 = sshll.u32 [#allocation7], 4
          %s226 = int_to_ptr.vmem [resolvable:$true] %s225
          %231 = dma.hbm_to_vmem [thread:$0]  %s1, 65536, %s226, [#allocation8], 2048, 2048, 128
        $region20: #{mlp_forward_pallas.1} parent=11 // pred_fallthru
          _
        // Predicated region
        $region21: #{mlp_forward_pallas.1} parent=11 // pred_check
          %p232 = pneg %p83
        $region22: #{mlp_forward_pallas.1} parent=11 // pred_check_branch
          %234 = sbr.rel (%p232) target = $region24
        $region23: #{mlp_forward_pallas.1} parent=11 // pred_region
          %s236 = ssub.s32 256, 256
          %237 = vsyncadd [#allocation8], %s236
          %s239 = sshll.u32 [#allocation9], 4
          %s240 = int_to_ptr.vmem [resolvable:$true] %s239
          %242 = dma.hbm_to_vmem [thread:$0]  %s2, 256, %s240, [#allocation8]
        $region24: #{mlp_forward_pallas.1} parent=11 // pred_fallthru
          _
        // Predicated region
        $region25: #{mlp_forward_pallas.1} parent=11 // pred_check
          %p243 = pneg %p130
        $region26: #{mlp_forward_pallas.1} parent=11 // pred_check_branch
          %245 = sbr.rel (%p243) target = $region28
        $region27: #{mlp_forward_pallas.1} parent=11 // pred_region
          %s247 = ssub.s32 256, 256
          %248 = vsyncadd [#allocation11], %s247
          %s250 = sshll.u32 [#allocation12], 4
          %s251 = int_to_ptr.vmem [resolvable:$true] %s250
          %253 = dma.hbm_to_vmem [thread:$0]  %s4, 256, %s251, [#allocation11]
        $region28: #{mlp_forward_pallas.1} parent=11 // pred_fallthru
          _
        // Predicated region
        $region29: #{mlp_forward_pallas.1} parent=11 // pred_check
          %p254 = pneg %p151
        $region30: #{mlp_forward_pallas.1} parent=11 // pred_check_branch
          %256 = sbr.rel (%p254) target = $region32
        $region31: #{mlp_forward_pallas.1} parent=11 // pred_region
          _
        $region32: #{mlp_forward_pallas.1} parent=11 // pred_fallthru
          _
        // Predicated region
        $region33: #{mlp_forward_pallas.1} parent=11 // pred_check
          %p257 = pneg %p172
        $region34: #{mlp_forward_pallas.1} parent=11 // pred_check_branch
          %259 = sbr.rel (%p257) target = $region36
        $region35: #{mlp_forward_pallas.1} parent=11 // pred_region
          %s261 = ssub.s32 16, 16
          %262 = vsyncadd [#allocation14], %s261
          %s264 = sshll.u32 [#allocation13], 4
          %s265 = int_to_ptr.vmem [resolvable:$true] %s264
          %267 = dma.hbm_to_vmem [thread:$0]  %s6, 16, %s265, [#allocation14]
        $region36: #{mlp_forward_pallas.1} parent=11 // pred_fallthru
          _
      $region12: #{mlp_forward_pallas.1} parent=5 // pred_fallthru
        _
      %p268 = scmp.lt.s32.totalorder %s20, 4
      // Predicated region
      $region37: #{mlp_forward_pallas.1} parent=5 // pred_check
        %p269 = pneg %p268
      $region38: #{mlp_forward_pallas.1} parent=5 // pred_check_branch
        %271 = sbr.rel (%p269) target = $region40
      $region39: #{mlp_forward_pallas.1} parent=5 // pred_region
        // Predicated region
        $region41: #{mlp_forward_pallas.1} parent=39 // pred_check
          %p272 = pneg %p103
        $region42: #{mlp_forward_pallas.1} parent=39 // pred_check_branch
          %274 = sbr.rel (%p272) target = $region44
        $region43: #{mlp_forward_pallas.1} parent=39 // pred_region
          %s275 = sand.u32 %s20, 1
          %s276 = scalar_lea.sflag [#allocation11], %s275
          %s277 = sand.u32 %s93, 1
          %s278 = smul.addr %s277, 8192
          %s279 = scalar_lea.vmem [#allocation10], %s278
          %s280 = smul.u32 64, %s20
          %s282 = ssub.s32 131072, 131072
          %283 = vsyncadd %s276, %s282
          %s284 = smul.addr %s280, 16
          %s285 = smul.addr %s284, 128
          %s286 = scalar_lea.hbm %s3, %s285
          %s287 = sshll.u32 %s279, 4
          %s288 = int_to_ptr.vmem [resolvable:$true] %s287
          %293 = dma.hbm_to_vmem [thread:$0]  %s286, 131072, %s288, %s276, 2048, 2048, 128
        $region44: #{mlp_forward_pallas.1} parent=39 // pred_fallthru
          _
      $region40: #{mlp_forward_pallas.1} parent=5 // pred_fallthru
        _
      %p294 = scmp.le.s32.totalorder 1, %s20
      %p295 = scmp.lt.s32.totalorder %s20, 5
      %p296 = pnand %p294, %p295
      %p297 = pneg %p296
      // Predicated region
      $region45: #{mlp_forward_pallas.1} parent=5 // pred_check
        _
      $region46: #{mlp_forward_pallas.1} parent=5 // pred_check_branch
        %299 = sbr.rel (%p296) target = $region48
      $region47: #{mlp_forward_pallas.1} parent=5 // pred_region
        %s300 = ssub.s32 %s20, 1
        // Predicated region
        $region49: #{mlp_forward_pallas.1} parent=47 // pred_check
          %p301 = pneg %p41
        $region50: #{mlp_forward_pallas.1} parent=47 // pred_check_branch
          %303 = sbr.rel (%p301) target = $region52
        $region51: #{mlp_forward_pallas.1} parent=47 // pred_region
          %304 = dma.done [#allocation5], 256
        $region52: #{mlp_forward_pallas.1} parent=47 // pred_fallthru
          _
        // Predicated region
        $region53: #{mlp_forward_pallas.1} parent=47 // pred_check
          %p305 = pneg %p62
        $region54: #{mlp_forward_pallas.1} parent=47 // pred_check_branch
          %307 = sbr.rel (%p305) target = $region56
        $region55: #{mlp_forward_pallas.1} parent=47 // pred_region
          %308 = dma.done [#allocation8], 65536
        $region56: #{mlp_forward_pallas.1} parent=47 // pred_fallthru
          _
        // Predicated region
        $region57: #{mlp_forward_pallas.1} parent=47 // pred_check
          %p309 = pneg %p83
        $region58: #{mlp_forward_pallas.1} parent=47 // pred_check_branch
          %311 = sbr.rel (%p309) target = $region60
        $region59: #{mlp_forward_pallas.1} parent=47 // pred_region
          %312 = dma.done [#allocation8], 256
        $region60: #{mlp_forward_pallas.1} parent=47 // pred_fallthru
          _
        %s313 = sand.u32 %s25, 1
        %s314 = scalar_lea.sflag [#allocation11], %s313
        %s315 = sand.u32 %s96, 1
        %s316 = smul.addr %s315, 8192
        %s317 = scalar_lea.vmem [#allocation10], %s316
        // Predicated region
        $region61: #{mlp_forward_pallas.1} parent=47 // pred_check
          %p318 = pneg %p109
        $region62: #{mlp_forward_pallas.1} parent=47 // pred_check_branch
          %320 = sbr.rel (%p318) target = $region64
        $region63: #{mlp_forward_pallas.1} parent=47 // pred_region
          %321 = dma.done %s314, 131072
        $region64: #{mlp_forward_pallas.1} parent=47 // pred_fallthru
          _
        // Predicated region
        $region65: #{mlp_forward_pallas.1} parent=47 // pred_check
          %p322 = pneg %p130
        $region66: #{mlp_forward_pallas.1} parent=47 // pred_check_branch
          %324 = sbr.rel (%p322) target = $region68
        $region67: #{mlp_forward_pallas.1} parent=47 // pred_region
          %325 = dma.done [#allocation11], 256
        $region68: #{mlp_forward_pallas.1} parent=47 // pred_fallthru
          _
        // Predicated region
        $region69: #{mlp_forward_pallas.1} parent=47 // pred_check
          %p326 = pneg %p172
        $region70: #{mlp_forward_pallas.1} parent=47 // pred_check_branch
          %328 = sbr.rel (%p326) target = $region72
        $region71: #{mlp_forward_pallas.1} parent=47 // pred_region
          %329 = dma.done [#allocation14], 16
        $region72: #{mlp_forward_pallas.1} parent=47 // pred_fallthru
          _
        %p330 = pneg %p41
        %p331 = pneg %p38
        %p332 = pneg %p62
        %p333 = pneg %p59
        %p334 = pneg %p83
        %p335 = pneg %p80
        %s336 = sand.u32 %s25, 1
        %s337 = scalar_lea.sflag [#allocation11], %s336
        %s338 = sand.u32 %s96, 1
        %s339 = smul.addr %s338, 8192
        %s340 = scalar_lea.vmem [#allocation10], %s339
        %p341 = pneg %p109
        %p342 = pneg %p106
        %p343 = pneg %p130
        %p344 = pneg %p127
        %p345 = pneg %p151
        %p346 = pneg %p148
        %p347 = pneg %p172
        %p348 = pneg %p169
        %p349 = pneg %p193
        %p350 = pneg %p190
        %s351 = smul.u32 64, %s25
        %p352 = scmp.eq.s32.totalorder %s25, 0
        // Predicated region
        $region73: #{mlp_forward_pallas.1} parent=47 // pred_check
          %p353 = pneg %p352
        $region74: #{mlp_forward_pallas.1} parent=47 // pred_check_branch
          %355 = sbr.rel (%p353) target = $region76
        $region75: #{mlp_forward_pallas.1} parent=47 // pred_region
          %v356 = vld [vmem:[#allocation4] sm:$0xff]
          %v357 = vld [vmem:[#allocation4 + $0x8] sm:$0xff]
          %v358 = vld [vmem:[#allocation7] sm:$0xff]
          %v359 = vld [vmem:[#allocation7 + $0x8] sm:$0xff]
          %v360 = vld [vmem:[#allocation7 + $0x10] sm:$0xff]
          %v361 = vld [vmem:[#allocation7 + $0x18] sm:$0xff]
          %v362 = vld [vmem:[#allocation7 + $0x20] sm:$0xff]
          %v363 = vld [vmem:[#allocation7 + $0x28] sm:$0xff]
          %v364 = vld [vmem:[#allocation7 + $0x30] sm:$0xff]
          %v365 = vld [vmem:[#allocation7 + $0x38] sm:$0xff]
          %v366 = vld [vmem:[#allocation7 + $0x40] sm:$0xff]
          %v367 = vld [vmem:[#allocation7 + $0x48] sm:$0xff]
          %v368 = vld [vmem:[#allocation7 + $0x50] sm:$0xff]
          %v369 = vld [vmem:[#allocation7 + $0x58] sm:$0xff]
          %v370 = vld [vmem:[#allocation7 + $0x60] sm:$0xff]
          %v371 = vld [vmem:[#allocation7 + $0x68] sm:$0xff]
          %v372 = vld [vmem:[#allocation7 + $0x70] sm:$0xff]
          %v373 = vld [vmem:[#allocation7 + $0x78] sm:$0xff]
          %v374 = vld [vmem:[#allocation7 + $0x80] sm:$0xff]
          %v375 = vld [vmem:[#allocation7 + $0x88] sm:$0xff]
          %v376 = vld [vmem:[#allocation7 + $0x90] sm:$0xff]
          %v377 = vld [vmem:[#allocation7 + $0x98] sm:$0xff]
          %v378 = vld [vmem:[#allocation7 + $0xa0] sm:$0xff]
          %v379 = vld [vmem:[#allocation7 + $0xa8] sm:$0xff]
          %v380 = vld [vmem:[#allocation7 + $0xb0] sm:$0xff]
          %v381 = vld [vmem:[#allocation7 + $0xb8] sm:$0xff]
          %v382 = vld [vmem:[#allocation7 + $0xc0] sm:$0xff]
          %v383 = vld [vmem:[#allocation7 + $0xc8] sm:$0xff]
          %v384 = vld [vmem:[#allocation7 + $0xd0] sm:$0xff]
          %v385 = vld [vmem:[#allocation7 + $0xd8] sm:$0xff]
          %v386 = vld [vmem:[#allocation7 + $0xe0] sm:$0xff]
          %v387 = vld [vmem:[#allocation7 + $0xe8] sm:$0xff]
          %v388 = vld [vmem:[#allocation7 + $0xf0] sm:$0xff]
          %v389 = vld [vmem:[#allocation7 + $0xf8] sm:$0xff]
          %v390 = vld [vmem:[#allocation7 + $0x100] sm:$0xff]
          %v391 = vld [vmem:[#allocation7 + $0x108] sm:$0xff]
          %v392 = vld [vmem:[#allocation7 + $0x110] sm:$0xff]
          %v393 = vld [vmem:[#allocation7 + $0x118] sm:$0xff]
          %v394 = vld [vmem:[#allocation7 + $0x120] sm:$0xff]
          %v395 = vld [vmem:[#allocation7 + $0x128] sm:$0xff]
          %v396 = vld [vmem:[#allocation7 + $0x130] sm:$0xff]
          %v397 = vld [vmem:[#allocation7 + $0x138] sm:$0xff]
          %v398 = vld [vmem:[#allocation7 + $0x140] sm:$0xff]
          %v399 = vld [vmem:[#allocation7 + $0x148] sm:$0xff]
          %v400 = vld [vmem:[#allocation7 + $0x150] sm:$0xff]
          %v401 = vld [vmem:[#allocation7 + $0x158] sm:$0xff]
          %v402 = vld [vmem:[#allocation7 + $0x160] sm:$0xff]
          %v403 = vld [vmem:[#allocation7 + $0x168] sm:$0xff]
          %v404 = vld [vmem:[#allocation7 + $0x170] sm:$0xff]
          %v405 = vld [vmem:[#allocation7 + $0x178] sm:$0xff]
          %v406 = vld [vmem:[#allocation7 + $0x180] sm:$0xff]
          %v407 = vld [vmem:[#allocation7 + $0x188] sm:$0xff]
          %v408 = vld [vmem:[#allocation7 + $0x190] sm:$0xff]
          %v409 = vld [vmem:[#allocation7 + $0x198] sm:$0xff]
          %v410 = vld [vmem:[#allocation7 + $0x1a0] sm:$0xff]
          %v411 = vld [vmem:[#allocation7 + $0x1a8] sm:$0xff]
          %v412 = vld [vmem:[#allocation7 + $0x1b0] sm:$0xff]
          %v413 = vld [vmem:[#allocation7 + $0x1b8] sm:$0xff]
          %v414 = vld [vmem:[#allocation7 + $0x1c0] sm:$0xff]
          %v415 = vld [vmem:[#allocation7 + $0x1c8] sm:$0xff]
          %v416 = vld [vmem:[#allocation7 + $0x1d0] sm:$0xff]
          %v417 = vld [vmem:[#allocation7 + $0x1d8] sm:$0xff]
          %v418 = vld [vmem:[#allocation7 + $0x1e0] sm:$0xff]
          %v419 = vld [vmem:[#allocation7 + $0x1e8] sm:$0xff]
          %v420 = vld [vmem:[#allocation7 + $0x1f0] sm:$0xff]
          %v421 = vld [vmem:[#allocation7 + $0x1f8] sm:$0xff]
          %v422 = vld [vmem:[#allocation7 + $0x200] sm:$0xff]
          %v423 = vld [vmem:[#allocation7 + $0x208] sm:$0xff]
          %v424 = vld [vmem:[#allocation7 + $0x210] sm:$0xff]
          %v425 = vld [vmem:[#allocation7 + $0x218] sm:$0xff]
          %v426 = vld [vmem:[#allocation7 + $0x220] sm:$0xff]
          %v427 = vld [vmem:[#allocation7 + $0x228] sm:$0xff]
          %v428 = vld [vmem:[#allocation7 + $0x230] sm:$0xff]
          %v429 = vld [vmem:[#allocation7 + $0x238] sm:$0xff]
          %v430 = vld [vmem:[#allocation7 + $0x240] sm:$0xff]
          %v431 = vld [vmem:[#allocation7 + $0x248] sm:$0xff]
          %v432 = vld [vmem:[#allocation7 + $0x250] sm:$0xff]
          %v433 = vld [vmem:[#allocation7 + $0x258] sm:$0xff]
          %v434 = vld [vmem:[#allocation7 + $0x260] sm:$0xff]
          %v435 = vld [vmem:[#allocation7 + $0x268] sm:$0xff]
          %v436 = vld [vmem:[#allocation7 + $0x270] sm:$0xff]
          %v437 = vld [vmem:[#allocation7 + $0x278] sm:$0xff]
          %v438 = vld [vmem:[#allocation7 + $0x280] sm:$0xff]
          %v439 = vld [vmem:[#allocation7 + $0x288] sm:$0xff]
          %v440 = vld [vmem:[#allocation7 + $0x290] sm:$0xff]
          %v441 = vld [vmem:[#allocation7 + $0x298] sm:$0xff]
          %v442 = vld [vmem:[#allocation7 + $0x2a0] sm:$0xff]
          %v443 = vld [vmem:[#allocation7 + $0x2a8] sm:$0xff]
          %v444 = vld [vmem:[#allocation7 + $0x2b0] sm:$0xff]
          %v445 = vld [vmem:[#allocation7 + $0x2b8] sm:$0xff]
          %v446 = vld [vmem:[#allocation7 + $0x2c0] sm:$0xff]
          %v447 = vld [vmem:[#allocation7 + $0x2c8] sm:$0xff]
          %v448 = vld [vmem:[#allocation7 + $0x2d0] sm:$0xff]
          %v449 = vld [vmem:[#allocation7 + $0x2d8] sm:$0xff]
          %v450 = vld [vmem:[#allocation7 + $0x2e0] sm:$0xff]
          %v451 = vld [vmem:[#allocation7 + $0x2e8] sm:$0xff]
          %v452 = vld [vmem:[#allocation7 + $0x2f0] sm:$0xff]
          %v453 = vld [vmem:[#allocation7 + $0x2f8] sm:$0xff]
          %v454 = vld [vmem:[#allocation7 + $0x300] sm:$0xff]
          %v455 = vld [vmem:[#allocation7 + $0x308] sm:$0xff]
          %v456 = vld [vmem:[#allocation7 + $0x310] sm:$0xff]
          %v457 = vld [vmem:[#allocation7 + $0x318] sm:$0xff]
          %v458 = vld [vmem:[#allocation7 + $0x320] sm:$0xff]
          %v459 = vld [vmem:[#allocation7 + $0x328] sm:$0xff]
          %v460 = vld [vmem:[#allocation7 + $0x330] sm:$0xff]
          %v461 = vld [vmem:[#allocation7 + $0x338] sm:$0xff]
          %v462 = vld [vmem:[#allocation7 + $0x340] sm:$0xff]
          %v463 = vld [vmem:[#allocation7 + $0x348] sm:$0xff]
          %v464 = vld [vmem:[#allocation7 + $0x350] sm:$0xff]
          %v465 = vld [vmem:[#allocation7 + $0x358] sm:$0xff]
          %v466 = vld [vmem:[#allocation7 + $0x360] sm:$0xff]
          %v467 = vld [vmem:[#allocation7 + $0x368] sm:$0xff]
          %v468 = vld [vmem:[#allocation7 + $0x370] sm:$0xff]
          %v469 = vld [vmem:[#allocation7 + $0x378] sm:$0xff]
          %v470 = vld [vmem:[#allocation7 + $0x380] sm:$0xff]
          %v471 = vld [vmem:[#allocation7 + $0x388] sm:$0xff]
          %v472 = vld [vmem:[#allocation7 + $0x390] sm:$0xff]
          %v473 = vld [vmem:[#allocation7 + $0x398] sm:$0xff]
          %v474 = vld [vmem:[#allocation7 + $0x3a0] sm:$0xff]
          %v475 = vld [vmem:[#allocation7 + $0x3a8] sm:$0xff]
          %v476 = vld [vmem:[#allocation7 + $0x3b0] sm:$0xff]
          %v477 = vld [vmem:[#allocation7 + $0x3b8] sm:$0xff]
          %v478 = vld [vmem:[#allocation7 + $0x3c0] sm:$0xff]
          %v479 = vld [vmem:[#allocation7 + $0x3c8] sm:$0xff]
          %v480 = vld [vmem:[#allocation7 + $0x3d0] sm:$0xff]
          %v481 = vld [vmem:[#allocation7 + $0x3d8] sm:$0xff]
          %v482 = vld [vmem:[#allocation7 + $0x3e0] sm:$0xff]
          %v483 = vld [vmem:[#allocation7 + $0x3e8] sm:$0xff]
          %v484 = vld [vmem:[#allocation7 + $0x3f0] sm:$0xff]
          %v485 = vld [vmem:[#allocation7 + $0x3f8] sm:$0xff]
          %v486 = vld [vmem:[#allocation7 + $0x400] sm:$0xff]
          %v487 = vld [vmem:[#allocation7 + $0x408] sm:$0xff]
          %v488 = vld [vmem:[#allocation7 + $0x410] sm:$0xff]
          %v489 = vld [vmem:[#allocation7 + $0x418] sm:$0xff]
          %v490 = vld [vmem:[#allocation7 + $0x420] sm:$0xff]
          %v491 = vld [vmem:[#allocation7 + $0x428] sm:$0xff]
          %v492 = vld [vmem:[#allocation7 + $0x430] sm:$0xff]
          %v493 = vld [vmem:[#allocation7 + $0x438] sm:$0xff]
          %v494 = vld [vmem:[#allocation7 + $0x440] sm:$0xff]
          %v495 = vld [vmem:[#allocation7 + $0x448] sm:$0xff]
          %v496 = vld [vmem:[#allocation7 + $0x450] sm:$0xff]
          %v497 = vld [vmem:[#allocation7 + $0x458] sm:$0xff]
          %v498 = vld [vmem:[#allocation7 + $0x460] sm:$0xff]
          %v499 = vld [vmem:[#allocation7 + $0x468] sm:$0xff]
          %v500 = vld [vmem:[#allocation7 + $0x470] sm:$0xff]
          %v501 = vld [vmem:[#allocation7 + $0x478] sm:$0xff]
          %v502 = vld [vmem:[#allocation7 + $0x480] sm:$0xff]
          %v503 = vld [vmem:[#allocation7 + $0x488] sm:$0xff]
          %v504 = vld [vmem:[#allocation7 + $0x490] sm:$0xff]
          %v505 = vld [vmem:[#allocation7 + $0x498] sm:$0xff]
          %v506 = vld [vmem:[#allocation7 + $0x4a0] sm:$0xff]
          %v507 = vld [vmem:[#allocation7 + $0x4a8] sm:$0xff]
          %v508 = vld [vmem:[#allocation7 + $0x4b0] sm:$0xff]
          %v509 = vld [vmem:[#allocation7 + $0x4b8] sm:$0xff]
          %v510 = vld [vmem:[#allocation7 + $0x4c0] sm:$0xff]
          %v511 = vld [vmem:[#allocation7 + $0x4c8] sm:$0xff]
          %v512 = vld [vmem:[#allocation7 + $0x4d0] sm:$0xff]
          %v513 = vld [vmem:[#allocation7 + $0x4d8] sm:$0xff]
          %v514 = vld [vmem:[#allocation7 + $0x4e0] sm:$0xff]
          %v515 = vld [vmem:[#allocation7 + $0x4e8] sm:$0xff]
          %v516 = vld [vmem:[#allocation7 + $0x4f0] sm:$0xff]
          %v517 = vld [vmem:[#allocation7 + $0x4f8] sm:$0xff]
          %v518 = vld [vmem:[#allocation7 + $0x500] sm:$0xff]
          %v519 = vld [vmem:[#allocation7 + $0x508] sm:$0xff]
          %v520 = vld [vmem:[#allocation7 + $0x510] sm:$0xff]
          %v521 = vld [vmem:[#allocation7 + $0x518] sm:$0xff]
          %v522 = vld [vmem:[#allocation7 + $0x520] sm:$0xff]
          %v523 = vld [vmem:[#allocation7 + $0x528] sm:$0xff]
          %v524 = vld [vmem:[#allocation7 + $0x530] sm:$0xff]
          %v525 = vld [vmem:[#allocation7 + $0x538] sm:$0xff]
          %v526 = vld [vmem:[#allocation7 + $0x540] sm:$0xff]
          %v527 = vld [vmem:[#allocation7 + $0x548] sm:$0xff]
          %v528 = vld [vmem:[#allocation7 + $0x550] sm:$0xff]
          %v529 = vld [vmem:[#allocation7 + $0x558] sm:$0xff]
          %v530 = vld [vmem:[#allocation7 + $0x560] sm:$0xff]
          %v531 = vld [vmem:[#allocation7 + $0x568] sm:$0xff]
          %v532 = vld [vmem:[#allocation7 + $0x570] sm:$0xff]
          %v533 = vld [vmem:[#allocation7 + $0x578] sm:$0xff]
          %v534 = vld [vmem:[#allocation7 + $0x580] sm:$0xff]
          %v535 = vld [vmem:[#allocation7 + $0x588] sm:$0xff]
          %v536 = vld [vmem:[#allocation7 + $0x590] sm:$0xff]
          %v537 = vld [vmem:[#allocation7 + $0x598] sm:$0xff]
          %v538 = vld [vmem:[#allocation7 + $0x5a0] sm:$0xff]
          %v539 = vld [vmem:[#allocation7 + $0x5a8] sm:$0xff]
          %v540 = vld [vmem:[#allocation7 + $0x5b0] sm:$0xff]
          %v541 = vld [vmem:[#allocation7 + $0x5b8] sm:$0xff]
          %v542 = vld [vmem:[#allocation7 + $0x5c0] sm:$0xff]
          %v543 = vld [vmem:[#allocation7 + $0x5c8] sm:$0xff]
          %v544 = vld [vmem:[#allocation7 + $0x5d0] sm:$0xff]
          %v545 = vld [vmem:[#allocation7 + $0x5d8] sm:$0xff]
          %v546 = vld [vmem:[#allocation7 + $0x5e0] sm:$0xff]
          %v547 = vld [vmem:[#allocation7 + $0x5e8] sm:$0xff]
          %v548 = vld [vmem:[#allocation7 + $0x5f0] sm:$0xff]
          %v549 = vld [vmem:[#allocation7 + $0x5f8] sm:$0xff]
          %v550 = vld [vmem:[#allocation7 + $0x600] sm:$0xff]
          %v551 = vld [vmem:[#allocation7 + $0x608] sm:$0xff]
          %v552 = vld [vmem:[#allocation7 + $0x610] sm:$0xff]
          %v553 = vld [vmem:[#allocation7 + $0x618] sm:$0xff]
          %v554 = vld [vmem:[#allocation7 + $0x620] sm:$0xff]
          %v555 = vld [vmem:[#allocation7 + $0x628] sm:$0xff]
          %v556 = vld [vmem:[#allocation7 + $0x630] sm:$0xff]
          %v557 = vld [vmem:[#allocation7 + $0x638] sm:$0xff]
          %v558 = vld [vmem:[#allocation7 + $0x640] sm:$0xff]
          %v559 = vld [vmem:[#allocation7 + $0x648] sm:$0xff]
          %v560 = vld [vmem:[#allocation7 + $0x650] sm:$0xff]
          %v561 = vld [vmem:[#allocation7 + $0x658] sm:$0xff]
          %v562 = vld [vmem:[#allocation7 + $0x660] sm:$0xff]
          %v563 = vld [vmem:[#allocation7 + $0x668] sm:$0xff]
          %v564 = vld [vmem:[#allocation7 + $0x670] sm:$0xff]
          %v565 = vld [vmem:[#allocation7 + $0x678] sm:$0xff]
          %v566 = vld [vmem:[#allocation7 + $0x680] sm:$0xff]
          %v567 = vld [vmem:[#allocation7 + $0x688] sm:$0xff]
          %v568 = vld [vmem:[#allocation7 + $0x690] sm:$0xff]
          %v569 = vld [vmem:[#allocation7 + $0x698] sm:$0xff]
          %v570 = vld [vmem:[#allocation7 + $0x6a0] sm:$0xff]
          %v571 = vld [vmem:[#allocation7 + $0x6a8] sm:$0xff]
          %v572 = vld [vmem:[#allocation7 + $0x6b0] sm:$0xff]
          %v573 = vld [vmem:[#allocation7 + $0x6b8] sm:$0xff]
          %v574 = vld [vmem:[#allocation7 + $0x6c0] sm:$0xff]
          %v575 = vld [vmem:[#allocation7 + $0x6c8] sm:$0xff]
          %v576 = vld [vmem:[#allocation7 + $0x6d0] sm:$0xff]
          %v577 = vld [vmem:[#allocation7 + $0x6d8] sm:$0xff]
          %v578 = vld [vmem:[#allocation7 + $0x6e0] sm:$0xff]
          %v579 = vld [vmem:[#allocation7 + $0x6e8] sm:$0xff]
          %v580 = vld [vmem:[#allocation7 + $0x6f0] sm:$0xff]
          %v581 = vld [vmem:[#allocation7 + $0x6f8] sm:$0xff]
          %v582 = vld [vmem:[#allocation7 + $0x700] sm:$0xff]
          %v583 = vld [vmem:[#allocation7 + $0x708] sm:$0xff]
          %v584 = vld [vmem:[#allocation7 + $0x710] sm:$0xff]
          %v585 = vld [vmem:[#allocation7 + $0x718] sm:$0xff]
          %v586 = vld [vmem:[#allocation7 + $0x720] sm:$0xff]
          %v587 = vld [vmem:[#allocation7 + $0x728] sm:$0xff]
          %v588 = vld [vmem:[#allocation7 + $0x730] sm:$0xff]
          %v589 = vld [vmem:[#allocation7 + $0x738] sm:$0xff]
          %v590 = vld [vmem:[#allocation7 + $0x740] sm:$0xff]
          %v591 = vld [vmem:[#allocation7 + $0x748] sm:$0xff]
          %v592 = vld [vmem:[#allocation7 + $0x750] sm:$0xff]
          %v593 = vld [vmem:[#allocation7 + $0x758] sm:$0xff]
          %v594 = vld [vmem:[#allocation7 + $0x760] sm:$0xff]
          %v595 = vld [vmem:[#allocation7 + $0x768] sm:$0xff]
          %v596 = vld [vmem:[#allocation7 + $0x770] sm:$0xff]
          %v597 = vld [vmem:[#allocation7 + $0x778] sm:$0xff]
          %v598 = vld [vmem:[#allocation7 + $0x780] sm:$0xff]
          %v599 = vld [vmem:[#allocation7 + $0x788] sm:$0xff]
          %v600 = vld [vmem:[#allocation7 + $0x790] sm:$0xff]
          %v601 = vld [vmem:[#allocation7 + $0x798] sm:$0xff]
          %v602 = vld [vmem:[#allocation7 + $0x7a0] sm:$0xff]
          %v603 = vld [vmem:[#allocation7 + $0x7a8] sm:$0xff]
          %v604 = vld [vmem:[#allocation7 + $0x7b0] sm:$0xff]
          %v605 = vld [vmem:[#allocation7 + $0x7b8] sm:$0xff]
          %v606 = vld [vmem:[#allocation7 + $0x7c0] sm:$0xff]
          %v607 = vld [vmem:[#allocation7 + $0x7c8] sm:$0xff]
          %v608 = vld [vmem:[#allocation7 + $0x7d0] sm:$0xff]
          %v609 = vld [vmem:[#allocation7 + $0x7d8] sm:$0xff]
          %v610 = vld [vmem:[#allocation7 + $0x7e0] sm:$0xff]
          %v611 = vld [vmem:[#allocation7 + $0x7e8] sm:$0xff]
          %v612 = vld [vmem:[#allocation7 + $0x7f0] sm:$0xff]
          %v613 = vld [vmem:[#allocation7 + $0x7f8] sm:$0xff]
          %v614 = vld [vmem:[#allocation7 + $0x800] sm:$0xff]
          %v615 = vld [vmem:[#allocation7 + $0x808] sm:$0xff]
          %v616 = vld [vmem:[#allocation7 + $0x810] sm:$0xff]
          %v617 = vld [vmem:[#allocation7 + $0x818] sm:$0xff]
          %v618 = vld [vmem:[#allocation7 + $0x820] sm:$0xff]
          %v619 = vld [vmem:[#allocation7 + $0x828] sm:$0xff]
          %v620 = vld [vmem:[#allocation7 + $0x830] sm:$0xff]
          %v621 = vld [vmem:[#allocation7 + $0x838] sm:$0xff]
          %v622 = vld [vmem:[#allocation7 + $0x840] sm:$0xff]
          %v623 = vld [vmem:[#allocation7 + $0x848] sm:$0xff]
          %v624 = vld [vmem:[#allocation7 + $0x850] sm:$0xff]
          %v625 = vld [vmem:[#allocation7 + $0x858] sm:$0xff]
          %v626 = vld [vmem:[#allocation7 + $0x860] sm:$0xff]
          %v627 = vld [vmem:[#allocation7 + $0x868] sm:$0xff]
          %v628 = vld [vmem:[#allocation7 + $0x870] sm:$0xff]
          %v629 = vld [vmem:[#allocation7 + $0x878] sm:$0xff]
          %v630 = vld [vmem:[#allocation7 + $0x880] sm:$0xff]
          %v631 = vld [vmem:[#allocation7 + $0x888] sm:$0xff]
          %v632 = vld [vmem:[#allocation7 + $0x890] sm:$0xff]
          %v633 = vld [vmem:[#allocation7 + $0x898] sm:$0xff]
          %v634 = vld [vmem:[#allocation7 + $0x8a0] sm:$0xff]
          %v635 = vld [vmem:[#allocation7 + $0x8a8] sm:$0xff]
          %v636 = vld [vmem:[#allocation7 + $0x8b0] sm:$0xff]
          %v637 = vld [vmem:[#allocation7 + $0x8b8] sm:$0xff]
          %v638 = vld [vmem:[#allocation7 + $0x8c0] sm:$0xff]
          %v639 = vld [vmem:[#allocation7 + $0x8c8] sm:$0xff]
          %v640 = vld [vmem:[#allocation7 + $0x8d0] sm:$0xff]
          %v641 = vld [vmem:[#allocation7 + $0x8d8] sm:$0xff]
          %v642 = vld [vmem:[#allocation7 + $0x8e0] sm:$0xff]
          %v643 = vld [vmem:[#allocation7 + $0x8e8] sm:$0xff]
          %v644 = vld [vmem:[#allocation7 + $0x8f0] sm:$0xff]
          %v645 = vld [vmem:[#allocation7 + $0x8f8] sm:$0xff]
          %v646 = vld [vmem:[#allocation7 + $0x900] sm:$0xff]
          %v647 = vld [vmem:[#allocation7 + $0x908] sm:$0xff]
          %v648 = vld [vmem:[#allocation7 + $0x910] sm:$0xff]
          %v649 = vld [vmem:[#allocation7 + $0x918] sm:$0xff]
          %v650 = vld [vmem:[#allocation7 + $0x920] sm:$0xff]
          %v651 = vld [vmem:[#allocation7 + $0x928] sm:$0xff]
          %v652 = vld [vmem:[#allocation7 + $0x930] sm:$0xff]
          %v653 = vld [vmem:[#allocation7 + $0x938] sm:$0xff]
          %v654 = vld [vmem:[#allocation7 + $0x940] sm:$0xff]
          %v655 = vld [vmem:[#allocation7 + $0x948] sm:$0xff]
          %v656 = vld [vmem:[#allocation7 + $0x950] sm:$0xff]
          %v657 = vld [vmem:[#allocation7 + $0x958] sm:$0xff]
          %v658 = vld [vmem:[#allocation7 + $0x960] sm:$0xff]
          %v659 = vld [vmem:[#allocation7 + $0x968] sm:$0xff]
          %v660 = vld [vmem:[#allocation7 + $0x970] sm:$0xff]
          %v661 = vld [vmem:[#allocation7 + $0x978] sm:$0xff]
          %v662 = vld [vmem:[#allocation7 + $0x980] sm:$0xff]
          %v663 = vld [vmem:[#allocation7 + $0x988] sm:$0xff]
          %v664 = vld [vmem:[#allocation7 + $0x990] sm:$0xff]
          %v665 = vld [vmem:[#allocation7 + $0x998] sm:$0xff]
          %v666 = vld [vmem:[#allocation7 + $0x9a0] sm:$0xff]
          %v667 = vld [vmem:[#allocation7 + $0x9a8] sm:$0xff]
          %v668 = vld [vmem:[#allocation7 + $0x9b0] sm:$0xff]
          %v669 = vld [vmem:[#allocation7 + $0x9b8] sm:$0xff]
          %v670 = vld [vmem:[#allocation7 + $0x9c0] sm:$0xff]
          %v671 = vld [vmem:[#allocation7 + $0x9c8] sm:$0xff]
          %v672 = vld [vmem:[#allocation7 + $0x9d0] sm:$0xff]
          %v673 = vld [vmem:[#allocation7 + $0x9d8] sm:$0xff]
          %v674 = vld [vmem:[#allocation7 + $0x9e0] sm:$0xff]
          %v675 = vld [vmem:[#allocation7 + $0x9e8] sm:$0xff]
          %v676 = vld [vmem:[#allocation7 + $0x9f0] sm:$0xff]
          %v677 = vld [vmem:[#allocation7 + $0x9f8] sm:$0xff]
          %v678 = vld [vmem:[#allocation7 + $0xa00] sm:$0xff]
          %v679 = vld [vmem:[#allocation7 + $0xa08] sm:$0xff]
          %v680 = vld [vmem:[#allocation7 + $0xa10] sm:$0xff]
          %v681 = vld [vmem:[#allocation7 + $0xa18] sm:$0xff]
          %v682 = vld [vmem:[#allocation7 + $0xa20] sm:$0xff]
          %v683 = vld [vmem:[#allocation7 + $0xa28] sm:$0xff]
          %v684 = vld [vmem:[#allocation7 + $0xa30] sm:$0xff]
          %v685 = vld [vmem:[#allocation7 + $0xa38] sm:$0xff]
          %v686 = vld [vmem:[#allocation7 + $0xa40] sm:$0xff]
          %v687 = vld [vmem:[#allocation7 + $0xa48] sm:$0xff]
          %v688 = vld [vmem:[#allocation7 + $0xa50] sm:$0xff]
          %v689 = vld [vmem:[#allocation7 + $0xa58] sm:$0xff]
          %v690 = vld [vmem:[#allocation7 + $0xa60] sm:$0xff]
          %v691 = vld [vmem:[#allocation7 + $0xa68] sm:$0xff]
          %v692 = vld [vmem:[#allocation7 + $0xa70] sm:$0xff]
          %v693 = vld [vmem:[#allocation7 + $0xa78] sm:$0xff]
          %v694 = vld [vmem:[#allocation7 + $0xa80] sm:$0xff]
          %v695 = vld [vmem:[#allocation7 + $0xa88] sm:$0xff]
          %v696 = vld [vmem:[#allocation7 + $0xa90] sm:$0xff]
          %v697 = vld [vmem:[#allocation7 + $0xa98] sm:$0xff]
          %v698 = vld [vmem:[#allocation7 + $0xaa0] sm:$0xff]
          %v699 = vld [vmem:[#allocation7 + $0xaa8] sm:$0xff]
          %v700 = vld [vmem:[#allocation7 + $0xab0] sm:$0xff]
          %v701 = vld [vmem:[#allocation7 + $0xab8] sm:$0xff]
          %v702 = vld [vmem:[#allocation7 + $0xac0] sm:$0xff]
          %v703 = vld [vmem:[#allocation7 + $0xac8] sm:$0xff]
          %v704 = vld [vmem:[#allocation7 + $0xad0] sm:$0xff]
          %v705 = vld [vmem:[#allocation7 + $0xad8] sm:$0xff]
          %v706 = vld [vmem:[#allocation7 + $0xae0] sm:$0xff]
          %v707 = vld [vmem:[#allocation7 + $0xae8] sm:$0xff]
          %v708 = vld [vmem:[#allocation7 + $0xaf0] sm:$0xff]
          %v709 = vld [vmem:[#allocation7 + $0xaf8] sm:$0xff]
          %v710 = vld [vmem:[#allocation7 + $0xb00] sm:$0xff]
          %v711 = vld [vmem:[#allocation7 + $0xb08] sm:$0xff]
          %v712 = vld [vmem:[#allocation7 + $0xb10] sm:$0xff]
          %v713 = vld [vmem:[#allocation7 + $0xb18] sm:$0xff]
          %v714 = vld [vmem:[#allocation7 + $0xb20] sm:$0xff]
          %v715 = vld [vmem:[#allocation7 + $0xb28] sm:$0xff]
          %v716 = vld [vmem:[#allocation7 + $0xb30] sm:$0xff]
          %v717 = vld [vmem:[#allocation7 + $0xb38] sm:$0xff]
          %v718 = vld [vmem:[#allocation7 + $0xb40] sm:$0xff]
          %v719 = vld [vmem:[#allocation7 + $0xb48] sm:$0xff]
          %v720 = vld [vmem:[#allocation7 + $0xb50] sm:$0xff]
          %v721 = vld [vmem:[#allocation7 + $0xb58] sm:$0xff]
          %v722 = vld [vmem:[#allocation7 + $0xb60] sm:$0xff]
          %v723 = vld [vmem:[#allocation7 + $0xb68] sm:$0xff]
          %v724 = vld [vmem:[#allocation7 + $0xb70] sm:$0xff]
          %v725 = vld [vmem:[#allocation7 + $0xb78] sm:$0xff]
          %v726 = vld [vmem:[#allocation7 + $0xb80] sm:$0xff]
          %v727 = vld [vmem:[#allocation7 + $0xb88] sm:$0xff]
          %v728 = vld [vmem:[#allocation7 + $0xb90] sm:$0xff]
          %v729 = vld [vmem:[#allocation7 + $0xb98] sm:$0xff]
          %v730 = vld [vmem:[#allocation7 + $0xba0] sm:$0xff]
          %v731 = vld [vmem:[#allocation7 + $0xba8] sm:$0xff]
          %v732 = vld [vmem:[#allocation7 + $0xbb0] sm:$0xff]
          %v733 = vld [vmem:[#allocation7 + $0xbb8] sm:$0xff]
          %v734 = vld [vmem:[#allocation7 + $0xbc0] sm:$0xff]
          %v735 = vld [vmem:[#allocation7 + $0xbc8] sm:$0xff]
          %v736 = vld [vmem:[#allocation7 + $0xbd0] sm:$0xff]
          %v737 = vld [vmem:[#allocation7 + $0xbd8] sm:$0xff]
          %v738 = vld [vmem:[#allocation7 + $0xbe0] sm:$0xff]
          %v739 = vld [vmem:[#allocation7 + $0xbe8] sm:$0xff]
          %v740 = vld [vmem:[#allocation7 + $0xbf0] sm:$0xff]
          %v741 = vld [vmem:[#allocation7 + $0xbf8] sm:$0xff]
          %v742 = vld [vmem:[#allocation7 + $0xc00] sm:$0xff]
          %v743 = vld [vmem:[#allocation7 + $0xc08] sm:$0xff]
          %v744 = vld [vmem:[#allocation7 + $0xc10] sm:$0xff]
          %v745 = vld [vmem:[#allocation7 + $0xc18] sm:$0xff]
          %v746 = vld [vmem:[#allocation7 + $0xc20] sm:$0xff]
          %v747 = vld [vmem:[#allocation7 + $0xc28] sm:$0xff]
          %v748 = vld [vmem:[#allocation7 + $0xc30] sm:$0xff]
          %v749 = vld [vmem:[#allocation7 + $0xc38] sm:$0xff]
          %v750 = vld [vmem:[#allocation7 + $0xc40] sm:$0xff]
          %v751 = vld [vmem:[#allocation7 + $0xc48] sm:$0xff]
          %v752 = vld [vmem:[#allocation7 + $0xc50] sm:$0xff]
          %v753 = vld [vmem:[#allocation7 + $0xc58] sm:$0xff]
          %v754 = vld [vmem:[#allocation7 + $0xc60] sm:$0xff]
          %v755 = vld [vmem:[#allocation7 + $0xc68] sm:$0xff]
          %v756 = vld [vmem:[#allocation7 + $0xc70] sm:$0xff]
          %v757 = vld [vmem:[#allocation7 + $0xc78] sm:$0xff]
          %v758 = vld [vmem:[#allocation7 + $0xc80] sm:$0xff]
          %v759 = vld [vmem:[#allocation7 + $0xc88] sm:$0xff]
          %v760 = vld [vmem:[#allocation7 + $0xc90] sm:$0xff]
          %v761 = vld [vmem:[#allocation7 + $0xc98] sm:$0xff]
          %v762 = vld [vmem:[#allocation7 + $0xca0] sm:$0xff]
          %v763 = vld [vmem:[#allocation7 + $0xca8] sm:$0xff]
          %v764 = vld [vmem:[#allocation7 + $0xcb0] sm:$0xff]
          %v765 = vld [vmem:[#allocation7 + $0xcb8] sm:$0xff]
          %v766 = vld [vmem:[#allocation7 + $0xcc0] sm:$0xff]
          %v767 = vld [vmem:[#allocation7 + $0xcc8] sm:$0xff]
          %v768 = vld [vmem:[#allocation7 + $0xcd0] sm:$0xff]
          %v769 = vld [vmem:[#allocation7 + $0xcd8] sm:$0xff]
          %v770 = vld [vmem:[#allocation7 + $0xce0] sm:$0xff]
          %v771 = vld [vmem:[#allocation7 + $0xce8] sm:$0xff]
          %v772 = vld [vmem:[#allocation7 + $0xcf0] sm:$0xff]
          %v773 = vld [vmem:[#allocation7 + $0xcf8] sm:$0xff]
          %v774 = vld [vmem:[#allocation7 + $0xd00] sm:$0xff]
          %v775 = vld [vmem:[#allocation7 + $0xd08] sm:$0xff]
          %v776 = vld [vmem:[#allocation7 + $0xd10] sm:$0xff]
          %v777 = vld [vmem:[#allocation7 + $0xd18] sm:$0xff]
          %v778 = vld [vmem:[#allocation7 + $0xd20] sm:$0xff]
          %v779 = vld [vmem:[#allocation7 + $0xd28] sm:$0xff]
          %v780 = vld [vmem:[#allocation7 + $0xd30] sm:$0xff]
          %v781 = vld [vmem:[#allocation7 + $0xd38] sm:$0xff]
          %v782 = vld [vmem:[#allocation7 + $0xd40] sm:$0xff]
          %v783 = vld [vmem:[#allocation7 + $0xd48] sm:$0xff]
          %v784 = vld [vmem:[#allocation7 + $0xd50] sm:$0xff]
          %v785 = vld [vmem:[#allocation7 + $0xd58] sm:$0xff]
          %v786 = vld [vmem:[#allocation7 + $0xd60] sm:$0xff]
          %v787 = vld [vmem:[#allocation7 + $0xd68] sm:$0xff]
          %v788 = vld [vmem:[#allocation7 + $0xd70] sm:$0xff]
          %v789 = vld [vmem:[#allocation7 + $0xd78] sm:$0xff]
          %v790 = vld [vmem:[#allocation7 + $0xd80] sm:$0xff]
          %v791 = vld [vmem:[#allocation7 + $0xd88] sm:$0xff]
          %v792 = vld [vmem:[#allocation7 + $0xd90] sm:$0xff]
          %v793 = vld [vmem:[#allocation7 + $0xd98] sm:$0xff]
          %v794 = vld [vmem:[#allocation7 + $0xda0] sm:$0xff]
          %v795 = vld [vmem:[#allocation7 + $0xda8] sm:$0xff]
          %v796 = vld [vmem:[#allocation7 + $0xdb0] sm:$0xff]
          %v797 = vld [vmem:[#allocation7 + $0xdb8] sm:$0xff]
          %v798 = vld [vmem:[#allocation7 + $0xdc0] sm:$0xff]
          %v799 = vld [vmem:[#allocation7 + $0xdc8] sm:$0xff]
          %v800 = vld [vmem:[#allocation7 + $0xdd0] sm:$0xff]
          %v801 = vld [vmem:[#allocation7 + $0xdd8] sm:$0xff]
          %v802 = vld [vmem:[#allocation7 + $0xde0] sm:$0xff]
          %v803 = vld [vmem:[#allocation7 + $0xde8] sm:$0xff]
          %v804 = vld [vmem:[#allocation7 + $0xdf0] sm:$0xff]
          %v805 = vld [vmem:[#allocation7 + $0xdf8] sm:$0xff]
          %v806 = vld [vmem:[#allocation7 + $0xe00] sm:$0xff]
          %v807 = vld [vmem:[#allocation7 + $0xe08] sm:$0xff]
          %v808 = vld [vmem:[#allocation7 + $0xe10] sm:$0xff]
          %v809 = vld [vmem:[#allocation7 + $0xe18] sm:$0xff]
          %v810 = vld [vmem:[#allocation7 + $0xe20] sm:$0xff]
          %v811 = vld [vmem:[#allocation7 + $0xe28] sm:$0xff]
          %v812 = vld [vmem:[#allocation7 + $0xe30] sm:$0xff]
          %v813 = vld [vmem:[#allocation7 + $0xe38] sm:$0xff]
          %v814 = vld [vmem:[#allocation7 + $0xe40] sm:$0xff]
          %v815 = vld [vmem:[#allocation7 + $0xe48] sm:$0xff]
          %v816 = vld [vmem:[#allocation7 + $0xe50] sm:$0xff]
          %v817 = vld [vmem:[#allocation7 + $0xe58] sm:$0xff]
          %v818 = vld [vmem:[#allocation7 + $0xe60] sm:$0xff]
          %v819 = vld [vmem:[#allocation7 + $0xe68] sm:$0xff]
          %v820 = vld [vmem:[#allocation7 + $0xe70] sm:$0xff]
          %v821 = vld [vmem:[#allocation7 + $0xe78] sm:$0xff]
          %v822 = vld [vmem:[#allocation7 + $0xe80] sm:$0xff]
          %v823 = vld [vmem:[#allocation7 + $0xe88] sm:$0xff]
          %v824 = vld [vmem:[#allocation7 + $0xe90] sm:$0xff]
          %v825 = vld [vmem:[#allocation7 + $0xe98] sm:$0xff]
          %v826 = vld [vmem:[#allocation7 + $0xea0] sm:$0xff]
          %v827 = vld [vmem:[#allocation7 + $0xea8] sm:$0xff]
          %v828 = vld [vmem:[#allocation7 + $0xeb0] sm:$0xff]
          %v829 = vld [vmem:[#allocation7 + $0xeb8] sm:$0xff]
          %v830 = vld [vmem:[#allocation7 + $0xec0] sm:$0xff]
          %v831 = vld [vmem:[#allocation7 + $0xec8] sm:$0xff]
          %v832 = vld [vmem:[#allocation7 + $0xed0] sm:$0xff]
          %v833 = vld [vmem:[#allocation7 + $0xed8] sm:$0xff]
          %v834 = vld [vmem:[#allocation7 + $0xee0] sm:$0xff]
          %v835 = vld [vmem:[#allocation7 + $0xee8] sm:$0xff]
          %v836 = vld [vmem:[#allocation7 + $0xef0] sm:$0xff]
          %v837 = vld [vmem:[#allocation7 + $0xef8] sm:$0xff]
          %v838 = vld [vmem:[#allocation7 + $0xf00] sm:$0xff]
          %v839 = vld [vmem:[#allocation7 + $0xf08] sm:$0xff]
          %v840 = vld [vmem:[#allocation7 + $0xf10] sm:$0xff]
          %v841 = vld [vmem:[#allocation7 + $0xf18] sm:$0xff]
          %v842 = vld [vmem:[#allocation7 + $0xf20] sm:$0xff]
          %v843 = vld [vmem:[#allocation7 + $0xf28] sm:$0xff]
          %v844 = vld [vmem:[#allocation7 + $0xf30] sm:$0xff]
          %v845 = vld [vmem:[#allocation7 + $0xf38] sm:$0xff]
          %v846 = vld [vmem:[#allocation7 + $0xf40] sm:$0xff]
          %v847 = vld [vmem:[#allocation7 + $0xf48] sm:$0xff]
          %v848 = vld [vmem:[#allocation7 + $0xf50] sm:$0xff]
          %v849 = vld [vmem:[#allocation7 + $0xf58] sm:$0xff]
          %v850 = vld [vmem:[#allocation7 + $0xf60] sm:$0xff]
          %v851 = vld [vmem:[#allocation7 + $0xf68] sm:$0xff]
          %v852 = vld [vmem:[#allocation7 + $0xf70] sm:$0xff]
          %v853 = vld [vmem:[#allocation7 + $0xf78] sm:$0xff]
          %v854 = vld [vmem:[#allocation7 + $0xf80] sm:$0xff]
          %v855 = vld [vmem:[#allocation7 + $0xf88] sm:$0xff]
          %v856 = vld [vmem:[#allocation7 + $0xf90] sm:$0xff]
          %v857 = vld [vmem:[#allocation7 + $0xf98] sm:$0xff]
          %v858 = vld [vmem:[#allocation7 + $0xfa0] sm:$0xff]
          %v859 = vld [vmem:[#allocation7 + $0xfa8] sm:$0xff]
          %v860 = vld [vmem:[#allocation7 + $0xfb0] sm:$0xff]
          %v861 = vld [vmem:[#allocation7 + $0xfb8] sm:$0xff]
          %v862 = vld [vmem:[#allocation7 + $0xfc0] sm:$0xff]
          %v863 = vld [vmem:[#allocation7 + $0xfc8] sm:$0xff]
          %v864 = vld [vmem:[#allocation7 + $0xfd0] sm:$0xff]
          %v865 = vld [vmem:[#allocation7 + $0xfd8] sm:$0xff]
          %v866 = vld [vmem:[#allocation7 + $0xfe0] sm:$0xff]
          %v867 = vld [vmem:[#allocation7 + $0xfe8] sm:$0xff]
          %v868 = vld [vmem:[#allocation7 + $0xff0] sm:$0xff]
          %v869 = vld [vmem:[#allocation7 + $0xff8] sm:$0xff]
          %v870 = vld [vmem:[#allocation9] sm:$0xff]
          %v871 = vld [vmem:[#allocation9 + $0x8] sm:$0xff]
          %v874 = vlaneseq
          %v875 = vshrl.u32 %v874, 7
          %v876 = vsub.s32 0, %v875
          %v877 = vrot.slane %v870, %v876
          %v878 = vlaneseq
          %v879 = vshrl.u32 %v878, 7
          %v880 = vsub.s32 1, %v879
          %v881 = vrot.slane %v870, %v880
          %v882 = vlaneseq
          %v883 = vshrl.u32 %v882, 7
          %v884 = vsub.s32 2, %v883
          %v885 = vrot.slane %v870, %v884
          %v886 = vlaneseq
          %v887 = vshrl.u32 %v886, 7
          %v888 = vsub.s32 3, %v887
          %v889 = vrot.slane %v870, %v888
          %v890 = vlaneseq
          %v891 = vshrl.u32 %v890, 7
          %v892 = vsub.s32 4, %v891
          %v893 = vrot.slane %v870, %v892
          %v894 = vlaneseq
          %v895 = vshrl.u32 %v894, 7
          %v896 = vsub.s32 5, %v895
          %v897 = vrot.slane %v870, %v896
          %v898 = vlaneseq
          %v899 = vshrl.u32 %v898, 7
          %v900 = vsub.s32 6, %v899
          %v901 = vrot.slane %v870, %v900
          %v902 = vlaneseq
          %v903 = vshrl.u32 %v902, 7
          %v904 = vsub.s32 7, %v903
          %v905 = vrot.slane %v870, %v904
          %v906 = vlaneseq
          %v907 = vshrl.u32 %v906, 7
          %v908 = vsub.s32 0, %v907
          %v909 = vrot.slane %v871, %v908
          %v910 = vlaneseq
          %v911 = vshrl.u32 %v910, 7
          %v912 = vsub.s32 1, %v911
          %v913 = vrot.slane %v871, %v912
          %v914 = vlaneseq
          %v915 = vshrl.u32 %v914, 7
          %v916 = vsub.s32 2, %v915
          %v917 = vrot.slane %v871, %v916
          %v918 = vlaneseq
          %v919 = vshrl.u32 %v918, 7
          %v920 = vsub.s32 3, %v919
          %v921 = vrot.slane %v871, %v920
          %v922 = vlaneseq
          %v923 = vshrl.u32 %v922, 7
          %v924 = vsub.s32 4, %v923
          %v925 = vrot.slane %v871, %v924
          %v926 = vlaneseq
          %v927 = vshrl.u32 %v926, 7
          %v928 = vsub.s32 5, %v927
          %v929 = vrot.slane %v871, %v928
          %v930 = vlaneseq
          %v931 = vshrl.u32 %v930, 7
          %v932 = vsub.s32 6, %v931
          %v933 = vrot.slane %v871, %v932
          %v934 = vlaneseq
          %v935 = vshrl.u32 %v934, 7
          %v936 = vsub.s32 7, %v935
          %v937 = vrot.slane %v871, %v936
          %954 = vmatprep.subr.mxu0 %v599
          %955 = vmatpush1.msra.mxu0 %v598
          %956 = vmatprep.subr.mxu0 %v583
          %957 = vmatpush1.msra.mxu0 %v582
          %958 = vmatprep.subr.mxu0 %v567
          %959 = vmatpush1.msra.mxu0 %v566
          %960 = vmatprep.subr.mxu0 %v551
          %961 = vmatpush1.msra.mxu0 %v550
          %962 = vmatprep.subr.mxu0 %v535
          %963 = vmatpush1.msra.mxu0 %v534
          %964 = vmatprep.subr.mxu0 %v519
          %965 = vmatpush1.msra.mxu0 %v518
          %966 = vmatprep.subr.mxu0 %v503
          %967 = vmatpush1.msra.mxu0 %v502
          %968 = vmatprep.subr.mxu0 %v487
          %969 = vmatpush1.msra.mxu0 %v486
          %970 = vmatprep.subr.mxu0 %v471
          %971 = vmatpush1.msra.mxu0 %v470
          %972 = vmatprep.subr.mxu0 %v455
          %973 = vmatpush1.msra.mxu0 %v454
          %974 = vmatprep.subr.mxu0 %v439
          %975 = vmatpush1.msra.mxu0 %v438
          %976 = vmatprep.subr.mxu0 %v423
          %977 = vmatpush1.msra.mxu0 %v422
          %978 = vmatprep.subr.mxu0 %v407
          %979 = vmatpush1.msra.mxu0 %v406
          %980 = vmatprep.subr.mxu0 %v391
          %981 = vmatpush1.msra.mxu0 %v390
          %982 = vmatprep.subr.mxu0 %v375
          %983 = vmatpush1.msra.mxu0 %v374
          %984 = vmatprep.subr.mxu0 %v359
          %985 = vmatpush1.msra.mxu0 %v358
          %986 = vmatprep.subr.mxu0 %v855
          %987 = vmatpush2.msra.mxu0 %v854
          %988 = vmatprep.subr.mxu0 %v839
          %989 = vmatpush2.msra.mxu0 %v838
          %990 = vmatprep.subr.mxu0 %v823
          %991 = vmatpush2.msra.mxu0 %v822
          %992 = vmatprep.subr.mxu0 %v807
          %993 = vmatpush2.msra.mxu0 %v806
          %994 = vmatprep.subr.mxu0 %v791
          %995 = vmatpush2.msra.mxu0 %v790
          %996 = vmatprep.subr.mxu0 %v775
          %997 = vmatpush2.msra.mxu0 %v774
          %998 = vmatprep.subr.mxu0 %v759
          %999 = vmatpush2.msra.mxu0 %v758
          %1000 = vmatprep.subr.mxu0 %v743
          %1001 = vmatpush2.msra.mxu0 %v742
          %1002 = vmatprep.subr.mxu0 %v727
          %1003 = vmatpush2.msra.mxu0 %v726
          %1004 = vmatprep.subr.mxu0 %v711
          %1005 = vmatpush2.msra.mxu0 %v710
          %1006 = vmatprep.subr.mxu0 %v695
          %1007 = vmatpush2.msra.mxu0 %v694
          %1008 = vmatprep.subr.mxu0 %v679
          %1009 = vmatpush2.msra.mxu0 %v678
          %1010 = vmatprep.subr.mxu0 %v663
          %1011 = vmatpush2.msra.mxu0 %v662
          %1012 = vmatprep.subr.mxu0 %v647
          %1013 = vmatpush2.msra.mxu0 %v646
          %1014 = vmatprep.subr.mxu0 %v631
          %1015 = vmatpush2.msra.mxu0 %v630
          %1016 = vmatprep.subr.mxu0 %v615
          %1017 = vmatpush2.msra.mxu0 %v614
          %1018 = vmatprep.mubr.f32.mxu0 %v357
          %1019 = vmatmul.mubr.f32.gmra.mxu0 %v356
          %v1020 = vpop.f32.mrf.mxu0
          %v1021 = vadd.f32 %v877, %v1020
          %v1022 = vpop.f32.mrf.mxu0
          %v1023 = vadd.f32 %v881, %v1022
          %1024 = vdwg.mxu0
          %1025 = vmatprep.subr.mxu0 %v601
          %1026 = vmatpush1.msra.mxu0 %v600
          %1027 = vmatprep.subr.mxu0 %v585
          %1028 = vmatpush1.msra.mxu0 %v584
          %1029 = vmatprep.subr.mxu0 %v569
          %1030 = vmatpush1.msra.mxu0 %v568
          %1031 = vmatprep.subr.mxu0 %v553
          %1032 = vmatpush1.msra.mxu0 %v552
          %1033 = vmatprep.subr.mxu0 %v537
          %1034 = vmatpush1.msra.mxu0 %v536
          %1035 = vmatprep.subr.mxu0 %v521
          %1036 = vmatpush1.msra.mxu0 %v520
          %1037 = vmatprep.subr.mxu0 %v505
          %1038 = vmatpush1.msra.mxu0 %v504
          %1039 = vmatprep.subr.mxu0 %v489
          %1040 = vmatpush1.msra.mxu0 %v488
          %1041 = vmatprep.subr.mxu0 %v473
          %1042 = vmatpush1.msra.mxu0 %v472
          %1043 = vmatprep.subr.mxu0 %v457
          %1044 = vmatpush1.msra.mxu0 %v456
          %1045 = vmatprep.subr.mxu0 %v441
          %1046 = vmatpush1.msra.mxu0 %v440
          %1047 = vmatprep.subr.mxu0 %v425
          %1048 = vmatpush1.msra.mxu0 %v424
          %1049 = vmatprep.subr.mxu0 %v409
          %1050 = vmatpush1.msra.mxu0 %v408
          %1051 = vmatprep.subr.mxu0 %v393
          %1052 = vmatpush1.msra.mxu0 %v392
          %1053 = vmatprep.subr.mxu0 %v377
          %1054 = vmatpush1.msra.mxu0 %v376
          %1055 = vmatprep.subr.mxu0 %v361
          %1056 = vmatpush1.msra.mxu0 %v360
          %1057 = vmatprep.subr.mxu0 %v857
          %1058 = vmatpush2.msra.mxu0 %v856
          %1059 = vmatprep.subr.mxu0 %v841
          %1060 = vmatpush2.msra.mxu0 %v840
          %1061 = vmatprep.subr.mxu0 %v825
          %1062 = vmatpush2.msra.mxu0 %v824
          %1063 = vmatprep.subr.mxu0 %v809
          %1064 = vmatpush2.msra.mxu0 %v808
          %1065 = vmatprep.subr.mxu0 %v793
          %1066 = vmatpush2.msra.mxu0 %v792
          %1067 = vmatprep.subr.mxu0 %v777
          %1068 = vmatpush2.msra.mxu0 %v776
          %1069 = vmatprep.subr.mxu0 %v761
          %1070 = vmatpush2.msra.mxu0 %v760
          %1071 = vmatprep.subr.mxu0 %v745
          %1072 = vmatpush2.msra.mxu0 %v744
          %1073 = vmatprep.subr.mxu0 %v729
          %1074 = vmatpush2.msra.mxu0 %v728
          %1075 = vmatprep.subr.mxu0 %v713
          %1076 = vmatpush2.msra.mxu0 %v712
          %1077 = vmatprep.subr.mxu0 %v697
          %1078 = vmatpush2.msra.mxu0 %v696
          %1079 = vmatprep.subr.mxu0 %v681
          %1080 = vmatpush2.msra.mxu0 %v680
          %1081 = vmatprep.subr.mxu0 %v665
          %1082 = vmatpush2.msra.mxu0 %v664
          %1083 = vmatprep.subr.mxu0 %v649
          %1084 = vmatpush2.msra.mxu0 %v648
          %1085 = vmatprep.subr.mxu0 %v633
          %1086 = vmatpush2.msra.mxu0 %v632
          %1087 = vmatprep.subr.mxu0 %v617
          %1088 = vmatpush2.msra.mxu0 %v616
          %1089 = vmatprep.mubr.f32.mxu0 %v357
          %1090 = vmatmul.mubr.f32.gmra.mxu0 %v356
          %v1091 = vpop.f32.mrf.mxu0
          %v1092 = vadd.f32 %v885, %v1091
          %v1093 = vpop.f32.mrf.mxu0
          %v1094 = vadd.f32 %v889, %v1093
          %1095 = vdwg.mxu0
          %1096 = vmatprep.subr.mxu0 %v603
          %1097 = vmatpush1.msra.mxu0 %v602
          %1098 = vmatprep.subr.mxu0 %v587
          %1099 = vmatpush1.msra.mxu0 %v586
          %1100 = vmatprep.subr.mxu0 %v571
          %1101 = vmatpush1.msra.mxu0 %v570
          %1102 = vmatprep.subr.mxu0 %v555
          %1103 = vmatpush1.msra.mxu0 %v554
          %1104 = vmatprep.subr.mxu0 %v539
          %1105 = vmatpush1.msra.mxu0 %v538
          %1106 = vmatprep.subr.mxu0 %v523
          %1107 = vmatpush1.msra.mxu0 %v522
          %1108 = vmatprep.subr.mxu0 %v507
          %1109 = vmatpush1.msra.mxu0 %v506
          %1110 = vmatprep.subr.mxu0 %v491
          %1111 = vmatpush1.msra.mxu0 %v490
          %1112 = vmatprep.subr.mxu0 %v475
          %1113 = vmatpush1.msra.mxu0 %v474
          %1114 = vmatprep.subr.mxu0 %v459
          %1115 = vmatpush1.msra.mxu0 %v458
          %1116 = vmatprep.subr.mxu0 %v443
          %1117 = vmatpush1.msra.mxu0 %v442
          %1118 = vmatprep.subr.mxu0 %v427
          %1119 = vmatpush1.msra.mxu0 %v426
          %1120 = vmatprep.subr.mxu0 %v411
          %1121 = vmatpush1.msra.mxu0 %v410
          %1122 = vmatprep.subr.mxu0 %v395
          %1123 = vmatpush1.msra.mxu0 %v394
          %1124 = vmatprep.subr.mxu0 %v379
          %1125 = vmatpush1.msra.mxu0 %v378
          %1126 = vmatprep.subr.mxu0 %v363
          %1127 = vmatpush1.msra.mxu0 %v362
          %1128 = vmatprep.subr.mxu0 %v859
          %1129 = vmatpush2.msra.mxu0 %v858
          %1130 = vmatprep.subr.mxu0 %v843
          %1131 = vmatpush2.msra.mxu0 %v842
          %1132 = vmatprep.subr.mxu0 %v827
          %1133 = vmatpush2.msra.mxu0 %v826
          %1134 = vmatprep.subr.mxu0 %v811
          %1135 = vmatpush2.msra.mxu0 %v810
          %1136 = vmatprep.subr.mxu0 %v795
          %1137 = vmatpush2.msra.mxu0 %v794
          %1138 = vmatprep.subr.mxu0 %v779
          %1139 = vmatpush2.msra.mxu0 %v778
          %1140 = vmatprep.subr.mxu0 %v763
          %1141 = vmatpush2.msra.mxu0 %v762
          %1142 = vmatprep.subr.mxu0 %v747
          %1143 = vmatpush2.msra.mxu0 %v746
          %1144 = vmatprep.subr.mxu0 %v731
          %1145 = vmatpush2.msra.mxu0 %v730
          %1146 = vmatprep.subr.mxu0 %v715
          %1147 = vmatpush2.msra.mxu0 %v714
          %1148 = vmatprep.subr.mxu0 %v699
          %1149 = vmatpush2.msra.mxu0 %v698
          %1150 = vmatprep.subr.mxu0 %v683
          %1151 = vmatpush2.msra.mxu0 %v682
          %1152 = vmatprep.subr.mxu0 %v667
          %1153 = vmatpush2.msra.mxu0 %v666
          %1154 = vmatprep.subr.mxu0 %v651
          %1155 = vmatpush2.msra.mxu0 %v650
          %1156 = vmatprep.subr.mxu0 %v635
          %1157 = vmatpush2.msra.mxu0 %v634
          %1158 = vmatprep.subr.mxu0 %v619
          %1159 = vmatpush2.msra.mxu0 %v618
          %1160 = vmatprep.mubr.f32.mxu0 %v357
          %1161 = vmatmul.mubr.f32.gmra.mxu0 %v356
          %v1162 = vpop.f32.mrf.mxu0
          %v1163 = vadd.f32 %v893, %v1162
          %v1164 = vpop.f32.mrf.mxu0
          %v1165 = vadd.f32 %v897, %v1164
          %1166 = vdwg.mxu0
          %1167 = vmatprep.subr.mxu0 %v605
          %1168 = vmatpush1.msra.mxu0 %v604
          %1169 = vmatprep.subr.mxu0 %v589
          %1170 = vmatpush1.msra.mxu0 %v588
          %1171 = vmatprep.subr.mxu0 %v573
          %1172 = vmatpush1.msra.mxu0 %v572
          %1173 = vmatprep.subr.mxu0 %v557
          %1174 = vmatpush1.msra.mxu0 %v556
          %1175 = vmatprep.subr.mxu0 %v541
          %1176 = vmatpush1.msra.mxu0 %v540
          %1177 = vmatprep.subr.mxu0 %v525
          %1178 = vmatpush1.msra.mxu0 %v524
          %1179 = vmatprep.subr.mxu0 %v509
          %1180 = vmatpush1.msra.mxu0 %v508
          %1181 = vmatprep.subr.mxu0 %v493
          %1182 = vmatpush1.msra.mxu0 %v492
          %1183 = vmatprep.subr.mxu0 %v477
          %1184 = vmatpush1.msra.mxu0 %v476
          %1185 = vmatprep.subr.mxu0 %v461
          %1186 = vmatpush1.msra.mxu0 %v460
          %1187 = vmatprep.subr.mxu0 %v445
          %1188 = vmatpush1.msra.mxu0 %v444
          %1189 = vmatprep.subr.mxu0 %v429
          %1190 = vmatpush1.msra.mxu0 %v428
          %1191 = vmatprep.subr.mxu0 %v413
          %1192 = vmatpush1.msra.mxu0 %v412
          %1193 = vmatprep.subr.mxu0 %v397
          %1194 = vmatpush1.msra.mxu0 %v396
          %1195 = vmatprep.subr.mxu0 %v381
          %1196 = vmatpush1.msra.mxu0 %v380
          %1197 = vmatprep.subr.mxu0 %v365
          %1198 = vmatpush1.msra.mxu0 %v364
          %1199 = vmatprep.subr.mxu0 %v861
          %1200 = vmatpush2.msra.mxu0 %v860
          %1201 = vmatprep.subr.mxu0 %v845
          %1202 = vmatpush2.msra.mxu0 %v844
          %1203 = vmatprep.subr.mxu0 %v829
          %1204 = vmatpush2.msra.mxu0 %v828
          %1205 = vmatprep.subr.mxu0 %v813
          %1206 = vmatpush2.msra.mxu0 %v812
          %1207 = vmatprep.subr.mxu0 %v797
          %1208 = vmatpush2.msra.mxu0 %v796
          %1209 = vmatprep.subr.mxu0 %v781
          %1210 = vmatpush2.msra.mxu0 %v780
          %1211 = vmatprep.subr.mxu0 %v765
          %1212 = vmatpush2.msra.mxu0 %v764
          %1213 = vmatprep.subr.mxu0 %v749
          %1214 = vmatpush2.msra.mxu0 %v748
          %1215 = vmatprep.subr.mxu0 %v733
          %1216 = vmatpush2.msra.mxu0 %v732
          %1217 = vmatprep.subr.mxu0 %v717
          %1218 = vmatpush2.msra.mxu0 %v716
          %1219 = vmatprep.subr.mxu0 %v701
          %1220 = vmatpush2.msra.mxu0 %v700
          %1221 = vmatprep.subr.mxu0 %v685
          %1222 = vmatpush2.msra.mxu0 %v684
          %1223 = vmatprep.subr.mxu0 %v669
          %1224 = vmatpush2.msra.mxu0 %v668
          %1225 = vmatprep.subr.mxu0 %v653
          %1226 = vmatpush2.msra.mxu0 %v652
          %1227 = vmatprep.subr.mxu0 %v637
          %1228 = vmatpush2.msra.mxu0 %v636
          %1229 = vmatprep.subr.mxu0 %v621
          %1230 = vmatpush2.msra.mxu0 %v620
          %1231 = vmatprep.mubr.f32.mxu0 %v357
          %1232 = vmatmul.mubr.f32.gmra.mxu0 %v356
          %v1233 = vpop.f32.mrf.mxu0
          %v1234 = vadd.f32 %v901, %v1233
          %v1235 = vpop.f32.mrf.mxu0
          %v1236 = vadd.f32 %v905, %v1235
          %1237 = vdwg.mxu0
          %1238 = vmatprep.subr.mxu0 %v607
          %1239 = vmatpush1.msra.mxu0 %v606
          %1240 = vmatprep.subr.mxu0 %v591
          %1241 = vmatpush1.msra.mxu0 %v590
          %1242 = vmatprep.subr.mxu0 %v575
          %1243 = vmatpush1.msra.mxu0 %v574
          %1244 = vmatprep.subr.mxu0 %v559
          %1245 = vmatpush1.msra.mxu0 %v558
          %1246 = vmatprep.subr.mxu0 %v543
          %1247 = vmatpush1.msra.mxu0 %v542
          %1248 = vmatprep.subr.mxu0 %v527
          %1249 = vmatpush1.msra.mxu0 %v526
          %1250 = vmatprep.subr.mxu0 %v511
          %1251 = vmatpush1.msra.mxu0 %v510
          %1252 = vmatprep.subr.mxu0 %v495
          %1253 = vmatpush1.msra.mxu0 %v494
          %1254 = vmatprep.subr.mxu0 %v479
          %1255 = vmatpush1.msra.mxu0 %v478
          %1256 = vmatprep.subr.mxu0 %v463
          %1257 = vmatpush1.msra.mxu0 %v462
          %1258 = vmatprep.subr.mxu0 %v447
          %1259 = vmatpush1.msra.mxu0 %v446
          %1260 = vmatprep.subr.mxu0 %v431
          %1261 = vmatpush1.msra.mxu0 %v430
          %1262 = vmatprep.subr.mxu0 %v415
          %1263 = vmatpush1.msra.mxu0 %v414
          %1264 = vmatprep.subr.mxu0 %v399
          %1265 = vmatpush1.msra.mxu0 %v398
          %1266 = vmatprep.subr.mxu0 %v383
          %1267 = vmatpush1.msra.mxu0 %v382
          %1268 = vmatprep.subr.mxu0 %v367
          %1269 = vmatpush1.msra.mxu0 %v366
          %1270 = vmatprep.subr.mxu0 %v863
          %1271 = vmatpush2.msra.mxu0 %v862
          %1272 = vmatprep.subr.mxu0 %v847
          %1273 = vmatpush2.msra.mxu0 %v846
          %1274 = vmatprep.subr.mxu0 %v831
          %1275 = vmatpush2.msra.mxu0 %v830
          %1276 = vmatprep.subr.mxu0 %v815
          %1277 = vmatpush2.msra.mxu0 %v814
          %1278 = vmatprep.subr.mxu0 %v799
          %1279 = vmatpush2.msra.mxu0 %v798
          %1280 = vmatprep.subr.mxu0 %v783
          %1281 = vmatpush2.msra.mxu0 %v782
          %1282 = vmatprep.subr.mxu0 %v767
          %1283 = vmatpush2.msra.mxu0 %v766
          %1284 = vmatprep.subr.mxu0 %v751
          %1285 = vmatpush2.msra.mxu0 %v750
          %1286 = vmatprep.subr.mxu0 %v735
          %1287 = vmatpush2.msra.mxu0 %v734
          %1288 = vmatprep.subr.mxu0 %v719
          %1289 = vmatpush2.msra.mxu0 %v718
          %1290 = vmatprep.subr.mxu0 %v703
          %1291 = vmatpush2.msra.mxu0 %v702
          %1292 = vmatprep.subr.mxu0 %v687
          %1293 = vmatpush2.msra.mxu0 %v686
          %1294 = vmatprep.subr.mxu0 %v671
          %1295 = vmatpush2.msra.mxu0 %v670
          %1296 = vmatprep.subr.mxu0 %v655
          %1297 = vmatpush2.msra.mxu0 %v654
          %1298 = vmatprep.subr.mxu0 %v639
          %1299 = vmatpush2.msra.mxu0 %v638
          %1300 = vmatprep.subr.mxu0 %v623
          %1301 = vmatpush2.msra.mxu0 %v622
          %1302 = vmatprep.mubr.f32.mxu0 %v357
          %1303 = vmatmul.mubr.f32.gmra.mxu0 %v356
          %v1304 = vpop.f32.mrf.mxu0
          %v1305 = vadd.f32 %v909, %v1304
          %v1306 = vpop.f32.mrf.mxu0
          %v1307 = vadd.f32 %v913, %v1306
          %1308 = vdwg.mxu0
          %1309 = vmatprep.subr.mxu0 %v609
          %1310 = vmatpush1.msra.mxu0 %v608
          %1311 = vmatprep.subr.mxu0 %v593
          %1312 = vmatpush1.msra.mxu0 %v592
          %1313 = vmatprep.subr.mxu0 %v577
          %1314 = vmatpush1.msra.mxu0 %v576
          %1315 = vmatprep.subr.mxu0 %v561
          %1316 = vmatpush1.msra.mxu0 %v560
          %1317 = vmatprep.subr.mxu0 %v545
          %1318 = vmatpush1.msra.mxu0 %v544
          %1319 = vmatprep.subr.mxu0 %v529
          %1320 = vmatpush1.msra.mxu0 %v528
          %1321 = vmatprep.subr.mxu0 %v513
          %1322 = vmatpush1.msra.mxu0 %v512
          %1323 = vmatprep.subr.mxu0 %v497
          %1324 = vmatpush1.msra.mxu0 %v496
          %1325 = vmatprep.subr.mxu0 %v481
          %1326 = vmatpush1.msra.mxu0 %v480
          %1327 = vmatprep.subr.mxu0 %v465
          %1328 = vmatpush1.msra.mxu0 %v464
          %1329 = vmatprep.subr.mxu0 %v449
          %1330 = vmatpush1.msra.mxu0 %v448
          %1331 = vmatprep.subr.mxu0 %v433
          %1332 = vmatpush1.msra.mxu0 %v432
          %1333 = vmatprep.subr.mxu0 %v417
          %1334 = vmatpush1.msra.mxu0 %v416
          %1335 = vmatprep.subr.mxu0 %v401
          %1336 = vmatpush1.msra.mxu0 %v400
          %1337 = vmatprep.subr.mxu0 %v385
          %1338 = vmatpush1.msra.mxu0 %v384
          %1339 = vmatprep.subr.mxu0 %v369
          %1340 = vmatpush1.msra.mxu0 %v368
          %1341 = vmatprep.subr.mxu0 %v865
          %1342 = vmatpush2.msra.mxu0 %v864
          %1343 = vmatprep.subr.mxu0 %v849
          %1344 = vmatpush2.msra.mxu0 %v848
          %1345 = vmatprep.subr.mxu0 %v833
          %1346 = vmatpush2.msra.mxu0 %v832
          %1347 = vmatprep.subr.mxu0 %v817
          %1348 = vmatpush2.msra.mxu0 %v816
          %1349 = vmatprep.subr.mxu0 %v801
          %1350 = vmatpush2.msra.mxu0 %v800
          %1351 = vmatprep.subr.mxu0 %v785
          %1352 = vmatpush2.msra.mxu0 %v784
          %1353 = vmatprep.subr.mxu0 %v769
          %1354 = vmatpush2.msra.mxu0 %v768
          %1355 = vmatprep.subr.mxu0 %v753
          %1356 = vmatpush2.msra.mxu0 %v752
          %1357 = vmatprep.subr.mxu0 %v737
          %1358 = vmatpush2.msra.mxu0 %v736
          %1359 = vmatprep.subr.mxu0 %v721
          %1360 = vmatpush2.msra.mxu0 %v720
          %1361 = vmatprep.subr.mxu0 %v705
          %1362 = vmatpush2.msra.mxu0 %v704
          %1363 = vmatprep.subr.mxu0 %v689
          %1364 = vmatpush2.msra.mxu0 %v688
          %1365 = vmatprep.subr.mxu0 %v673
          %1366 = vmatpush2.msra.mxu0 %v672
          %1367 = vmatprep.subr.mxu0 %v657
          %1368 = vmatpush2.msra.mxu0 %v656
          %1369 = vmatprep.subr.mxu0 %v641
          %1370 = vmatpush2.msra.mxu0 %v640
          %1371 = vmatprep.subr.mxu0 %v625
          %1372 = vmatpush2.msra.mxu0 %v624
          %1373 = vmatprep.mubr.f32.mxu0 %v357
          %1374 = vmatmul.mubr.f32.gmra.mxu0 %v356
          %v1375 = vpop.f32.mrf.mxu0
          %v1376 = vadd.f32 %v917, %v1375
          %v1377 = vpop.f32.mrf.mxu0
          %v1378 = vadd.f32 %v921, %v1377
          %1379 = vdwg.mxu0
          %1380 = vmatprep.subr.mxu0 %v611
          %1381 = vmatpush1.msra.mxu0 %v610
          %1382 = vmatprep.subr.mxu0 %v595
          %1383 = vmatpush1.msra.mxu0 %v594
          %1384 = vmatprep.subr.mxu0 %v579
          %1385 = vmatpush1.msra.mxu0 %v578
          %1386 = vmatprep.subr.mxu0 %v563
          %1387 = vmatpush1.msra.mxu0 %v562
          %1388 = vmatprep.subr.mxu0 %v547
          %1389 = vmatpush1.msra.mxu0 %v546
          %1390 = vmatprep.subr.mxu0 %v531
          %1391 = vmatpush1.msra.mxu0 %v530
          %1392 = vmatprep.subr.mxu0 %v515
          %1393 = vmatpush1.msra.mxu0 %v514
          %1394 = vmatprep.subr.mxu0 %v499
          %1395 = vmatpush1.msra.mxu0 %v498
          %1396 = vmatprep.subr.mxu0 %v483
          %1397 = vmatpush1.msra.mxu0 %v482
          %1398 = vmatprep.subr.mxu0 %v467
          %1399 = vmatpush1.msra.mxu0 %v466
          %1400 = vmatprep.subr.mxu0 %v451
          %1401 = vmatpush1.msra.mxu0 %v450
          %1402 = vmatprep.subr.mxu0 %v435
          %1403 = vmatpush1.msra.mxu0 %v434
          %1404 = vmatprep.subr.mxu0 %v419
          %1405 = vmatpush1.msra.mxu0 %v418
          %1406 = vmatprep.subr.mxu0 %v403
          %1407 = vmatpush1.msra.mxu0 %v402
          %1408 = vmatprep.subr.mxu0 %v387
          %1409 = vmatpush1.msra.mxu0 %v386
          %1410 = vmatprep.subr.mxu0 %v371
          %1411 = vmatpush1.msra.mxu0 %v370
          %1412 = vmatprep.subr.mxu0 %v867
          %1413 = vmatpush2.msra.mxu0 %v866
          %1414 = vmatprep.subr.mxu0 %v851
          %1415 = vmatpush2.msra.mxu0 %v850
          %1416 = vmatprep.subr.mxu0 %v835
          %1417 = vmatpush2.msra.mxu0 %v834
          %1418 = vmatprep.subr.mxu0 %v819
          %1419 = vmatpush2.msra.mxu0 %v818
          %1420 = vmatprep.subr.mxu0 %v803
          %1421 = vmatpush2.msra.mxu0 %v802
          %1422 = vmatprep.subr.mxu0 %v787
          %1423 = vmatpush2.msra.mxu0 %v786
          %1424 = vmatprep.subr.mxu0 %v771
          %1425 = vmatpush2.msra.mxu0 %v770
          %1426 = vmatprep.subr.mxu0 %v755
          %1427 = vmatpush2.msra.mxu0 %v754
          %1428 = vmatprep.subr.mxu0 %v739
          %1429 = vmatpush2.msra.mxu0 %v738
          %1430 = vmatprep.subr.mxu0 %v723
          %1431 = vmatpush2.msra.mxu0 %v722
          %1432 = vmatprep.subr.mxu0 %v707
          %1433 = vmatpush2.msra.mxu0 %v706
          %1434 = vmatprep.subr.mxu0 %v691
          %1435 = vmatpush2.msra.mxu0 %v690
          %1436 = vmatprep.subr.mxu0 %v675
          %1437 = vmatpush2.msra.mxu0 %v674
          %1438 = vmatprep.subr.mxu0 %v659
          %1439 = vmatpush2.msra.mxu0 %v658
          %1440 = vmatprep.subr.mxu0 %v643
          %1441 = vmatpush2.msra.mxu0 %v642
          %1442 = vmatprep.subr.mxu0 %v627
          %1443 = vmatpush2.msra.mxu0 %v626
          %1444 = vmatprep.mubr.f32.mxu0 %v357
          %1445 = vmatmul.mubr.f32.gmra.mxu0 %v356
          %v1446 = vpop.f32.mrf.mxu0
          %v1447 = vadd.f32 %v925, %v1446
          %v1448 = vpop.f32.mrf.mxu0
          %v1449 = vadd.f32 %v929, %v1448
          %1450 = vdwg.mxu0
          %1451 = vmatprep.subr.mxu0 %v613
          %1452 = vmatpush1.msra.mxu0 %v612
          %1453 = vmatprep.subr.mxu0 %v597
          %1454 = vmatpush1.msra.mxu0 %v596
          %1455 = vmatprep.subr.mxu0 %v581
          %1456 = vmatpush1.msra.mxu0 %v580
          %1457 = vmatprep.subr.mxu0 %v565
          %1458 = vmatpush1.msra.mxu0 %v564
          %1459 = vmatprep.subr.mxu0 %v549
          %1460 = vmatpush1.msra.mxu0 %v548
          %1461 = vmatprep.subr.mxu0 %v533
          %1462 = vmatpush1.msra.mxu0 %v532
          %1463 = vmatprep.subr.mxu0 %v517
          %1464 = vmatpush1.msra.mxu0 %v516
          %1465 = vmatprep.subr.mxu0 %v501
          %1466 = vmatpush1.msra.mxu0 %v500
          %1467 = vmatprep.subr.mxu0 %v485
          %1468 = vmatpush1.msra.mxu0 %v484
          %1469 = vmatprep.subr.mxu0 %v469
          %1470 = vmatpush1.msra.mxu0 %v468
          %1471 = vmatprep.subr.mxu0 %v453
          %1472 = vmatpush1.msra.mxu0 %v452
          %1473 = vmatprep.subr.mxu0 %v437
          %1474 = vmatpush1.msra.mxu0 %v436
          %1475 = vmatprep.subr.mxu0 %v421
          %1476 = vmatpush1.msra.mxu0 %v420
          %1477 = vmatprep.subr.mxu0 %v405
          %1478 = vmatpush1.msra.mxu0 %v404
          %1479 = vmatprep.subr.mxu0 %v389
          %1480 = vmatpush1.msra.mxu0 %v388
          %1481 = vmatprep.subr.mxu0 %v373
          %1482 = vmatpush1.msra.mxu0 %v372
          %1483 = vmatprep.subr.mxu0 %v869
          %1484 = vmatpush2.msra.mxu0 %v868
          %1485 = vmatprep.subr.mxu0 %v853
          %1486 = vmatpush2.msra.mxu0 %v852
          %1487 = vmatprep.subr.mxu0 %v837
          %1488 = vmatpush2.msra.mxu0 %v836
          %1489 = vmatprep.subr.mxu0 %v821
          %1490 = vmatpush2.msra.mxu0 %v820
          %1491 = vmatprep.subr.mxu0 %v805
          %1492 = vmatpush2.msra.mxu0 %v804
          %1493 = vmatprep.subr.mxu0 %v789
          %1494 = vmatpush2.msra.mxu0 %v788
          %1495 = vmatprep.subr.mxu0 %v773
          %1496 = vmatpush2.msra.mxu0 %v772
          %1497 = vmatprep.subr.mxu0 %v757
          %1498 = vmatpush2.msra.mxu0 %v756
          %1499 = vmatprep.subr.mxu0 %v741
          %1500 = vmatpush2.msra.mxu0 %v740
          %1501 = vmatprep.subr.mxu0 %v725
          %1502 = vmatpush2.msra.mxu0 %v724
          %1503 = vmatprep.subr.mxu0 %v709
          %1504 = vmatpush2.msra.mxu0 %v708
          %1505 = vmatprep.subr.mxu0 %v693
          %1506 = vmatpush2.msra.mxu0 %v692
          %1507 = vmatprep.subr.mxu0 %v677
          %1508 = vmatpush2.msra.mxu0 %v676
          %1509 = vmatprep.subr.mxu0 %v661
          %1510 = vmatpush2.msra.mxu0 %v660
          %1511 = vmatprep.subr.mxu0 %v645
          %1512 = vmatpush2.msra.mxu0 %v644
          %1513 = vmatprep.subr.mxu0 %v629
          %1514 = vmatpush2.msra.mxu0 %v628
          %1515 = vmatprep.mubr.f32.mxu0 %v357
          %1516 = vmatmul.mubr.f32.gmra.mxu0 %v356
          %v1517 = vpop.f32.mrf.mxu0
          %v1518 = vadd.f32 %v933, %v1517
          %v1519 = vpop.f32.mrf.mxu0
          %v1520 = vadd.f32 %v937, %v1519
          %1521 = vdwg.mxu0
          %v1522 = vxor.u32 %v1021, 2147483648
          %v1523 = vxor.u32 %v1023, 2147483648
          %v1524 = vxor.u32 %v1092, 2147483648
          %v1525 = vxor.u32 %v1094, 2147483648
          %v1526 = vxor.u32 %v1163, 2147483648
          %v1527 = vxor.u32 %v1165, 2147483648
          %v1528 = vxor.u32 %v1234, 2147483648
          %v1529 = vxor.u32 %v1236, 2147483648
          %v1530 = vxor.u32 %v1305, 2147483648
          %v1531 = vxor.u32 %v1307, 2147483648
          %v1532 = vxor.u32 %v1376, 2147483648
          %v1533 = vxor.u32 %v1378, 2147483648
          %v1534 = vxor.u32 %v1447, 2147483648
          %v1535 = vxor.u32 %v1449, 2147483648
          %v1536 = vxor.u32 %v1518, 2147483648
          %v1537 = vxor.u32 %v1520, 2147483648
          %v1538 = vmul.f32 %v1522, 1.442695
          %v1539 = vpow.pop %v1538
          %v1540 = vmul.f32 %v1523, 1.442695
          %v1541 = vpow.pop %v1540
          %v1542 = vmul.f32 %v1524, 1.442695
          %v1543 = vpow.pop %v1542
          %v1544 = vmul.f32 %v1525, 1.442695
          %v1545 = vpow.pop %v1544
          %v1546 = vmul.f32 %v1526, 1.442695
          %v1547 = vpow.pop %v1546
          %v1548 = vmul.f32 %v1527, 1.442695
          %v1549 = vpow.pop %v1548
          %v1550 = vmul.f32 %v1528, 1.442695
          %v1551 = vpow.pop %v1550
          %v1552 = vmul.f32 %v1529, 1.442695
          %v1553 = vpow.pop %v1552
          %v1554 = vmul.f32 %v1530, 1.442695
          %v1555 = vpow.pop %v1554
          %v1556 = vmul.f32 %v1531, 1.442695
          %v1557 = vpow.pop %v1556
          %v1558 = vmul.f32 %v1532, 1.442695
          %v1559 = vpow.pop %v1558
          %v1560 = vmul.f32 %v1533, 1.442695
          %v1561 = vpow.pop %v1560
          %v1562 = vmul.f32 %v1534, 1.442695
          %v1563 = vpow.pop %v1562
          %v1564 = vmul.f32 %v1535, 1.442695
          %v1565 = vpow.pop %v1564
          %v1566 = vmul.f32 %v1536, 1.442695
          %v1567 = vpow.pop %v1566
          %v1568 = vmul.f32 %v1537, 1.442695
          %v1569 = vpow.pop %v1568
          %v1570 = vadd.f32 %v1539, 1.0
          %v1571 = vadd.f32 %v1541, 1.0
          %v1572 = vadd.f32 %v1543, 1.0
          %v1573 = vadd.f32 %v1545, 1.0
          %v1574 = vadd.f32 %v1547, 1.0
          %v1575 = vadd.f32 %v1549, 1.0
          %v1576 = vadd.f32 %v1551, 1.0
          %v1577 = vadd.f32 %v1553, 1.0
          %v1578 = vadd.f32 %v1555, 1.0
          %v1579 = vadd.f32 %v1557, 1.0
          %v1580 = vadd.f32 %v1559, 1.0
          %v1581 = vadd.f32 %v1561, 1.0
          %v1582 = vadd.f32 %v1563, 1.0
          %v1583 = vadd.f32 %v1565, 1.0
          %v1584 = vadd.f32 %v1567, 1.0
          %v1585 = vadd.f32 %v1569, 1.0
          %v1586 = vrcp.pop %v1570
          %v1587 = vmul.f32 1.0, %v1586
          %v1588 = vrcp.pop %v1571
          %v1589 = vmul.f32 1.0, %v1588
          %v1590 = vrcp.pop %v1572
          %v1591 = vmul.f32 1.0, %v1590
          %v1592 = vrcp.pop %v1573
          %v1593 = vmul.f32 1.0, %v1592
          %v1594 = vrcp.pop %v1574
          %v1595 = vmul.f32 1.0, %v1594
          %v1596 = vrcp.pop %v1575
          %v1597 = vmul.f32 1.0, %v1596
          %v1598 = vrcp.pop %v1576
          %v1599 = vmul.f32 1.0, %v1598
          %v1600 = vrcp.pop %v1577
          %v1601 = vmul.f32 1.0, %v1600
          %v1602 = vrcp.pop %v1578
          %v1603 = vmul.f32 1.0, %v1602
          %v1604 = vrcp.pop %v1579
          %v1605 = vmul.f32 1.0, %v1604
          %v1606 = vrcp.pop %v1580
          %v1607 = vmul.f32 1.0, %v1606
          %v1608 = vrcp.pop %v1581
          %v1609 = vmul.f32 1.0, %v1608
          %v1610 = vrcp.pop %v1582
          %v1611 = vmul.f32 1.0, %v1610
          %v1612 = vrcp.pop %v1583
          %v1613 = vmul.f32 1.0, %v1612
          %v1614 = vrcp.pop %v1584
          %v1615 = vmul.f32 1.0, %v1614
          %v1616 = vrcp.pop %v1585
          %v1617 = vmul.f32 1.0, %v1616
          %1618 = vst [vmem:[#allocation2] sm:$0xff] %v1587
          %1619 = vst [vmem:[#allocation2 + $0x8] sm:$0xff] %v1589
          %1620 = vst [vmem:[#allocation2 + $0x10] sm:$0xff] %v1591
          %1621 = vst [vmem:[#allocation2 + $0x18] sm:$0xff] %v1593
          %1622 = vst [vmem:[#allocation2 + $0x20] sm:$0xff] %v1595
          %1623 = vst [vmem:[#allocation2 + $0x28] sm:$0xff] %v1597
          %1624 = vst [vmem:[#allocation2 + $0x30] sm:$0xff] %v1599
          %1625 = vst [vmem:[#allocation2 + $0x38] sm:$0xff] %v1601
          %1626 = vst [vmem:[#allocation2 + $0x40] sm:$0xff] %v1603
          %1627 = vst [vmem:[#allocation2 + $0x48] sm:$0xff] %v1605
          %1628 = vst [vmem:[#allocation2 + $0x50] sm:$0xff] %v1607
          %1629 = vst [vmem:[#allocation2 + $0x58] sm:$0xff] %v1609
          %1630 = vst [vmem:[#allocation2 + $0x60] sm:$0xff] %v1611
          %1631 = vst [vmem:[#allocation2 + $0x68] sm:$0xff] %v1613
          %1632 = vst [vmem:[#allocation2 + $0x70] sm:$0xff] %v1615
          %1633 = vst [vmem:[#allocation2 + $0x78] sm:$0xff] %v1617
          %1634 = vst [vmem:[#allocation3] sm:$0xff] 0.0
          %1635 = vst [vmem:[#allocation3 + $0x8] sm:$0xff] 0.0
          %1636 = vst [vmem:[#allocation3 + $0x10] sm:$0xff] 0.0
          %1637 = vst [vmem:[#allocation3 + $0x18] sm:$0xff] 0.0
          %1638 = vst [vmem:[#allocation3 + $0x20] sm:$0xff] 0.0
          %1639 = vst [vmem:[#allocation3 + $0x28] sm:$0xff] 0.0
          %1640 = vst [vmem:[#allocation3 + $0x30] sm:$0xff] 0.0
          %1641 = vst [vmem:[#allocation3 + $0x38] sm:$0xff] 0.0
          %1642 = vst [vmem:[#allocation3 + $0x40] sm:$0xff] 0.0
          %1643 = vst [vmem:[#allocation3 + $0x48] sm:$0xff] 0.0
          %1644 = vst [vmem:[#allocation3 + $0x50] sm:$0xff] 0.0
          %1645 = vst [vmem:[#allocation3 + $0x58] sm:$0xff] 0.0
          %1646 = vst [vmem:[#allocation3 + $0x60] sm:$0xff] 0.0
          %1647 = vst [vmem:[#allocation3 + $0x68] sm:$0xff] 0.0
          %1648 = vst [vmem:[#allocation3 + $0x70] sm:$0xff] 0.0
          %1649 = vst [vmem:[#allocation3 + $0x78] sm:$0xff] 0.0
        $region76: #{mlp_forward_pallas.1} parent=47 // pred_fallthru
          _
        %s1650 = smul.u32 %s25, 512
        %v1651 = vld [vmem:[#allocation3] sm:$0xff]
        %v1652 = vld [vmem:[#allocation3 + $0x8] sm:$0xff]
        %v1653 = vld [vmem:[#allocation3 + $0x10] sm:$0xff]
        %v1654 = vld [vmem:[#allocation3 + $0x18] sm:$0xff]
        %v1655 = vld [vmem:[#allocation3 + $0x20] sm:$0xff]
        %v1656 = vld [vmem:[#allocation3 + $0x28] sm:$0xff]
        %v1657 = vld [vmem:[#allocation3 + $0x30] sm:$0xff]
        %v1658 = vld [vmem:[#allocation3 + $0x38] sm:$0xff]
        %v1659 = vld [vmem:[#allocation3 + $0x40] sm:$0xff]
        %v1660 = vld [vmem:[#allocation3 + $0x48] sm:$0xff]
        %v1661 = vld [vmem:[#allocation3 + $0x50] sm:$0xff]
        %v1662 = vld [vmem:[#allocation3 + $0x58] sm:$0xff]
        %v1663 = vld [vmem:[#allocation3 + $0x60] sm:$0xff]
        %v1664 = vld [vmem:[#allocation3 + $0x68] sm:$0xff]
        %v1665 = vld [vmem:[#allocation3 + $0x70] sm:$0xff]
        %v1666 = vld [vmem:[#allocation3 + $0x78] sm:$0xff]
        %s1667 = sshra.s32 %s1650, 7
        %s1668 = sand.u32 %s1650, 127
        %s1669 = smul.addr %s1667, 8
        %s1670 = scalar_lea.vmem [#allocation2], %s1669
        %v1671 = vld [vmem:[%s1670] sm:$0xff]
        %v1672 = vld [vmem:[%s1670 + $0x8] sm:$0xff]
        %v1673 = vld [vmem:[%s1670 + $0x10] sm:$0xff]
        %v1674 = vld [vmem:[%s1670 + $0x18] sm:$0xff]
        %v1675 = vld [vmem:[%s317] sm:$0xff]
        %v1676 = vld [vmem:[%s317 + $0x8] sm:$0xff]
        %v1677 = vld [vmem:[%s317 + $0x10] sm:$0xff]
        %v1678 = vld [vmem:[%s317 + $0x18] sm:$0xff]
        %v1679 = vld [vmem:[%s317 + $0x20] sm:$0xff]
        %v1680 = vld [vmem:[%s317 + $0x28] sm:$0xff]
        %v1681 = vld [vmem:[%s317 + $0x30] sm:$0xff]
        %v1682 = vld [vmem:[%s317 + $0x38] sm:$0xff]
        %v1683 = vld [vmem:[%s317 + $0x40] sm:$0xff]
        %v1684 = vld [vmem:[%s317 + $0x48] sm:$0xff]
        %v1685 = vld [vmem:[%s317 + $0x50] sm:$0xff]
        %v1686 = vld [vmem:[%s317 + $0x58] sm:$0xff]
        %v1687 = vld [vmem:[%s317 + $0x60] sm:$0xff]
        %v1688 = vld [vmem:[%s317 + $0x68] sm:$0xff]
        %v1689 = vld [vmem:[%s317 + $0x70] sm:$0xff]
        %v1690 = vld [vmem:[%s317 + $0x78] sm:$0xff]
        %v1691 = vld [vmem:[%s317 + $0x80] sm:$0xff]
        %v1692 = vld [vmem:[%s317 + $0x88] sm:$0xff]
        %v1693 = vld [vmem:[%s317 + $0x90] sm:$0xff]
        %v1694 = vld [vmem:[%s317 + $0x98] sm:$0xff]
        %v1695 = vld [vmem:[%s317 + $0xa0] sm:$0xff]
        %v1696 = vld [vmem:[%s317 + $0xa8] sm:$0xff]
        %v1697 = vld [vmem:[%s317 + $0xb0] sm:$0xff]
        %v1698 = vld [vmem:[%s317 + $0xb8] sm:$0xff]
        %v1699 = vld [vmem:[%s317 + $0xc0] sm:$0xff]
        %v1700 = vld [vmem:[%s317 + $0xc8] sm:$0xff]
        %v1701 = vld [vmem:[%s317 + $0xd0] sm:$0xff]
        %v1702 = vld [vmem:[%s317 + $0xd8] sm:$0xff]
        %v1703 = vld [vmem:[%s317 + $0xe0] sm:$0xff]
        %v1704 = vld [vmem:[%s317 + $0xe8] sm:$0xff]
        %v1705 = vld [vmem:[%s317 + $0xf0] sm:$0xff]
        %v1706 = vld [vmem:[%s317 + $0xf8] sm:$0xff]
        %v1707 = vld [vmem:[%s317 + $0x100] sm:$0xff]
        %v1708 = vld [vmem:[%s317 + $0x108] sm:$0xff]
        %v1709 = vld [vmem:[%s317 + $0x110] sm:$0xff]
        %v1710 = vld [vmem:[%s317 + $0x118] sm:$0xff]
        %v1711 = vld [vmem:[%s317 + $0x120] sm:$0xff]
        %v1712 = vld [vmem:[%s317 + $0x128] sm:$0xff]
        %v1713 = vld [vmem:[%s317 + $0x130] sm:$0xff]
        %v1714 = vld [vmem:[%s317 + $0x138] sm:$0xff]
        %v1715 = vld [vmem:[%s317 + $0x140] sm:$0xff]
        %v1716 = vld [vmem:[%s317 + $0x148] sm:$0xff]
        %v1717 = vld [vmem:[%s317 + $0x150] sm:$0xff]
        %v1718 = vld [vmem:[%s317 + $0x158] sm:$0xff]
        %v1719 = vld [vmem:[%s317 + $0x160] sm:$0xff]
        %v1720 = vld [vmem:[%s317 + $0x168] sm:$0xff]
        %v1721 = vld [vmem:[%s317 + $0x170] sm:$0xff]
        %v1722 = vld [vmem:[%s317 + $0x178] sm:$0xff]
        %v1723 = vld [vmem:[%s317 + $0x180] sm:$0xff]
        %v1724 = vld [vmem:[%s317 + $0x188] sm:$0xff]
        %v1725 = vld [vmem:[%s317 + $0x190] sm:$0xff]
        %v1726 = vld [vmem:[%s317 + $0x198] sm:$0xff]
        %v1727 = vld [vmem:[%s317 + $0x1a0] sm:$0xff]
        %v1728 = vld [vmem:[%s317 + $0x1a8] sm:$0xff]
        %v1729 = vld [vmem:[%s317 + $0x1b0] sm:$0xff]
        %v1730 = vld [vmem:[%s317 + $0x1b8] sm:$0xff]
        %v1731 = vld [vmem:[%s317 + $0x1c0] sm:$0xff]
        %v1732 = vld [vmem:[%s317 + $0x1c8] sm:$0xff]
        %v1733 = vld [vmem:[%s317 + $0x1d0] sm:$0xff]
        %v1734 = vld [vmem:[%s317 + $0x1d8] sm:$0xff]
        %v1735 = vld [vmem:[%s317 + $0x1e0] sm:$0xff]
        %v1736 = vld [vmem:[%s317 + $0x1e8] sm:$0xff]
        %v1737 = vld [vmem:[%s317 + $0x1f0] sm:$0xff]
        %v1738 = vld [vmem:[%s317 + $0x1f8] sm:$0xff]
        %v1739 = vld [vmem:[%s317 + $0x200] sm:$0xff]
        %v1740 = vld [vmem:[%s317 + $0x208] sm:$0xff]
        %v1741 = vld [vmem:[%s317 + $0x210] sm:$0xff]
        %v1742 = vld [vmem:[%s317 + $0x218] sm:$0xff]
        %v1743 = vld [vmem:[%s317 + $0x220] sm:$0xff]
        %v1744 = vld [vmem:[%s317 + $0x228] sm:$0xff]
        %v1745 = vld [vmem:[%s317 + $0x230] sm:$0xff]
        %v1746 = vld [vmem:[%s317 + $0x238] sm:$0xff]
        %v1747 = vld [vmem:[%s317 + $0x240] sm:$0xff]
        %v1748 = vld [vmem:[%s317 + $0x248] sm:$0xff]
        %v1749 = vld [vmem:[%s317 + $0x250] sm:$0xff]
        %v1750 = vld [vmem:[%s317 + $0x258] sm:$0xff]
        %v1751 = vld [vmem:[%s317 + $0x260] sm:$0xff]
        %v1752 = vld [vmem:[%s317 + $0x268] sm:$0xff]
        %v1753 = vld [vmem:[%s317 + $0x270] sm:$0xff]
        %v1754 = vld [vmem:[%s317 + $0x278] sm:$0xff]
        %v1755 = vld [vmem:[%s317 + $0x280] sm:$0xff]
        %v1756 = vld [vmem:[%s317 + $0x288] sm:$0xff]
        %v1757 = vld [vmem:[%s317 + $0x290] sm:$0xff]
        %v1758 = vld [vmem:[%s317 + $0x298] sm:$0xff]
        %v1759 = vld [vmem:[%s317 + $0x2a0] sm:$0xff]
        %v1760 = vld [vmem:[%s317 + $0x2a8] sm:$0xff]
        %v1761 = vld [vmem:[%s317 + $0x2b0] sm:$0xff]
        %v1762 = vld [vmem:[%s317 + $0x2b8] sm:$0xff]
        %v1763 = vld [vmem:[%s317 + $0x2c0] sm:$0xff]
        %v1764 = vld [vmem:[%s317 + $0x2c8] sm:$0xff]
        %v1765 = vld [vmem:[%s317 + $0x2d0] sm:$0xff]
        %v1766 = vld [vmem:[%s317 + $0x2d8] sm:$0xff]
        %v1767 = vld [vmem:[%s317 + $0x2e0] sm:$0xff]
        %v1768 = vld [vmem:[%s317 + $0x2e8] sm:$0xff]
        %v1769 = vld [vmem:[%s317 + $0x2f0] sm:$0xff]
        %v1770 = vld [vmem:[%s317 + $0x2f8] sm:$0xff]
        %v1771 = vld [vmem:[%s317 + $0x300] sm:$0xff]
        %v1772 = vld [vmem:[%s317 + $0x308] sm:$0xff]
        %v1773 = vld [vmem:[%s317 + $0x310] sm:$0xff]
        %v1774 = vld [vmem:[%s317 + $0x318] sm:$0xff]
        %v1775 = vld [vmem:[%s317 + $0x320] sm:$0xff]
        %v1776 = vld [vmem:[%s317 + $0x328] sm:$0xff]
        %v1777 = vld [vmem:[%s317 + $0x330] sm:$0xff]
        %v1778 = vld [vmem:[%s317 + $0x338] sm:$0xff]
        %v1779 = vld [vmem:[%s317 + $0x340] sm:$0xff]
        %v1780 = vld [vmem:[%s317 + $0x348] sm:$0xff]
        %v1781 = vld [vmem:[%s317 + $0x350] sm:$0xff]
        %v1782 = vld [vmem:[%s317 + $0x358] sm:$0xff]
        %v1783 = vld [vmem:[%s317 + $0x360] sm:$0xff]
        %v1784 = vld [vmem:[%s317 + $0x368] sm:$0xff]
        %v1785 = vld [vmem:[%s317 + $0x370] sm:$0xff]
        %v1786 = vld [vmem:[%s317 + $0x378] sm:$0xff]
        %v1787 = vld [vmem:[%s317 + $0x380] sm:$0xff]
        %v1788 = vld [vmem:[%s317 + $0x388] sm:$0xff]
        %v1789 = vld [vmem:[%s317 + $0x390] sm:$0xff]
        %v1790 = vld [vmem:[%s317 + $0x398] sm:$0xff]
        %v1791 = vld [vmem:[%s317 + $0x3a0] sm:$0xff]
        %v1792 = vld [vmem:[%s317 + $0x3a8] sm:$0xff]
        %v1793 = vld [vmem:[%s317 + $0x3b0] sm:$0xff]
        %v1794 = vld [vmem:[%s317 + $0x3b8] sm:$0xff]
        %v1795 = vld [vmem:[%s317 + $0x3c0] sm:$0xff]
        %v1796 = vld [vmem:[%s317 + $0x3c8] sm:$0xff]
        %v1797 = vld [vmem:[%s317 + $0x3d0] sm:$0xff]
        %v1798 = vld [vmem:[%s317 + $0x3d8] sm:$0xff]
        %v1799 = vld [vmem:[%s317 + $0x3e0] sm:$0xff]
        %v1800 = vld [vmem:[%s317 + $0x3e8] sm:$0xff]
        %v1801 = vld [vmem:[%s317 + $0x3f0] sm:$0xff]
        %v1802 = vld [vmem:[%s317 + $0x3f8] sm:$0xff]
        %v1803 = vld [vmem:[%s317 + $0x400] sm:$0xff]
        %v1804 = vld [vmem:[%s317 + $0x408] sm:$0xff]
        %v1805 = vld [vmem:[%s317 + $0x410] sm:$0xff]
        %v1806 = vld [vmem:[%s317 + $0x418] sm:$0xff]
        %v1807 = vld [vmem:[%s317 + $0x420] sm:$0xff]
        %v1808 = vld [vmem:[%s317 + $0x428] sm:$0xff]
        %v1809 = vld [vmem:[%s317 + $0x430] sm:$0xff]
        %v1810 = vld [vmem:[%s317 + $0x438] sm:$0xff]
        %v1811 = vld [vmem:[%s317 + $0x440] sm:$0xff]
        %v1812 = vld [vmem:[%s317 + $0x448] sm:$0xff]
        %v1813 = vld [vmem:[%s317 + $0x450] sm:$0xff]
        %v1814 = vld [vmem:[%s317 + $0x458] sm:$0xff]
        %v1815 = vld [vmem:[%s317 + $0x460] sm:$0xff]
        %v1816 = vld [vmem:[%s317 + $0x468] sm:$0xff]
        %v1817 = vld [vmem:[%s317 + $0x470] sm:$0xff]
        %v1818 = vld [vmem:[%s317 + $0x478] sm:$0xff]
        %v1819 = vld [vmem:[%s317 + $0x480] sm:$0xff]
        %v1820 = vld [vmem:[%s317 + $0x488] sm:$0xff]
        %v1821 = vld [vmem:[%s317 + $0x490] sm:$0xff]
        %v1822 = vld [vmem:[%s317 + $0x498] sm:$0xff]
        %v1823 = vld [vmem:[%s317 + $0x4a0] sm:$0xff]
        %v1824 = vld [vmem:[%s317 + $0x4a8] sm:$0xff]
        %v1825 = vld [vmem:[%s317 + $0x4b0] sm:$0xff]
        %v1826 = vld [vmem:[%s317 + $0x4b8] sm:$0xff]
        %v1827 = vld [vmem:[%s317 + $0x4c0] sm:$0xff]
        %v1828 = vld [vmem:[%s317 + $0x4c8] sm:$0xff]
        %v1829 = vld [vmem:[%s317 + $0x4d0] sm:$0xff]
        %v1830 = vld [vmem:[%s317 + $0x4d8] sm:$0xff]
        %v1831 = vld [vmem:[%s317 + $0x4e0] sm:$0xff]
        %v1832 = vld [vmem:[%s317 + $0x4e8] sm:$0xff]
        %v1833 = vld [vmem:[%s317 + $0x4f0] sm:$0xff]
        %v1834 = vld [vmem:[%s317 + $0x4f8] sm:$0xff]
        %v1835 = vld [vmem:[%s317 + $0x500] sm:$0xff]
        %v1836 = vld [vmem:[%s317 + $0x508] sm:$0xff]
        %v1837 = vld [vmem:[%s317 + $0x510] sm:$0xff]
        %v1838 = vld [vmem:[%s317 + $0x518] sm:$0xff]
        %v1839 = vld [vmem:[%s317 + $0x520] sm:$0xff]
        %v1840 = vld [vmem:[%s317 + $0x528] sm:$0xff]
        %v1841 = vld [vmem:[%s317 + $0x530] sm:$0xff]
        %v1842 = vld [vmem:[%s317 + $0x538] sm:$0xff]
        %v1843 = vld [vmem:[%s317 + $0x540] sm:$0xff]
        %v1844 = vld [vmem:[%s317 + $0x548] sm:$0xff]
        %v1845 = vld [vmem:[%s317 + $0x550] sm:$0xff]
        %v1846 = vld [vmem:[%s317 + $0x558] sm:$0xff]
        %v1847 = vld [vmem:[%s317 + $0x560] sm:$0xff]
        %v1848 = vld [vmem:[%s317 + $0x568] sm:$0xff]
        %v1849 = vld [vmem:[%s317 + $0x570] sm:$0xff]
        %v1850 = vld [vmem:[%s317 + $0x578] sm:$0xff]
        %v1851 = vld [vmem:[%s317 + $0x580] sm:$0xff]
        %v1852 = vld [vmem:[%s317 + $0x588] sm:$0xff]
        %v1853 = vld [vmem:[%s317 + $0x590] sm:$0xff]
        %v1854 = vld [vmem:[%s317 + $0x598] sm:$0xff]
        %v1855 = vld [vmem:[%s317 + $0x5a0] sm:$0xff]
        %v1856 = vld [vmem:[%s317 + $0x5a8] sm:$0xff]
        %v1857 = vld [vmem:[%s317 + $0x5b0] sm:$0xff]
        %v1858 = vld [vmem:[%s317 + $0x5b8] sm:$0xff]
        %v1859 = vld [vmem:[%s317 + $0x5c0] sm:$0xff]
        %v1860 = vld [vmem:[%s317 + $0x5c8] sm:$0xff]
        %v1861 = vld [vmem:[%s317 + $0x5d0] sm:$0xff]
        %v1862 = vld [vmem:[%s317 + $0x5d8] sm:$0xff]
        %v1863 = vld [vmem:[%s317 + $0x5e0] sm:$0xff]
        %v1864 = vld [vmem:[%s317 + $0x5e8] sm:$0xff]
        %v1865 = vld [vmem:[%s317 + $0x5f0] sm:$0xff]
        %v1866 = vld [vmem:[%s317 + $0x5f8] sm:$0xff]
        %v1867 = vld [vmem:[%s317 + $0x600] sm:$0xff]
        %v1868 = vld [vmem:[%s317 + $0x608] sm:$0xff]
        %v1869 = vld [vmem:[%s317 + $0x610] sm:$0xff]
        %v1870 = vld [vmem:[%s317 + $0x618] sm:$0xff]
        %v1871 = vld [vmem:[%s317 + $0x620] sm:$0xff]
        %v1872 = vld [vmem:[%s317 + $0x628] sm:$0xff]
        %v1873 = vld [vmem:[%s317 + $0x630] sm:$0xff]
        %v1874 = vld [vmem:[%s317 + $0x638] sm:$0xff]
        %v1875 = vld [vmem:[%s317 + $0x640] sm:$0xff]
        %v1876 = vld [vmem:[%s317 + $0x648] sm:$0xff]
        %v1877 = vld [vmem:[%s317 + $0x650] sm:$0xff]
        %v1878 = vld [vmem:[%s317 + $0x658] sm:$0xff]
        %v1879 = vld [vmem:[%s317 + $0x660] sm:$0xff]
        %v1880 = vld [vmem:[%s317 + $0x668] sm:$0xff]
        %v1881 = vld [vmem:[%s317 + $0x670] sm:$0xff]
        %v1882 = vld [vmem:[%s317 + $0x678] sm:$0xff]
        %v1883 = vld [vmem:[%s317 + $0x680] sm:$0xff]
        %v1884 = vld [vmem:[%s317 + $0x688] sm:$0xff]
        %v1885 = vld [vmem:[%s317 + $0x690] sm:$0xff]
        %v1886 = vld [vmem:[%s317 + $0x698] sm:$0xff]
        %v1887 = vld [vmem:[%s317 + $0x6a0] sm:$0xff]
        %v1888 = vld [vmem:[%s317 + $0x6a8] sm:$0xff]
        %v1889 = vld [vmem:[%s317 + $0x6b0] sm:$0xff]
        %v1890 = vld [vmem:[%s317 + $0x6b8] sm:$0xff]
        %v1891 = vld [vmem:[%s317 + $0x6c0] sm:$0xff]
        %v1892 = vld [vmem:[%s317 + $0x6c8] sm:$0xff]
        %v1893 = vld [vmem:[%s317 + $0x6d0] sm:$0xff]
        %v1894 = vld [vmem:[%s317 + $0x6d8] sm:$0xff]
        %v1895 = vld [vmem:[%s317 + $0x6e0] sm:$0xff]
        %v1896 = vld [vmem:[%s317 + $0x6e8] sm:$0xff]
        %v1897 = vld [vmem:[%s317 + $0x6f0] sm:$0xff]
        %v1898 = vld [vmem:[%s317 + $0x6f8] sm:$0xff]
        %v1899 = vld [vmem:[%s317 + $0x700] sm:$0xff]
        %v1900 = vld [vmem:[%s317 + $0x708] sm:$0xff]
        %v1901 = vld [vmem:[%s317 + $0x710] sm:$0xff]
        %v1902 = vld [vmem:[%s317 + $0x718] sm:$0xff]
        %v1903 = vld [vmem:[%s317 + $0x720] sm:$0xff]
        %v1904 = vld [vmem:[%s317 + $0x728] sm:$0xff]
        %v1905 = vld [vmem:[%s317 + $0x730] sm:$0xff]
        %v1906 = vld [vmem:[%s317 + $0x738] sm:$0xff]
        %v1907 = vld [vmem:[%s317 + $0x740] sm:$0xff]
        %v1908 = vld [vmem:[%s317 + $0x748] sm:$0xff]
        %v1909 = vld [vmem:[%s317 + $0x750] sm:$0xff]
        %v1910 = vld [vmem:[%s317 + $0x758] sm:$0xff]
        %v1911 = vld [vmem:[%s317 + $0x760] sm:$0xff]
        %v1912 = vld [vmem:[%s317 + $0x768] sm:$0xff]
        %v1913 = vld [vmem:[%s317 + $0x770] sm:$0xff]
        %v1914 = vld [vmem:[%s317 + $0x778] sm:$0xff]
        %v1915 = vld [vmem:[%s317 + $0x780] sm:$0xff]
        %v1916 = vld [vmem:[%s317 + $0x788] sm:$0xff]
        %v1917 = vld [vmem:[%s317 + $0x790] sm:$0xff]
        %v1918 = vld [vmem:[%s317 + $0x798] sm:$0xff]
        %v1919 = vld [vmem:[%s317 + $0x7a0] sm:$0xff]
        %v1920 = vld [vmem:[%s317 + $0x7a8] sm:$0xff]
        %v1921 = vld [vmem:[%s317 + $0x7b0] sm:$0xff]
        %v1922 = vld [vmem:[%s317 + $0x7b8] sm:$0xff]
        %v1923 = vld [vmem:[%s317 + $0x7c0] sm:$0xff]
        %v1924 = vld [vmem:[%s317 + $0x7c8] sm:$0xff]
        %v1925 = vld [vmem:[%s317 + $0x7d0] sm:$0xff]
        %v1926 = vld [vmem:[%s317 + $0x7d8] sm:$0xff]
        %v1927 = vld [vmem:[%s317 + $0x7e0] sm:$0xff]
        %v1928 = vld [vmem:[%s317 + $0x7e8] sm:$0xff]
        %v1929 = vld [vmem:[%s317 + $0x7f0] sm:$0xff]
        %v1930 = vld [vmem:[%s317 + $0x7f8] sm:$0xff]
        %v1931 = vld [vmem:[%s317 + $0x800] sm:$0xff]
        %v1932 = vld [vmem:[%s317 + $0x808] sm:$0xff]
        %v1933 = vld [vmem:[%s317 + $0x810] sm:$0xff]
        %v1934 = vld [vmem:[%s317 + $0x818] sm:$0xff]
        %v1935 = vld [vmem:[%s317 + $0x820] sm:$0xff]
        %v1936 = vld [vmem:[%s317 + $0x828] sm:$0xff]
        %v1937 = vld [vmem:[%s317 + $0x830] sm:$0xff]
        %v1938 = vld [vmem:[%s317 + $0x838] sm:$0xff]
        %v1939 = vld [vmem:[%s317 + $0x840] sm:$0xff]
        %v1940 = vld [vmem:[%s317 + $0x848] sm:$0xff]
        %v1941 = vld [vmem:[%s317 + $0x850] sm:$0xff]
        %v1942 = vld [vmem:[%s317 + $0x858] sm:$0xff]
        %v1943 = vld [vmem:[%s317 + $0x860] sm:$0xff]
        %v1944 = vld [vmem:[%s317 + $0x868] sm:$0xff]
        %v1945 = vld [vmem:[%s317 + $0x870] sm:$0xff]
        %v1946 = vld [vmem:[%s317 + $0x878] sm:$0xff]
        %v1947 = vld [vmem:[%s317 + $0x880] sm:$0xff]
        %v1948 = vld [vmem:[%s317 + $0x888] sm:$0xff]
        %v1949 = vld [vmem:[%s317 + $0x890] sm:$0xff]
        %v1950 = vld [vmem:[%s317 + $0x898] sm:$0xff]
        %v1951 = vld [vmem:[%s317 + $0x8a0] sm:$0xff]
        %v1952 = vld [vmem:[%s317 + $0x8a8] sm:$0xff]
        %v1953 = vld [vmem:[%s317 + $0x8b0] sm:$0xff]
        %v1954 = vld [vmem:[%s317 + $0x8b8] sm:$0xff]
        %v1955 = vld [vmem:[%s317 + $0x8c0] sm:$0xff]
        %v1956 = vld [vmem:[%s317 + $0x8c8] sm:$0xff]
        %v1957 = vld [vmem:[%s317 + $0x8d0] sm:$0xff]
        %v1958 = vld [vmem:[%s317 + $0x8d8] sm:$0xff]
        %v1959 = vld [vmem:[%s317 + $0x8e0] sm:$0xff]
        %v1960 = vld [vmem:[%s317 + $0x8e8] sm:$0xff]
        %v1961 = vld [vmem:[%s317 + $0x8f0] sm:$0xff]
        %v1962 = vld [vmem:[%s317 + $0x8f8] sm:$0xff]
        %v1963 = vld [vmem:[%s317 + $0x900] sm:$0xff]
        %v1964 = vld [vmem:[%s317 + $0x908] sm:$0xff]
        %v1965 = vld [vmem:[%s317 + $0x910] sm:$0xff]
        %v1966 = vld [vmem:[%s317 + $0x918] sm:$0xff]
        %v1967 = vld [vmem:[%s317 + $0x920] sm:$0xff]
        %v1968 = vld [vmem:[%s317 + $0x928] sm:$0xff]
        %v1969 = vld [vmem:[%s317 + $0x930] sm:$0xff]
        %v1970 = vld [vmem:[%s317 + $0x938] sm:$0xff]
        %v1971 = vld [vmem:[%s317 + $0x940] sm:$0xff]
        %v1972 = vld [vmem:[%s317 + $0x948] sm:$0xff]
        %v1973 = vld [vmem:[%s317 + $0x950] sm:$0xff]
        %v1974 = vld [vmem:[%s317 + $0x958] sm:$0xff]
        %v1975 = vld [vmem:[%s317 + $0x960] sm:$0xff]
        %v1976 = vld [vmem:[%s317 + $0x968] sm:$0xff]
        %v1977 = vld [vmem:[%s317 + $0x970] sm:$0xff]
        %v1978 = vld [vmem:[%s317 + $0x978] sm:$0xff]
        %v1979 = vld [vmem:[%s317 + $0x980] sm:$0xff]
        %v1980 = vld [vmem:[%s317 + $0x988] sm:$0xff]
        %v1981 = vld [vmem:[%s317 + $0x990] sm:$0xff]
        %v1982 = vld [vmem:[%s317 + $0x998] sm:$0xff]
        %v1983 = vld [vmem:[%s317 + $0x9a0] sm:$0xff]
        %v1984 = vld [vmem:[%s317 + $0x9a8] sm:$0xff]
        %v1985 = vld [vmem:[%s317 + $0x9b0] sm:$0xff]
        %v1986 = vld [vmem:[%s317 + $0x9b8] sm:$0xff]
        %v1987 = vld [vmem:[%s317 + $0x9c0] sm:$0xff]
        %v1988 = vld [vmem:[%s317 + $0x9c8] sm:$0xff]
        %v1989 = vld [vmem:[%s317 + $0x9d0] sm:$0xff]
        %v1990 = vld [vmem:[%s317 + $0x9d8] sm:$0xff]
        %v1991 = vld [vmem:[%s317 + $0x9e0] sm:$0xff]
        %v1992 = vld [vmem:[%s317 + $0x9e8] sm:$0xff]
        %v1993 = vld [vmem:[%s317 + $0x9f0] sm:$0xff]
        %v1994 = vld [vmem:[%s317 + $0x9f8] sm:$0xff]
        %v1995 = vld [vmem:[%s317 + $0xa00] sm:$0xff]
        %v1996 = vld [vmem:[%s317 + $0xa08] sm:$0xff]
        %v1997 = vld [vmem:[%s317 + $0xa10] sm:$0xff]
        %v1998 = vld [vmem:[%s317 + $0xa18] sm:$0xff]
        %v1999 = vld [vmem:[%s317 + $0xa20] sm:$0xff]
        %v2000 = vld [vmem:[%s317 + $0xa28] sm:$0xff]
        %v2001 = vld [vmem:[%s317 + $0xa30] sm:$0xff]
        %v2002 = vld [vmem:[%s317 + $0xa38] sm:$0xff]
        %v2003 = vld [vmem:[%s317 + $0xa40] sm:$0xff]
        %v2004 = vld [vmem:[%s317 + $0xa48] sm:$0xff]
        %v2005 = vld [vmem:[%s317 + $0xa50] sm:$0xff]
        %v2006 = vld [vmem:[%s317 + $0xa58] sm:$0xff]
        %v2007 = vld [vmem:[%s317 + $0xa60] sm:$0xff]
        %v2008 = vld [vmem:[%s317 + $0xa68] sm:$0xff]
        %v2009 = vld [vmem:[%s317 + $0xa70] sm:$0xff]
        %v2010 = vld [vmem:[%s317 + $0xa78] sm:$0xff]
        %v2011 = vld [vmem:[%s317 + $0xa80] sm:$0xff]
        %v2012 = vld [vmem:[%s317 + $0xa88] sm:$0xff]
        %v2013 = vld [vmem:[%s317 + $0xa90] sm:$0xff]
        %v2014 = vld [vmem:[%s317 + $0xa98] sm:$0xff]
        %v2015 = vld [vmem:[%s317 + $0xaa0] sm:$0xff]
        %v2016 = vld [vmem:[%s317 + $0xaa8] sm:$0xff]
        %v2017 = vld [vmem:[%s317 + $0xab0] sm:$0xff]
        %v2018 = vld [vmem:[%s317 + $0xab8] sm:$0xff]
        %v2019 = vld [vmem:[%s317 + $0xac0] sm:$0xff]
        %v2020 = vld [vmem:[%s317 + $0xac8] sm:$0xff]
        %v2021 = vld [vmem:[%s317 + $0xad0] sm:$0xff]
        %v2022 = vld [vmem:[%s317 + $0xad8] sm:$0xff]
        %v2023 = vld [vmem:[%s317 + $0xae0] sm:$0xff]
        %v2024 = vld [vmem:[%s317 + $0xae8] sm:$0xff]
        %v2025 = vld [vmem:[%s317 + $0xaf0] sm:$0xff]
        %v2026 = vld [vmem:[%s317 + $0xaf8] sm:$0xff]
        %v2027 = vld [vmem:[%s317 + $0xb00] sm:$0xff]
        %v2028 = vld [vmem:[%s317 + $0xb08] sm:$0xff]
        %v2029 = vld [vmem:[%s317 + $0xb10] sm:$0xff]
        %v2030 = vld [vmem:[%s317 + $0xb18] sm:$0xff]
        %v2031 = vld [vmem:[%s317 + $0xb20] sm:$0xff]
        %v2032 = vld [vmem:[%s317 + $0xb28] sm:$0xff]
        %v2033 = vld [vmem:[%s317 + $0xb30] sm:$0xff]
        %v2034 = vld [vmem:[%s317 + $0xb38] sm:$0xff]
        %v2035 = vld [vmem:[%s317 + $0xb40] sm:$0xff]
        %v2036 = vld [vmem:[%s317 + $0xb48] sm:$0xff]
        %v2037 = vld [vmem:[%s317 + $0xb50] sm:$0xff]
        %v2038 = vld [vmem:[%s317 + $0xb58] sm:$0xff]
        %v2039 = vld [vmem:[%s317 + $0xb60] sm:$0xff]
        %v2040 = vld [vmem:[%s317 + $0xb68] sm:$0xff]
        %v2041 = vld [vmem:[%s317 + $0xb70] sm:$0xff]
        %v2042 = vld [vmem:[%s317 + $0xb78] sm:$0xff]
        %v2043 = vld [vmem:[%s317 + $0xb80] sm:$0xff]
        %v2044 = vld [vmem:[%s317 + $0xb88] sm:$0xff]
        %v2045 = vld [vmem:[%s317 + $0xb90] sm:$0xff]
        %v2046 = vld [vmem:[%s317 + $0xb98] sm:$0xff]
        %v2047 = vld [vmem:[%s317 + $0xba0] sm:$0xff]
        %v2048 = vld [vmem:[%s317 + $0xba8] sm:$0xff]
        %v2049 = vld [vmem:[%s317 + $0xbb0] sm:$0xff]
        %v2050 = vld [vmem:[%s317 + $0xbb8] sm:$0xff]
        %v2051 = vld [vmem:[%s317 + $0xbc0] sm:$0xff]
        %v2052 = vld [vmem:[%s317 + $0xbc8] sm:$0xff]
        %v2053 = vld [vmem:[%s317 + $0xbd0] sm:$0xff]
        %v2054 = vld [vmem:[%s317 + $0xbd8] sm:$0xff]
        %v2055 = vld [vmem:[%s317 + $0xbe0] sm:$0xff]
        %v2056 = vld [vmem:[%s317 + $0xbe8] sm:$0xff]
        %v2057 = vld [vmem:[%s317 + $0xbf0] sm:$0xff]
        %v2058 = vld [vmem:[%s317 + $0xbf8] sm:$0xff]
        %v2059 = vld [vmem:[%s317 + $0xc00] sm:$0xff]
        %v2060 = vld [vmem:[%s317 + $0xc08] sm:$0xff]
        %v2061 = vld [vmem:[%s317 + $0xc10] sm:$0xff]
        %v2062 = vld [vmem:[%s317 + $0xc18] sm:$0xff]
        %v2063 = vld [vmem:[%s317 + $0xc20] sm:$0xff]
        %v2064 = vld [vmem:[%s317 + $0xc28] sm:$0xff]
        %v2065 = vld [vmem:[%s317 + $0xc30] sm:$0xff]
        %v2066 = vld [vmem:[%s317 + $0xc38] sm:$0xff]
        %v2067 = vld [vmem:[%s317 + $0xc40] sm:$0xff]
        %v2068 = vld [vmem:[%s317 + $0xc48] sm:$0xff]
        %v2069 = vld [vmem:[%s317 + $0xc50] sm:$0xff]
        %v2070 = vld [vmem:[%s317 + $0xc58] sm:$0xff]
        %v2071 = vld [vmem:[%s317 + $0xc60] sm:$0xff]
        %v2072 = vld [vmem:[%s317 + $0xc68] sm:$0xff]
        %v2073 = vld [vmem:[%s317 + $0xc70] sm:$0xff]
        %v2074 = vld [vmem:[%s317 + $0xc78] sm:$0xff]
        %v2075 = vld [vmem:[%s317 + $0xc80] sm:$0xff]
        %v2076 = vld [vmem:[%s317 + $0xc88] sm:$0xff]
        %v2077 = vld [vmem:[%s317 + $0xc90] sm:$0xff]
        %v2078 = vld [vmem:[%s317 + $0xc98] sm:$0xff]
        %v2079 = vld [vmem:[%s317 + $0xca0] sm:$0xff]
        %v2080 = vld [vmem:[%s317 + $0xca8] sm:$0xff]
        %v2081 = vld [vmem:[%s317 + $0xcb0] sm:$0xff]
        %v2082 = vld [vmem:[%s317 + $0xcb8] sm:$0xff]
        %v2083 = vld [vmem:[%s317 + $0xcc0] sm:$0xff]
        %v2084 = vld [vmem:[%s317 + $0xcc8] sm:$0xff]
        %v2085 = vld [vmem:[%s317 + $0xcd0] sm:$0xff]
        %v2086 = vld [vmem:[%s317 + $0xcd8] sm:$0xff]
        %v2087 = vld [vmem:[%s317 + $0xce0] sm:$0xff]
        %v2088 = vld [vmem:[%s317 + $0xce8] sm:$0xff]
        %v2089 = vld [vmem:[%s317 + $0xcf0] sm:$0xff]
        %v2090 = vld [vmem:[%s317 + $0xcf8] sm:$0xff]
        %v2091 = vld [vmem:[%s317 + $0xd00] sm:$0xff]
        %v2092 = vld [vmem:[%s317 + $0xd08] sm:$0xff]
        %v2093 = vld [vmem:[%s317 + $0xd10] sm:$0xff]
        %v2094 = vld [vmem:[%s317 + $0xd18] sm:$0xff]
        %v2095 = vld [vmem:[%s317 + $0xd20] sm:$0xff]
        %v2096 = vld [vmem:[%s317 + $0xd28] sm:$0xff]
        %v2097 = vld [vmem:[%s317 + $0xd30] sm:$0xff]
        %v2098 = vld [vmem:[%s317 + $0xd38] sm:$0xff]
        %v2099 = vld [vmem:[%s317 + $0xd40] sm:$0xff]
        %v2100 = vld [vmem:[%s317 + $0xd48] sm:$0xff]
        %v2101 = vld [vmem:[%s317 + $0xd50] sm:$0xff]
        %v2102 = vld [vmem:[%s317 + $0xd58] sm:$0xff]
        %v2103 = vld [vmem:[%s317 + $0xd60] sm:$0xff]
        %v2104 = vld [vmem:[%s317 + $0xd68] sm:$0xff]
        %v2105 = vld [vmem:[%s317 + $0xd70] sm:$0xff]
        %v2106 = vld [vmem:[%s317 + $0xd78] sm:$0xff]
        %v2107 = vld [vmem:[%s317 + $0xd80] sm:$0xff]
        %v2108 = vld [vmem:[%s317 + $0xd88] sm:$0xff]
        %v2109 = vld [vmem:[%s317 + $0xd90] sm:$0xff]
        %v2110 = vld [vmem:[%s317 + $0xd98] sm:$0xff]
        %v2111 = vld [vmem:[%s317 + $0xda0] sm:$0xff]
        %v2112 = vld [vmem:[%s317 + $0xda8] sm:$0xff]
        %v2113 = vld [vmem:[%s317 + $0xdb0] sm:$0xff]
        %v2114 = vld [vmem:[%s317 + $0xdb8] sm:$0xff]
        %v2115 = vld [vmem:[%s317 + $0xdc0] sm:$0xff]
        %v2116 = vld [vmem:[%s317 + $0xdc8] sm:$0xff]
        %v2117 = vld [vmem:[%s317 + $0xdd0] sm:$0xff]
        %v2118 = vld [vmem:[%s317 + $0xdd8] sm:$0xff]
        %v2119 = vld [vmem:[%s317 + $0xde0] sm:$0xff]
        %v2120 = vld [vmem:[%s317 + $0xde8] sm:$0xff]
        %v2121 = vld [vmem:[%s317 + $0xdf0] sm:$0xff]
        %v2122 = vld [vmem:[%s317 + $0xdf8] sm:$0xff]
        %v2123 = vld [vmem:[%s317 + $0xe00] sm:$0xff]
        %v2124 = vld [vmem:[%s317 + $0xe08] sm:$0xff]
        %v2125 = vld [vmem:[%s317 + $0xe10] sm:$0xff]
        %v2126 = vld [vmem:[%s317 + $0xe18] sm:$0xff]
        %v2127 = vld [vmem:[%s317 + $0xe20] sm:$0xff]
        %v2128 = vld [vmem:[%s317 + $0xe28] sm:$0xff]
        %v2129 = vld [vmem:[%s317 + $0xe30] sm:$0xff]
        %v2130 = vld [vmem:[%s317 + $0xe38] sm:$0xff]
        %v2131 = vld [vmem:[%s317 + $0xe40] sm:$0xff]
        %v2132 = vld [vmem:[%s317 + $0xe48] sm:$0xff]
        %v2133 = vld [vmem:[%s317 + $0xe50] sm:$0xff]
        %v2134 = vld [vmem:[%s317 + $0xe58] sm:$0xff]
        %v2135 = vld [vmem:[%s317 + $0xe60] sm:$0xff]
        %v2136 = vld [vmem:[%s317 + $0xe68] sm:$0xff]
        %v2137 = vld [vmem:[%s317 + $0xe70] sm:$0xff]
        %v2138 = vld [vmem:[%s317 + $0xe78] sm:$0xff]
        %v2139 = vld [vmem:[%s317 + $0xe80] sm:$0xff]
        %v2140 = vld [vmem:[%s317 + $0xe88] sm:$0xff]
        %v2141 = vld [vmem:[%s317 + $0xe90] sm:$0xff]
        %v2142 = vld [vmem:[%s317 + $0xe98] sm:$0xff]
        %v2143 = vld [vmem:[%s317 + $0xea0] sm:$0xff]
        %v2144 = vld [vmem:[%s317 + $0xea8] sm:$0xff]
        %v2145 = vld [vmem:[%s317 + $0xeb0] sm:$0xff]
        %v2146 = vld [vmem:[%s317 + $0xeb8] sm:$0xff]
        %v2147 = vld [vmem:[%s317 + $0xec0] sm:$0xff]
        %v2148 = vld [vmem:[%s317 + $0xec8] sm:$0xff]
        %v2149 = vld [vmem:[%s317 + $0xed0] sm:$0xff]
        %v2150 = vld [vmem:[%s317 + $0xed8] sm:$0xff]
        %v2151 = vld [vmem:[%s317 + $0xee0] sm:$0xff]
        %v2152 = vld [vmem:[%s317 + $0xee8] sm:$0xff]
        %v2153 = vld [vmem:[%s317 + $0xef0] sm:$0xff]
        %v2154 = vld [vmem:[%s317 + $0xef8] sm:$0xff]
        %v2155 = vld [vmem:[%s317 + $0xf00] sm:$0xff]
        %v2156 = vld [vmem:[%s317 + $0xf08] sm:$0xff]
        %v2157 = vld [vmem:[%s317 + $0xf10] sm:$0xff]
        %v2158 = vld [vmem:[%s317 + $0xf18] sm:$0xff]
        %v2159 = vld [vmem:[%s317 + $0xf20] sm:$0xff]
        %v2160 = vld [vmem:[%s317 + $0xf28] sm:$0xff]
        %v2161 = vld [vmem:[%s317 + $0xf30] sm:$0xff]
        %v2162 = vld [vmem:[%s317 + $0xf38] sm:$0xff]
        %v2163 = vld [vmem:[%s317 + $0xf40] sm:$0xff]
        %v2164 = vld [vmem:[%s317 + $0xf48] sm:$0xff]
        %v2165 = vld [vmem:[%s317 + $0xf50] sm:$0xff]
        %v2166 = vld [vmem:[%s317 + $0xf58] sm:$0xff]
        %v2167 = vld [vmem:[%s317 + $0xf60] sm:$0xff]
        %v2168 = vld [vmem:[%s317 + $0xf68] sm:$0xff]
        %v2169 = vld [vmem:[%s317 + $0xf70] sm:$0xff]
        %v2170 = vld [vmem:[%s317 + $0xf78] sm:$0xff]
        %v2171 = vld [vmem:[%s317 + $0xf80] sm:$0xff]
        %v2172 = vld [vmem:[%s317 + $0xf88] sm:$0xff]
        %v2173 = vld [vmem:[%s317 + $0xf90] sm:$0xff]
        %v2174 = vld [vmem:[%s317 + $0xf98] sm:$0xff]
        %v2175 = vld [vmem:[%s317 + $0xfa0] sm:$0xff]
        %v2176 = vld [vmem:[%s317 + $0xfa8] sm:$0xff]
        %v2177 = vld [vmem:[%s317 + $0xfb0] sm:$0xff]
        %v2178 = vld [vmem:[%s317 + $0xfb8] sm:$0xff]
        %v2179 = vld [vmem:[%s317 + $0xfc0] sm:$0xff]
        %v2180 = vld [vmem:[%s317 + $0xfc8] sm:$0xff]
        %v2181 = vld [vmem:[%s317 + $0xfd0] sm:$0xff]
        %v2182 = vld [vmem:[%s317 + $0xfd8] sm:$0xff]
        %v2183 = vld [vmem:[%s317 + $0xfe0] sm:$0xff]
        %v2184 = vld [vmem:[%s317 + $0xfe8] sm:$0xff]
        %v2185 = vld [vmem:[%s317 + $0xff0] sm:$0xff]
        %v2186 = vld [vmem:[%s317 + $0xff8] sm:$0xff]
        %v2187 = vld [vmem:[%s317 + $0x1000] sm:$0xff]
        %v2188 = vld [vmem:[%s317 + $0x1008] sm:$0xff]
        %v2189 = vld [vmem:[%s317 + $0x1010] sm:$0xff]
        %v2190 = vld [vmem:[%s317 + $0x1018] sm:$0xff]
        %v2191 = vld [vmem:[%s317 + $0x1020] sm:$0xff]
        %v2192 = vld [vmem:[%s317 + $0x1028] sm:$0xff]
        %v2193 = vld [vmem:[%s317 + $0x1030] sm:$0xff]
        %v2194 = vld [vmem:[%s317 + $0x1038] sm:$0xff]
        %v2195 = vld [vmem:[%s317 + $0x1040] sm:$0xff]
        %v2196 = vld [vmem:[%s317 + $0x1048] sm:$0xff]
        %v2197 = vld [vmem:[%s317 + $0x1050] sm:$0xff]
        %v2198 = vld [vmem:[%s317 + $0x1058] sm:$0xff]
        %v2199 = vld [vmem:[%s317 + $0x1060] sm:$0xff]
        %v2200 = vld [vmem:[%s317 + $0x1068] sm:$0xff]
        %v2201 = vld [vmem:[%s317 + $0x1070] sm:$0xff]
        %v2202 = vld [vmem:[%s317 + $0x1078] sm:$0xff]
        %v2203 = vld [vmem:[%s317 + $0x1080] sm:$0xff]
        %v2204 = vld [vmem:[%s317 + $0x1088] sm:$0xff]
        %v2205 = vld [vmem:[%s317 + $0x1090] sm:$0xff]
        %v2206 = vld [vmem:[%s317 + $0x1098] sm:$0xff]
        %v2207 = vld [vmem:[%s317 + $0x10a0] sm:$0xff]
        %v2208 = vld [vmem:[%s317 + $0x10a8] sm:$0xff]
        %v2209 = vld [vmem:[%s317 + $0x10b0] sm:$0xff]
        %v2210 = vld [vmem:[%s317 + $0x10b8] sm:$0xff]
        %v2211 = vld [vmem:[%s317 + $0x10c0] sm:$0xff]
        %v2212 = vld [vmem:[%s317 + $0x10c8] sm:$0xff]
        %v2213 = vld [vmem:[%s317 + $0x10d0] sm:$0xff]
        %v2214 = vld [vmem:[%s317 + $0x10d8] sm:$0xff]
        %v2215 = vld [vmem:[%s317 + $0x10e0] sm:$0xff]
        %v2216 = vld [vmem:[%s317 + $0x10e8] sm:$0xff]
        %v2217 = vld [vmem:[%s317 + $0x10f0] sm:$0xff]
        %v2218 = vld [vmem:[%s317 + $0x10f8] sm:$0xff]
        %v2219 = vld [vmem:[%s317 + $0x1100] sm:$0xff]
        %v2220 = vld [vmem:[%s317 + $0x1108] sm:$0xff]
        %v2221 = vld [vmem:[%s317 + $0x1110] sm:$0xff]
        %v2222 = vld [vmem:[%s317 + $0x1118] sm:$0xff]
        %v2223 = vld [vmem:[%s317 + $0x1120] sm:$0xff]
        %v2224 = vld [vmem:[%s317 + $0x1128] sm:$0xff]
        %v2225 = vld [vmem:[%s317 + $0x1130] sm:$0xff]
        %v2226 = vld [vmem:[%s317 + $0x1138] sm:$0xff]
        %v2227 = vld [vmem:[%s317 + $0x1140] sm:$0xff]
        %v2228 = vld [vmem:[%s317 + $0x1148] sm:$0xff]
        %v2229 = vld [vmem:[%s317 + $0x1150] sm:$0xff]
        %v2230 = vld [vmem:[%s317 + $0x1158] sm:$0xff]
        %v2231 = vld [vmem:[%s317 + $0x1160] sm:$0xff]
        %v2232 = vld [vmem:[%s317 + $0x1168] sm:$0xff]
        %v2233 = vld [vmem:[%s317 + $0x1170] sm:$0xff]
        %v2234 = vld [vmem:[%s317 + $0x1178] sm:$0xff]
        %v2235 = vld [vmem:[%s317 + $0x1180] sm:$0xff]
        %v2236 = vld [vmem:[%s317 + $0x1188] sm:$0xff]
        %v2237 = vld [vmem:[%s317 + $0x1190] sm:$0xff]
        %v2238 = vld [vmem:[%s317 + $0x1198] sm:$0xff]
        %v2239 = vld [vmem:[%s317 + $0x11a0] sm:$0xff]
        %v2240 = vld [vmem:[%s317 + $0x11a8] sm:$0xff]
        %v2241 = vld [vmem:[%s317 + $0x11b0] sm:$0xff]
        %v2242 = vld [vmem:[%s317 + $0x11b8] sm:$0xff]
        %v2243 = vld [vmem:[%s317 + $0x11c0] sm:$0xff]
        %v2244 = vld [vmem:[%s317 + $0x11c8] sm:$0xff]
        %v2245 = vld [vmem:[%s317 + $0x11d0] sm:$0xff]
        %v2246 = vld [vmem:[%s317 + $0x11d8] sm:$0xff]
        %v2247 = vld [vmem:[%s317 + $0x11e0] sm:$0xff]
        %v2248 = vld [vmem:[%s317 + $0x11e8] sm:$0xff]
        %v2249 = vld [vmem:[%s317 + $0x11f0] sm:$0xff]
        %v2250 = vld [vmem:[%s317 + $0x11f8] sm:$0xff]
        %v2251 = vld [vmem:[%s317 + $0x1200] sm:$0xff]
        %v2252 = vld [vmem:[%s317 + $0x1208] sm:$0xff]
        %v2253 = vld [vmem:[%s317 + $0x1210] sm:$0xff]
        %v2254 = vld [vmem:[%s317 + $0x1218] sm:$0xff]
        %v2255 = vld [vmem:[%s317 + $0x1220] sm:$0xff]
        %v2256 = vld [vmem:[%s317 + $0x1228] sm:$0xff]
        %v2257 = vld [vmem:[%s317 + $0x1230] sm:$0xff]
        %v2258 = vld [vmem:[%s317 + $0x1238] sm:$0xff]
        %v2259 = vld [vmem:[%s317 + $0x1240] sm:$0xff]
        %v2260 = vld [vmem:[%s317 + $0x1248] sm:$0xff]
        %v2261 = vld [vmem:[%s317 + $0x1250] sm:$0xff]
        %v2262 = vld [vmem:[%s317 + $0x1258] sm:$0xff]
        %v2263 = vld [vmem:[%s317 + $0x1260] sm:$0xff]
        %v2264 = vld [vmem:[%s317 + $0x1268] sm:$0xff]
        %v2265 = vld [vmem:[%s317 + $0x1270] sm:$0xff]
        %v2266 = vld [vmem:[%s317 + $0x1278] sm:$0xff]
        %v2267 = vld [vmem:[%s317 + $0x1280] sm:$0xff]
        %v2268 = vld [vmem:[%s317 + $0x1288] sm:$0xff]
        %v2269 = vld [vmem:[%s317 + $0x1290] sm:$0xff]
        %v2270 = vld [vmem:[%s317 + $0x1298] sm:$0xff]
        %v2271 = vld [vmem:[%s317 + $0x12a0] sm:$0xff]
        %v2272 = vld [vmem:[%s317 + $0x12a8] sm:$0xff]
        %v2273 = vld [vmem:[%s317 + $0x12b0] sm:$0xff]
        %v2274 = vld [vmem:[%s317 + $0x12b8] sm:$0xff]
        %v2275 = vld [vmem:[%s317 + $0x12c0] sm:$0xff]
        %v2276 = vld [vmem:[%s317 + $0x12c8] sm:$0xff]
        %v2277 = vld [vmem:[%s317 + $0x12d0] sm:$0xff]
        %v2278 = vld [vmem:[%s317 + $0x12d8] sm:$0xff]
        %v2279 = vld [vmem:[%s317 + $0x12e0] sm:$0xff]
        %v2280 = vld [vmem:[%s317 + $0x12e8] sm:$0xff]
        %v2281 = vld [vmem:[%s317 + $0x12f0] sm:$0xff]
        %v2282 = vld [vmem:[%s317 + $0x12f8] sm:$0xff]
        %v2283 = vld [vmem:[%s317 + $0x1300] sm:$0xff]
        %v2284 = vld [vmem:[%s317 + $0x1308] sm:$0xff]
        %v2285 = vld [vmem:[%s317 + $0x1310] sm:$0xff]
        %v2286 = vld [vmem:[%s317 + $0x1318] sm:$0xff]
        %v2287 = vld [vmem:[%s317 + $0x1320] sm:$0xff]
        %v2288 = vld [vmem:[%s317 + $0x1328] sm:$0xff]
        %v2289 = vld [vmem:[%s317 + $0x1330] sm:$0xff]
        %v2290 = vld [vmem:[%s317 + $0x1338] sm:$0xff]
        %v2291 = vld [vmem:[%s317 + $0x1340] sm:$0xff]
        %v2292 = vld [vmem:[%s317 + $0x1348] sm:$0xff]
        %v2293 = vld [vmem:[%s317 + $0x1350] sm:$0xff]
        %v2294 = vld [vmem:[%s317 + $0x1358] sm:$0xff]
        %v2295 = vld [vmem:[%s317 + $0x1360] sm:$0xff]
        %v2296 = vld [vmem:[%s317 + $0x1368] sm:$0xff]
        %v2297 = vld [vmem:[%s317 + $0x1370] sm:$0xff]
        %v2298 = vld [vmem:[%s317 + $0x1378] sm:$0xff]
        %v2299 = vld [vmem:[%s317 + $0x1380] sm:$0xff]
        %v2300 = vld [vmem:[%s317 + $0x1388] sm:$0xff]
        %v2301 = vld [vmem:[%s317 + $0x1390] sm:$0xff]
        %v2302 = vld [vmem:[%s317 + $0x1398] sm:$0xff]
        %v2303 = vld [vmem:[%s317 + $0x13a0] sm:$0xff]
        %v2304 = vld [vmem:[%s317 + $0x13a8] sm:$0xff]
        %v2305 = vld [vmem:[%s317 + $0x13b0] sm:$0xff]
        %v2306 = vld [vmem:[%s317 + $0x13b8] sm:$0xff]
        %v2307 = vld [vmem:[%s317 + $0x13c0] sm:$0xff]
        %v2308 = vld [vmem:[%s317 + $0x13c8] sm:$0xff]
        %v2309 = vld [vmem:[%s317 + $0x13d0] sm:$0xff]
        %v2310 = vld [vmem:[%s317 + $0x13d8] sm:$0xff]
        %v2311 = vld [vmem:[%s317 + $0x13e0] sm:$0xff]
        %v2312 = vld [vmem:[%s317 + $0x13e8] sm:$0xff]
        %v2313 = vld [vmem:[%s317 + $0x13f0] sm:$0xff]
        %v2314 = vld [vmem:[%s317 + $0x13f8] sm:$0xff]
        %v2315 = vld [vmem:[%s317 + $0x1400] sm:$0xff]
        %v2316 = vld [vmem:[%s317 + $0x1408] sm:$0xff]
        %v2317 = vld [vmem:[%s317 + $0x1410] sm:$0xff]
        %v2318 = vld [vmem:[%s317 + $0x1418] sm:$0xff]
        %v2319 = vld [vmem:[%s317 + $0x1420] sm:$0xff]
        %v2320 = vld [vmem:[%s317 + $0x1428] sm:$0xff]
        %v2321 = vld [vmem:[%s317 + $0x1430] sm:$0xff]
        %v2322 = vld [vmem:[%s317 + $0x1438] sm:$0xff]
        %v2323 = vld [vmem:[%s317 + $0x1440] sm:$0xff]
        %v2324 = vld [vmem:[%s317 + $0x1448] sm:$0xff]
        %v2325 = vld [vmem:[%s317 + $0x1450] sm:$0xff]
        %v2326 = vld [vmem:[%s317 + $0x1458] sm:$0xff]
        %v2327 = vld [vmem:[%s317 + $0x1460] sm:$0xff]
        %v2328 = vld [vmem:[%s317 + $0x1468] sm:$0xff]
        %v2329 = vld [vmem:[%s317 + $0x1470] sm:$0xff]
        %v2330 = vld [vmem:[%s317 + $0x1478] sm:$0xff]
        %v2331 = vld [vmem:[%s317 + $0x1480] sm:$0xff]
        %v2332 = vld [vmem:[%s317 + $0x1488] sm:$0xff]
        %v2333 = vld [vmem:[%s317 + $0x1490] sm:$0xff]
        %v2334 = vld [vmem:[%s317 + $0x1498] sm:$0xff]
        %v2335 = vld [vmem:[%s317 + $0x14a0] sm:$0xff]
        %v2336 = vld [vmem:[%s317 + $0x14a8] sm:$0xff]
        %v2337 = vld [vmem:[%s317 + $0x14b0] sm:$0xff]
        %v2338 = vld [vmem:[%s317 + $0x14b8] sm:$0xff]
        %v2339 = vld [vmem:[%s317 + $0x14c0] sm:$0xff]
        %v2340 = vld [vmem:[%s317 + $0x14c8] sm:$0xff]
        %v2341 = vld [vmem:[%s317 + $0x14d0] sm:$0xff]
        %v2342 = vld [vmem:[%s317 + $0x14d8] sm:$0xff]
        %v2343 = vld [vmem:[%s317 + $0x14e0] sm:$0xff]
        %v2344 = vld [vmem:[%s317 + $0x14e8] sm:$0xff]
        %v2345 = vld [vmem:[%s317 + $0x14f0] sm:$0xff]
        %v2346 = vld [vmem:[%s317 + $0x14f8] sm:$0xff]
        %v2347 = vld [vmem:[%s317 + $0x1500] sm:$0xff]
        %v2348 = vld [vmem:[%s317 + $0x1508] sm:$0xff]
        %v2349 = vld [vmem:[%s317 + $0x1510] sm:$0xff]
        %v2350 = vld [vmem:[%s317 + $0x1518] sm:$0xff]
        %v2351 = vld [vmem:[%s317 + $0x1520] sm:$0xff]
        %v2352 = vld [vmem:[%s317 + $0x1528] sm:$0xff]
        %v2353 = vld [vmem:[%s317 + $0x1530] sm:$0xff]
        %v2354 = vld [vmem:[%s317 + $0x1538] sm:$0xff]
        %v2355 = vld [vmem:[%s317 + $0x1540] sm:$0xff]
        %v2356 = vld [vmem:[%s317 + $0x1548] sm:$0xff]
        %v2357 = vld [vmem:[%s317 + $0x1550] sm:$0xff]
        %v2358 = vld [vmem:[%s317 + $0x1558] sm:$0xff]
        %v2359 = vld [vmem:[%s317 + $0x1560] sm:$0xff]
        %v2360 = vld [vmem:[%s317 + $0x1568] sm:$0xff]
        %v2361 = vld [vmem:[%s317 + $0x1570] sm:$0xff]
        %v2362 = vld [vmem:[%s317 + $0x1578] sm:$0xff]
        %v2363 = vld [vmem:[%s317 + $0x1580] sm:$0xff]
        %v2364 = vld [vmem:[%s317 + $0x1588] sm:$0xff]
        %v2365 = vld [vmem:[%s317 + $0x1590] sm:$0xff]
        %v2366 = vld [vmem:[%s317 + $0x1598] sm:$0xff]
        %v2367 = vld [vmem:[%s317 + $0x15a0] sm:$0xff]
        %v2368 = vld [vmem:[%s317 + $0x15a8] sm:$0xff]
        %v2369 = vld [vmem:[%s317 + $0x15b0] sm:$0xff]
        %v2370 = vld [vmem:[%s317 + $0x15b8] sm:$0xff]
        %v2371 = vld [vmem:[%s317 + $0x15c0] sm:$0xff]
        %v2372 = vld [vmem:[%s317 + $0x15c8] sm:$0xff]
        %v2373 = vld [vmem:[%s317 + $0x15d0] sm:$0xff]
        %v2374 = vld [vmem:[%s317 + $0x15d8] sm:$0xff]
        %v2375 = vld [vmem:[%s317 + $0x15e0] sm:$0xff]
        %v2376 = vld [vmem:[%s317 + $0x15e8] sm:$0xff]
        %v2377 = vld [vmem:[%s317 + $0x15f0] sm:$0xff]
        %v2378 = vld [vmem:[%s317 + $0x15f8] sm:$0xff]
        %v2379 = vld [vmem:[%s317 + $0x1600] sm:$0xff]
        %v2380 = vld [vmem:[%s317 + $0x1608] sm:$0xff]
        %v2381 = vld [vmem:[%s317 + $0x1610] sm:$0xff]
        %v2382 = vld [vmem:[%s317 + $0x1618] sm:$0xff]
        %v2383 = vld [vmem:[%s317 + $0x1620] sm:$0xff]
        %v2384 = vld [vmem:[%s317 + $0x1628] sm:$0xff]
        %v2385 = vld [vmem:[%s317 + $0x1630] sm:$0xff]
        %v2386 = vld [vmem:[%s317 + $0x1638] sm:$0xff]
        %v2387 = vld [vmem:[%s317 + $0x1640] sm:$0xff]
        %v2388 = vld [vmem:[%s317 + $0x1648] sm:$0xff]
        %v2389 = vld [vmem:[%s317 + $0x1650] sm:$0xff]
        %v2390 = vld [vmem:[%s317 + $0x1658] sm:$0xff]
        %v2391 = vld [vmem:[%s317 + $0x1660] sm:$0xff]
        %v2392 = vld [vmem:[%s317 + $0x1668] sm:$0xff]
        %v2393 = vld [vmem:[%s317 + $0x1670] sm:$0xff]
        %v2394 = vld [vmem:[%s317 + $0x1678] sm:$0xff]
        %v2395 = vld [vmem:[%s317 + $0x1680] sm:$0xff]
        %v2396 = vld [vmem:[%s317 + $0x1688] sm:$0xff]
        %v2397 = vld [vmem:[%s317 + $0x1690] sm:$0xff]
        %v2398 = vld [vmem:[%s317 + $0x1698] sm:$0xff]
        %v2399 = vld [vmem:[%s317 + $0x16a0] sm:$0xff]
        %v2400 = vld [vmem:[%s317 + $0x16a8] sm:$0xff]
        %v2401 = vld [vmem:[%s317 + $0x16b0] sm:$0xff]
        %v2402 = vld [vmem:[%s317 + $0x16b8] sm:$0xff]
        %v2403 = vld [vmem:[%s317 + $0x16c0] sm:$0xff]
        %v2404 = vld [vmem:[%s317 + $0x16c8] sm:$0xff]
        %v2405 = vld [vmem:[%s317 + $0x16d0] sm:$0xff]
        %v2406 = vld [vmem:[%s317 + $0x16d8] sm:$0xff]
        %v2407 = vld [vmem:[%s317 + $0x16e0] sm:$0xff]
        %v2408 = vld [vmem:[%s317 + $0x16e8] sm:$0xff]
        %v2409 = vld [vmem:[%s317 + $0x16f0] sm:$0xff]
        %v2410 = vld [vmem:[%s317 + $0x16f8] sm:$0xff]
        %v2411 = vld [vmem:[%s317 + $0x1700] sm:$0xff]
        %v2412 = vld [vmem:[%s317 + $0x1708] sm:$0xff]
        %v2413 = vld [vmem:[%s317 + $0x1710] sm:$0xff]
        %v2414 = vld [vmem:[%s317 + $0x1718] sm:$0xff]
        %v2415 = vld [vmem:[%s317 + $0x1720] sm:$0xff]
        %v2416 = vld [vmem:[%s317 + $0x1728] sm:$0xff]
        %v2417 = vld [vmem:[%s317 + $0x1730] sm:$0xff]
        %v2418 = vld [vmem:[%s317 + $0x1738] sm:$0xff]
        %v2419 = vld [vmem:[%s317 + $0x1740] sm:$0xff]
        %v2420 = vld [vmem:[%s317 + $0x1748] sm:$0xff]
        %v2421 = vld [vmem:[%s317 + $0x1750] sm:$0xff]
        %v2422 = vld [vmem:[%s317 + $0x1758] sm:$0xff]
        %v2423 = vld [vmem:[%s317 + $0x1760] sm:$0xff]
        %v2424 = vld [vmem:[%s317 + $0x1768] sm:$0xff]
        %v2425 = vld [vmem:[%s317 + $0x1770] sm:$0xff]
        %v2426 = vld [vmem:[%s317 + $0x1778] sm:$0xff]
        %v2427 = vld [vmem:[%s317 + $0x1780] sm:$0xff]
        %v2428 = vld [vmem:[%s317 + $0x1788] sm:$0xff]
        %v2429 = vld [vmem:[%s317 + $0x1790] sm:$0xff]
        %v2430 = vld [vmem:[%s317 + $0x1798] sm:$0xff]
        %v2431 = vld [vmem:[%s317 + $0x17a0] sm:$0xff]
        %v2432 = vld [vmem:[%s317 + $0x17a8] sm:$0xff]
        %v2433 = vld [vmem:[%s317 + $0x17b0] sm:$0xff]
        %v2434 = vld [vmem:[%s317 + $0x17b8] sm:$0xff]
        %v2435 = vld [vmem:[%s317 + $0x17c0] sm:$0xff]
        %v2436 = vld [vmem:[%s317 + $0x17c8] sm:$0xff]
        %v2437 = vld [vmem:[%s317 + $0x17d0] sm:$0xff]
        %v2438 = vld [vmem:[%s317 + $0x17d8] sm:$0xff]
        %v2439 = vld [vmem:[%s317 + $0x17e0] sm:$0xff]
        %v2440 = vld [vmem:[%s317 + $0x17e8] sm:$0xff]
        %v2441 = vld [vmem:[%s317 + $0x17f0] sm:$0xff]
        %v2442 = vld [vmem:[%s317 + $0x17f8] sm:$0xff]
        %v2443 = vld [vmem:[%s317 + $0x1800] sm:$0xff]
        %v2444 = vld [vmem:[%s317 + $0x1808] sm:$0xff]
        %v2445 = vld [vmem:[%s317 + $0x1810] sm:$0xff]
        %v2446 = vld [vmem:[%s317 + $0x1818] sm:$0xff]
        %v2447 = vld [vmem:[%s317 + $0x1820] sm:$0xff]
        %v2448 = vld [vmem:[%s317 + $0x1828] sm:$0xff]
        %v2449 = vld [vmem:[%s317 + $0x1830] sm:$0xff]
        %v2450 = vld [vmem:[%s317 + $0x1838] sm:$0xff]
        %v2451 = vld [vmem:[%s317 + $0x1840] sm:$0xff]
        %v2452 = vld [vmem:[%s317 + $0x1848] sm:$0xff]
        %v2453 = vld [vmem:[%s317 + $0x1850] sm:$0xff]
        %v2454 = vld [vmem:[%s317 + $0x1858] sm:$0xff]
        %v2455 = vld [vmem:[%s317 + $0x1860] sm:$0xff]
        %v2456 = vld [vmem:[%s317 + $0x1868] sm:$0xff]
        %v2457 = vld [vmem:[%s317 + $0x1870] sm:$0xff]
        %v2458 = vld [vmem:[%s317 + $0x1878] sm:$0xff]
        %v2459 = vld [vmem:[%s317 + $0x1880] sm:$0xff]
        %v2460 = vld [vmem:[%s317 + $0x1888] sm:$0xff]
        %v2461 = vld [vmem:[%s317 + $0x1890] sm:$0xff]
        %v2462 = vld [vmem:[%s317 + $0x1898] sm:$0xff]
        %v2463 = vld [vmem:[%s317 + $0x18a0] sm:$0xff]
        %v2464 = vld [vmem:[%s317 + $0x18a8] sm:$0xff]
        %v2465 = vld [vmem:[%s317 + $0x18b0] sm:$0xff]
        %v2466 = vld [vmem:[%s317 + $0x18b8] sm:$0xff]
        %v2467 = vld [vmem:[%s317 + $0x18c0] sm:$0xff]
        %v2468 = vld [vmem:[%s317 + $0x18c8] sm:$0xff]
        %v2469 = vld [vmem:[%s317 + $0x18d0] sm:$0xff]
        %v2470 = vld [vmem:[%s317 + $0x18d8] sm:$0xff]
        %v2471 = vld [vmem:[%s317 + $0x18e0] sm:$0xff]
        %v2472 = vld [vmem:[%s317 + $0x18e8] sm:$0xff]
        %v2473 = vld [vmem:[%s317 + $0x18f0] sm:$0xff]
        %v2474 = vld [vmem:[%s317 + $0x18f8] sm:$0xff]
        %v2475 = vld [vmem:[%s317 + $0x1900] sm:$0xff]
        %v2476 = vld [vmem:[%s317 + $0x1908] sm:$0xff]
        %v2477 = vld [vmem:[%s317 + $0x1910] sm:$0xff]
        %v2478 = vld [vmem:[%s317 + $0x1918] sm:$0xff]
        %v2479 = vld [vmem:[%s317 + $0x1920] sm:$0xff]
        %v2480 = vld [vmem:[%s317 + $0x1928] sm:$0xff]
        %v2481 = vld [vmem:[%s317 + $0x1930] sm:$0xff]
        %v2482 = vld [vmem:[%s317 + $0x1938] sm:$0xff]
        %v2483 = vld [vmem:[%s317 + $0x1940] sm:$0xff]
        %v2484 = vld [vmem:[%s317 + $0x1948] sm:$0xff]
        %v2485 = vld [vmem:[%s317 + $0x1950] sm:$0xff]
        %v2486 = vld [vmem:[%s317 + $0x1958] sm:$0xff]
        %v2487 = vld [vmem:[%s317 + $0x1960] sm:$0xff]
        %v2488 = vld [vmem:[%s317 + $0x1968] sm:$0xff]
        %v2489 = vld [vmem:[%s317 + $0x1970] sm:$0xff]
        %v2490 = vld [vmem:[%s317 + $0x1978] sm:$0xff]
        %v2491 = vld [vmem:[%s317 + $0x1980] sm:$0xff]
        %v2492 = vld [vmem:[%s317 + $0x1988] sm:$0xff]
        %v2493 = vld [vmem:[%s317 + $0x1990] sm:$0xff]
        %v2494 = vld [vmem:[%s317 + $0x1998] sm:$0xff]
        %v2495 = vld [vmem:[%s317 + $0x19a0] sm:$0xff]
        %v2496 = vld [vmem:[%s317 + $0x19a8] sm:$0xff]
        %v2497 = vld [vmem:[%s317 + $0x19b0] sm:$0xff]
        %v2498 = vld [vmem:[%s317 + $0x19b8] sm:$0xff]
        %v2499 = vld [vmem:[%s317 + $0x19c0] sm:$0xff]
        %v2500 = vld [vmem:[%s317 + $0x19c8] sm:$0xff]
        %v2501 = vld [vmem:[%s317 + $0x19d0] sm:$0xff]
        %v2502 = vld [vmem:[%s317 + $0x19d8] sm:$0xff]
        %v2503 = vld [vmem:[%s317 + $0x19e0] sm:$0xff]
        %v2504 = vld [vmem:[%s317 + $0x19e8] sm:$0xff]
        %v2505 = vld [vmem:[%s317 + $0x19f0] sm:$0xff]
        %v2506 = vld [vmem:[%s317 + $0x19f8] sm:$0xff]
        %v2507 = vld [vmem:[%s317 + $0x1a00] sm:$0xff]
        %v2508 = vld [vmem:[%s317 + $0x1a08] sm:$0xff]
        %v2509 = vld [vmem:[%s317 + $0x1a10] sm:$0xff]
        %v2510 = vld [vmem:[%s317 + $0x1a18] sm:$0xff]
        %v2511 = vld [vmem:[%s317 + $0x1a20] sm:$0xff]
        %v2512 = vld [vmem:[%s317 + $0x1a28] sm:$0xff]
        %v2513 = vld [vmem:[%s317 + $0x1a30] sm:$0xff]
        %v2514 = vld [vmem:[%s317 + $0x1a38] sm:$0xff]
        %v2515 = vld [vmem:[%s317 + $0x1a40] sm:$0xff]
        %v2516 = vld [vmem:[%s317 + $0x1a48] sm:$0xff]
        %v2517 = vld [vmem:[%s317 + $0x1a50] sm:$0xff]
        %v2518 = vld [vmem:[%s317 + $0x1a58] sm:$0xff]
        %v2519 = vld [vmem:[%s317 + $0x1a60] sm:$0xff]
        %v2520 = vld [vmem:[%s317 + $0x1a68] sm:$0xff]
        %v2521 = vld [vmem:[%s317 + $0x1a70] sm:$0xff]
        %v2522 = vld [vmem:[%s317 + $0x1a78] sm:$0xff]
        %v2523 = vld [vmem:[%s317 + $0x1a80] sm:$0xff]
        %v2524 = vld [vmem:[%s317 + $0x1a88] sm:$0xff]
        %v2525 = vld [vmem:[%s317 + $0x1a90] sm:$0xff]
        %v2526 = vld [vmem:[%s317 + $0x1a98] sm:$0xff]
        %v2527 = vld [vmem:[%s317 + $0x1aa0] sm:$0xff]
        %v2528 = vld [vmem:[%s317 + $0x1aa8] sm:$0xff]
        %v2529 = vld [vmem:[%s317 + $0x1ab0] sm:$0xff]
        %v2530 = vld [vmem:[%s317 + $0x1ab8] sm:$0xff]
        %v2531 = vld [vmem:[%s317 + $0x1ac0] sm:$0xff]
        %v2532 = vld [vmem:[%s317 + $0x1ac8] sm:$0xff]
        %v2533 = vld [vmem:[%s317 + $0x1ad0] sm:$0xff]
        %v2534 = vld [vmem:[%s317 + $0x1ad8] sm:$0xff]
        %v2535 = vld [vmem:[%s317 + $0x1ae0] sm:$0xff]
        %v2536 = vld [vmem:[%s317 + $0x1ae8] sm:$0xff]
        %v2537 = vld [vmem:[%s317 + $0x1af0] sm:$0xff]
        %v2538 = vld [vmem:[%s317 + $0x1af8] sm:$0xff]
        %v2539 = vld [vmem:[%s317 + $0x1b00] sm:$0xff]
        %v2540 = vld [vmem:[%s317 + $0x1b08] sm:$0xff]
        %v2541 = vld [vmem:[%s317 + $0x1b10] sm:$0xff]
        %v2542 = vld [vmem:[%s317 + $0x1b18] sm:$0xff]
        %v2543 = vld [vmem:[%s317 + $0x1b20] sm:$0xff]
        %v2544 = vld [vmem:[%s317 + $0x1b28] sm:$0xff]
        %v2545 = vld [vmem:[%s317 + $0x1b30] sm:$0xff]
        %v2546 = vld [vmem:[%s317 + $0x1b38] sm:$0xff]
        %v2547 = vld [vmem:[%s317 + $0x1b40] sm:$0xff]
        %v2548 = vld [vmem:[%s317 + $0x1b48] sm:$0xff]
        %v2549 = vld [vmem:[%s317 + $0x1b50] sm:$0xff]
        %v2550 = vld [vmem:[%s317 + $0x1b58] sm:$0xff]
        %v2551 = vld [vmem:[%s317 + $0x1b60] sm:$0xff]
        %v2552 = vld [vmem:[%s317 + $0x1b68] sm:$0xff]
        %v2553 = vld [vmem:[%s317 + $0x1b70] sm:$0xff]
        %v2554 = vld [vmem:[%s317 + $0x1b78] sm:$0xff]
        %v2555 = vld [vmem:[%s317 + $0x1b80] sm:$0xff]
        %v2556 = vld [vmem:[%s317 + $0x1b88] sm:$0xff]
        %v2557 = vld [vmem:[%s317 + $0x1b90] sm:$0xff]
        %v2558 = vld [vmem:[%s317 + $0x1b98] sm:$0xff]
        %v2559 = vld [vmem:[%s317 + $0x1ba0] sm:$0xff]
        %v2560 = vld [vmem:[%s317 + $0x1ba8] sm:$0xff]
        %v2561 = vld [vmem:[%s317 + $0x1bb0] sm:$0xff]
        %v2562 = vld [vmem:[%s317 + $0x1bb8] sm:$0xff]
        %v2563 = vld [vmem:[%s317 + $0x1bc0] sm:$0xff]
        %v2564 = vld [vmem:[%s317 + $0x1bc8] sm:$0xff]
        %v2565 = vld [vmem:[%s317 + $0x1bd0] sm:$0xff]
        %v2566 = vld [vmem:[%s317 + $0x1bd8] sm:$0xff]
        %v2567 = vld [vmem:[%s317 + $0x1be0] sm:$0xff]
        %v2568 = vld [vmem:[%s317 + $0x1be8] sm:$0xff]
        %v2569 = vld [vmem:[%s317 + $0x1bf0] sm:$0xff]
        %v2570 = vld [vmem:[%s317 + $0x1bf8] sm:$0xff]
        %v2571 = vld [vmem:[%s317 + $0x1c00] sm:$0xff]
        %v2572 = vld [vmem:[%s317 + $0x1c08] sm:$0xff]
        %v2573 = vld [vmem:[%s317 + $0x1c10] sm:$0xff]
        %v2574 = vld [vmem:[%s317 + $0x1c18] sm:$0xff]
        %v2575 = vld [vmem:[%s317 + $0x1c20] sm:$0xff]
        %v2576 = vld [vmem:[%s317 + $0x1c28] sm:$0xff]
        %v2577 = vld [vmem:[%s317 + $0x1c30] sm:$0xff]
        %v2578 = vld [vmem:[%s317 + $0x1c38] sm:$0xff]
        %v2579 = vld [vmem:[%s317 + $0x1c40] sm:$0xff]
        %v2580 = vld [vmem:[%s317 + $0x1c48] sm:$0xff]
        %v2581 = vld [vmem:[%s317 + $0x1c50] sm:$0xff]
        %v2582 = vld [vmem:[%s317 + $0x1c58] sm:$0xff]
        %v2583 = vld [vmem:[%s317 + $0x1c60] sm:$0xff]
        %v2584 = vld [vmem:[%s317 + $0x1c68] sm:$0xff]
        %v2585 = vld [vmem:[%s317 + $0x1c70] sm:$0xff]
        %v2586 = vld [vmem:[%s317 + $0x1c78] sm:$0xff]
        %v2587 = vld [vmem:[%s317 + $0x1c80] sm:$0xff]
        %v2588 = vld [vmem:[%s317 + $0x1c88] sm:$0xff]
        %v2589 = vld [vmem:[%s317 + $0x1c90] sm:$0xff]
        %v2590 = vld [vmem:[%s317 + $0x1c98] sm:$0xff]
        %v2591 = vld [vmem:[%s317 + $0x1ca0] sm:$0xff]
        %v2592 = vld [vmem:[%s317 + $0x1ca8] sm:$0xff]
        %v2593 = vld [vmem:[%s317 + $0x1cb0] sm:$0xff]
        %v2594 = vld [vmem:[%s317 + $0x1cb8] sm:$0xff]
        %v2595 = vld [vmem:[%s317 + $0x1cc0] sm:$0xff]
        %v2596 = vld [vmem:[%s317 + $0x1cc8] sm:$0xff]
        %v2597 = vld [vmem:[%s317 + $0x1cd0] sm:$0xff]
        %v2598 = vld [vmem:[%s317 + $0x1cd8] sm:$0xff]
        %v2599 = vld [vmem:[%s317 + $0x1ce0] sm:$0xff]
        %v2600 = vld [vmem:[%s317 + $0x1ce8] sm:$0xff]
        %v2601 = vld [vmem:[%s317 + $0x1cf0] sm:$0xff]
        %v2602 = vld [vmem:[%s317 + $0x1cf8] sm:$0xff]
        %v2603 = vld [vmem:[%s317 + $0x1d00] sm:$0xff]
        %v2604 = vld [vmem:[%s317 + $0x1d08] sm:$0xff]
        %v2605 = vld [vmem:[%s317 + $0x1d10] sm:$0xff]
        %v2606 = vld [vmem:[%s317 + $0x1d18] sm:$0xff]
        %v2607 = vld [vmem:[%s317 + $0x1d20] sm:$0xff]
        %v2608 = vld [vmem:[%s317 + $0x1d28] sm:$0xff]
        %v2609 = vld [vmem:[%s317 + $0x1d30] sm:$0xff]
        %v2610 = vld [vmem:[%s317 + $0x1d38] sm:$0xff]
        %v2611 = vld [vmem:[%s317 + $0x1d40] sm:$0xff]
        %v2612 = vld [vmem:[%s317 + $0x1d48] sm:$0xff]
        %v2613 = vld [vmem:[%s317 + $0x1d50] sm:$0xff]
        %v2614 = vld [vmem:[%s317 + $0x1d58] sm:$0xff]
        %v2615 = vld [vmem:[%s317 + $0x1d60] sm:$0xff]
        %v2616 = vld [vmem:[%s317 + $0x1d68] sm:$0xff]
        %v2617 = vld [vmem:[%s317 + $0x1d70] sm:$0xff]
        %v2618 = vld [vmem:[%s317 + $0x1d78] sm:$0xff]
        %v2619 = vld [vmem:[%s317 + $0x1d80] sm:$0xff]
        %v2620 = vld [vmem:[%s317 + $0x1d88] sm:$0xff]
        %v2621 = vld [vmem:[%s317 + $0x1d90] sm:$0xff]
        %v2622 = vld [vmem:[%s317 + $0x1d98] sm:$0xff]
        %v2623 = vld [vmem:[%s317 + $0x1da0] sm:$0xff]
        %v2624 = vld [vmem:[%s317 + $0x1da8] sm:$0xff]
        %v2625 = vld [vmem:[%s317 + $0x1db0] sm:$0xff]
        %v2626 = vld [vmem:[%s317 + $0x1db8] sm:$0xff]
        %v2627 = vld [vmem:[%s317 + $0x1dc0] sm:$0xff]
        %v2628 = vld [vmem:[%s317 + $0x1dc8] sm:$0xff]
        %v2629 = vld [vmem:[%s317 + $0x1dd0] sm:$0xff]
        %v2630 = vld [vmem:[%s317 + $0x1dd8] sm:$0xff]
        %v2631 = vld [vmem:[%s317 + $0x1de0] sm:$0xff]
        %v2632 = vld [vmem:[%s317 + $0x1de8] sm:$0xff]
        %v2633 = vld [vmem:[%s317 + $0x1df0] sm:$0xff]
        %v2634 = vld [vmem:[%s317 + $0x1df8] sm:$0xff]
        %v2635 = vld [vmem:[%s317 + $0x1e00] sm:$0xff]
        %v2636 = vld [vmem:[%s317 + $0x1e08] sm:$0xff]
        %v2637 = vld [vmem:[%s317 + $0x1e10] sm:$0xff]
        %v2638 = vld [vmem:[%s317 + $0x1e18] sm:$0xff]
        %v2639 = vld [vmem:[%s317 + $0x1e20] sm:$0xff]
        %v2640 = vld [vmem:[%s317 + $0x1e28] sm:$0xff]
        %v2641 = vld [vmem:[%s317 + $0x1e30] sm:$0xff]
        %v2642 = vld [vmem:[%s317 + $0x1e38] sm:$0xff]
        %v2643 = vld [vmem:[%s317 + $0x1e40] sm:$0xff]
        %v2644 = vld [vmem:[%s317 + $0x1e48] sm:$0xff]
        %v2645 = vld [vmem:[%s317 + $0x1e50] sm:$0xff]
        %v2646 = vld [vmem:[%s317 + $0x1e58] sm:$0xff]
        %v2647 = vld [vmem:[%s317 + $0x1e60] sm:$0xff]
        %v2648 = vld [vmem:[%s317 + $0x1e68] sm:$0xff]
        %v2649 = vld [vmem:[%s317 + $0x1e70] sm:$0xff]
        %v2650 = vld [vmem:[%s317 + $0x1e78] sm:$0xff]
        %v2651 = vld [vmem:[%s317 + $0x1e80] sm:$0xff]
        %v2652 = vld [vmem:[%s317 + $0x1e88] sm:$0xff]
        %v2653 = vld [vmem:[%s317 + $0x1e90] sm:$0xff]
        %v2654 = vld [vmem:[%s317 + $0x1e98] sm:$0xff]
        %v2655 = vld [vmem:[%s317 + $0x1ea0] sm:$0xff]
        %v2656 = vld [vmem:[%s317 + $0x1ea8] sm:$0xff]
        %v2657 = vld [vmem:[%s317 + $0x1eb0] sm:$0xff]
        %v2658 = vld [vmem:[%s317 + $0x1eb8] sm:$0xff]
        %v2659 = vld [vmem:[%s317 + $0x1ec0] sm:$0xff]
        %v2660 = vld [vmem:[%s317 + $0x1ec8] sm:$0xff]
        %v2661 = vld [vmem:[%s317 + $0x1ed0] sm:$0xff]
        %v2662 = vld [vmem:[%s317 + $0x1ed8] sm:$0xff]
        %v2663 = vld [vmem:[%s317 + $0x1ee0] sm:$0xff]
        %v2664 = vld [vmem:[%s317 + $0x1ee8] sm:$0xff]
        %v2665 = vld [vmem:[%s317 + $0x1ef0] sm:$0xff]
        %v2666 = vld [vmem:[%s317 + $0x1ef8] sm:$0xff]
        %v2667 = vld [vmem:[%s317 + $0x1f00] sm:$0xff]
        %v2668 = vld [vmem:[%s317 + $0x1f08] sm:$0xff]
        %v2669 = vld [vmem:[%s317 + $0x1f10] sm:$0xff]
        %v2670 = vld [vmem:[%s317 + $0x1f18] sm:$0xff]
        %v2671 = vld [vmem:[%s317 + $0x1f20] sm:$0xff]
        %v2672 = vld [vmem:[%s317 + $0x1f28] sm:$0xff]
        %v2673 = vld [vmem:[%s317 + $0x1f30] sm:$0xff]
        %v2674 = vld [vmem:[%s317 + $0x1f38] sm:$0xff]
        %v2675 = vld [vmem:[%s317 + $0x1f40] sm:$0xff]
        %v2676 = vld [vmem:[%s317 + $0x1f48] sm:$0xff]
        %v2677 = vld [vmem:[%s317 + $0x1f50] sm:$0xff]
        %v2678 = vld [vmem:[%s317 + $0x1f58] sm:$0xff]
        %v2679 = vld [vmem:[%s317 + $0x1f60] sm:$0xff]
        %v2680 = vld [vmem:[%s317 + $0x1f68] sm:$0xff]
        %v2681 = vld [vmem:[%s317 + $0x1f70] sm:$0xff]
        %v2682 = vld [vmem:[%s317 + $0x1f78] sm:$0xff]
        %v2683 = vld [vmem:[%s317 + $0x1f80] sm:$0xff]
        %v2684 = vld [vmem:[%s317 + $0x1f88] sm:$0xff]
        %v2685 = vld [vmem:[%s317 + $0x1f90] sm:$0xff]
        %v2686 = vld [vmem:[%s317 + $0x1f98] sm:$0xff]
        %v2687 = vld [vmem:[%s317 + $0x1fa0] sm:$0xff]
        %v2688 = vld [vmem:[%s317 + $0x1fa8] sm:$0xff]
        %v2689 = vld [vmem:[%s317 + $0x1fb0] sm:$0xff]
        %v2690 = vld [vmem:[%s317 + $0x1fb8] sm:$0xff]
        %v2691 = vld [vmem:[%s317 + $0x1fc0] sm:$0xff]
        %v2692 = vld [vmem:[%s317 + $0x1fc8] sm:$0xff]
        %v2693 = vld [vmem:[%s317 + $0x1fd0] sm:$0xff]
        %v2694 = vld [vmem:[%s317 + $0x1fd8] sm:$0xff]
        %v2695 = vld [vmem:[%s317 + $0x1fe0] sm:$0xff]
        %v2696 = vld [vmem:[%s317 + $0x1fe8] sm:$0xff]
        %v2697 = vld [vmem:[%s317 + $0x1ff0] sm:$0xff]
        %v2698 = vld [vmem:[%s317 + $0x1ff8] sm:$0xff]
        %2699 = vmatprep.subr.mxu0 %v1916
        %2700 = vmatpush1.msra.mxu0 %v1915
        %2701 = vmatprep.subr.mxu0 %v1900
        %2702 = vmatpush1.msra.mxu0 %v1899
        %2703 = vmatprep.subr.mxu0 %v1884
        %2704 = vmatpush1.msra.mxu0 %v1883
        %2705 = vmatprep.subr.mxu0 %v1868
        %2706 = vmatpush1.msra.mxu0 %v1867
        %2707 = vmatprep.subr.mxu0 %v1852
        %2708 = vmatpush1.msra.mxu0 %v1851
        %2709 = vmatprep.subr.mxu0 %v1836
        %2710 = vmatpush1.msra.mxu0 %v1835
        %2711 = vmatprep.subr.mxu0 %v1820
        %2712 = vmatpush1.msra.mxu0 %v1819
        %2713 = vmatprep.subr.mxu0 %v1804
        %2714 = vmatpush1.msra.mxu0 %v1803
        %2715 = vmatprep.subr.mxu0 %v1788
        %2716 = vmatpush1.msra.mxu0 %v1787
        %2717 = vmatprep.subr.mxu0 %v1772
        %2718 = vmatpush1.msra.mxu0 %v1771
        %2719 = vmatprep.subr.mxu0 %v1756
        %2720 = vmatpush1.msra.mxu0 %v1755
        %2721 = vmatprep.subr.mxu0 %v1740
        %2722 = vmatpush1.msra.mxu0 %v1739
        %2723 = vmatprep.subr.mxu0 %v1724
        %2724 = vmatpush1.msra.mxu0 %v1723
        %2725 = vmatprep.subr.mxu0 %v1708
        %2726 = vmatpush1.msra.mxu0 %v1707
        %2727 = vmatprep.subr.mxu0 %v1692
        %2728 = vmatpush1.msra.mxu0 %v1691
        %2729 = vmatprep.subr.mxu0 %v1676
        %2730 = vmatpush1.msra.mxu0 %v1675
        %2731 = vmatprep.subr.mxu0 %v2172
        %2732 = vmatpush2.msra.mxu0 %v2171
        %2733 = vmatprep.subr.mxu0 %v2156
        %2734 = vmatpush2.msra.mxu0 %v2155
        %2735 = vmatprep.subr.mxu0 %v2140
        %2736 = vmatpush2.msra.mxu0 %v2139
        %2737 = vmatprep.subr.mxu0 %v2124
        %2738 = vmatpush2.msra.mxu0 %v2123
        %2739 = vmatprep.subr.mxu0 %v2108
        %2740 = vmatpush2.msra.mxu0 %v2107
        %2741 = vmatprep.subr.mxu0 %v2092
        %2742 = vmatpush2.msra.mxu0 %v2091
        %2743 = vmatprep.subr.mxu0 %v2076
        %2744 = vmatpush2.msra.mxu0 %v2075
        %2745 = vmatprep.subr.mxu0 %v2060
        %2746 = vmatpush2.msra.mxu0 %v2059
        %2747 = vmatprep.subr.mxu0 %v2044
        %2748 = vmatpush2.msra.mxu0 %v2043
        %2749 = vmatprep.subr.mxu0 %v2028
        %2750 = vmatpush2.msra.mxu0 %v2027
        %2751 = vmatprep.subr.mxu0 %v2012
        %2752 = vmatpush2.msra.mxu0 %v2011
        %2753 = vmatprep.subr.mxu0 %v1996
        %2754 = vmatpush2.msra.mxu0 %v1995
        %2755 = vmatprep.subr.mxu0 %v1980
        %2756 = vmatpush2.msra.mxu0 %v1979
        %2757 = vmatprep.subr.mxu0 %v1964
        %2758 = vmatpush2.msra.mxu0 %v1963
        %2759 = vmatprep.subr.mxu0 %v1948
        %2760 = vmatpush2.msra.mxu0 %v1947
        %2761 = vmatprep.subr.mxu0 %v1932
        %2762 = vmatpush2.msra.mxu0 %v1931
        %2763 = vmatprep.mubr.f32.mxu0 %v1672
        %2764 = vmatmul.mubr.f32.gmra.mxu0 %v1671
        %v2765 = vpop.f32.mrf.mxu0
        %v2766 = vadd.f32 0.0, %v2765
        %v2767 = vpop.f32.mrf.mxu0
        %v2768 = vadd.f32 0.0, %v2767
        %2769 = vdwg.mxu0
        %2770 = vmatprep.subr.mxu0 %v2428
        %2771 = vmatpush1.msra.mxu0 %v2427
        %2772 = vmatprep.subr.mxu0 %v2412
        %2773 = vmatpush1.msra.mxu0 %v2411
        %2774 = vmatprep.subr.mxu0 %v2396
        %2775 = vmatpush1.msra.mxu0 %v2395
        %2776 = vmatprep.subr.mxu0 %v2380
        %2777 = vmatpush1.msra.mxu0 %v2379
        %2778 = vmatprep.subr.mxu0 %v2364
        %2779 = vmatpush1.msra.mxu0 %v2363
        %2780 = vmatprep.subr.mxu0 %v2348
        %2781 = vmatpush1.msra.mxu0 %v2347
        %2782 = vmatprep.subr.mxu0 %v2332
        %2783 = vmatpush1.msra.mxu0 %v2331
        %2784 = vmatprep.subr.mxu0 %v2316
        %2785 = vmatpush1.msra.mxu0 %v2315
        %2786 = vmatprep.subr.mxu0 %v2300
        %2787 = vmatpush1.msra.mxu0 %v2299
        %2788 = vmatprep.subr.mxu0 %v2284
        %2789 = vmatpush1.msra.mxu0 %v2283
        %2790 = vmatprep.subr.mxu0 %v2268
        %2791 = vmatpush1.msra.mxu0 %v2267
        %2792 = vmatprep.subr.mxu0 %v2252
        %2793 = vmatpush1.msra.mxu0 %v2251
        %2794 = vmatprep.subr.mxu0 %v2236
        %2795 = vmatpush1.msra.mxu0 %v2235
        %2796 = vmatprep.subr.mxu0 %v2220
        %2797 = vmatpush1.msra.mxu0 %v2219
        %2798 = vmatprep.subr.mxu0 %v2204
        %2799 = vmatpush1.msra.mxu0 %v2203
        %2800 = vmatprep.subr.mxu0 %v2188
        %2801 = vmatpush1.msra.mxu0 %v2187
        %2802 = vmatprep.subr.mxu0 %v2684
        %2803 = vmatpush2.msra.mxu0 %v2683
        %2804 = vmatprep.subr.mxu0 %v2668
        %2805 = vmatpush2.msra.mxu0 %v2667
        %2806 = vmatprep.subr.mxu0 %v2652
        %2807 = vmatpush2.msra.mxu0 %v2651
        %2808 = vmatprep.subr.mxu0 %v2636
        %2809 = vmatpush2.msra.mxu0 %v2635
        %2810 = vmatprep.subr.mxu0 %v2620
        %2811 = vmatpush2.msra.mxu0 %v2619
        %2812 = vmatprep.subr.mxu0 %v2604
        %2813 = vmatpush2.msra.mxu0 %v2603
        %2814 = vmatprep.subr.mxu0 %v2588
        %2815 = vmatpush2.msra.mxu0 %v2587
        %2816 = vmatprep.subr.mxu0 %v2572
        %2817 = vmatpush2.msra.mxu0 %v2571
        %2818 = vmatprep.subr.mxu0 %v2556
        %2819 = vmatpush2.msra.mxu0 %v2555
        %2820 = vmatprep.subr.mxu0 %v2540
        %2821 = vmatpush2.msra.mxu0 %v2539
        %2822 = vmatprep.subr.mxu0 %v2524
        %2823 = vmatpush2.msra.mxu0 %v2523
        %2824 = vmatprep.subr.mxu0 %v2508
        %2825 = vmatpush2.msra.mxu0 %v2507
        %2826 = vmatprep.subr.mxu0 %v2492
        %2827 = vmatpush2.msra.mxu0 %v2491
        %2828 = vmatprep.subr.mxu0 %v2476
        %2829 = vmatpush2.msra.mxu0 %v2475
        %2830 = vmatprep.subr.mxu0 %v2460
        %2831 = vmatpush2.msra.mxu0 %v2459
        %2832 = vmatprep.subr.mxu0 %v2444
        %2833 = vmatpush2.msra.mxu0 %v2443
        %2834 = vmatprep.mubr.f32.mxu0 %v1674
        %2835 = vmatmul.mubr.f32.gmra.mxu0 %v1673
        %v2836 = vpop.f32.mrf.mxu0
        %v2837 = vadd.f32 %v2766, %v2836
        %v2838 = vpop.f32.mrf.mxu0
        %v2839 = vadd.f32 %v2768, %v2838
        %2840 = vdwg.mxu0
        %2841 = vmatprep.subr.mxu0 %v1918
        %2842 = vmatpush1.msra.mxu0 %v1917
        %2843 = vmatprep.subr.mxu0 %v1902
        %2844 = vmatpush1.msra.mxu0 %v1901
        %2845 = vmatprep.subr.mxu0 %v1886
        %2846 = vmatpush1.msra.mxu0 %v1885
        %2847 = vmatprep.subr.mxu0 %v1870
        %2848 = vmatpush1.msra.mxu0 %v1869
        %2849 = vmatprep.subr.mxu0 %v1854
        %2850 = vmatpush1.msra.mxu0 %v1853
        %2851 = vmatprep.subr.mxu0 %v1838
        %2852 = vmatpush1.msra.mxu0 %v1837
        %2853 = vmatprep.subr.mxu0 %v1822
        %2854 = vmatpush1.msra.mxu0 %v1821
        %2855 = vmatprep.subr.mxu0 %v1806
        %2856 = vmatpush1.msra.mxu0 %v1805
        %2857 = vmatprep.subr.mxu0 %v1790
        %2858 = vmatpush1.msra.mxu0 %v1789
        %2859 = vmatprep.subr.mxu0 %v1774
        %2860 = vmatpush1.msra.mxu0 %v1773
        %2861 = vmatprep.subr.mxu0 %v1758
        %2862 = vmatpush1.msra.mxu0 %v1757
        %2863 = vmatprep.subr.mxu0 %v1742
        %2864 = vmatpush1.msra.mxu0 %v1741
        %2865 = vmatprep.subr.mxu0 %v1726
        %2866 = vmatpush1.msra.mxu0 %v1725
        %2867 = vmatprep.subr.mxu0 %v1710
        %2868 = vmatpush1.msra.mxu0 %v1709
        %2869 = vmatprep.subr.mxu0 %v1694
        %2870 = vmatpush1.msra.mxu0 %v1693
        %2871 = vmatprep.subr.mxu0 %v1678
        %2872 = vmatpush1.msra.mxu0 %v1677
        %2873 = vmatprep.subr.mxu0 %v2174
        %2874 = vmatpush2.msra.mxu0 %v2173
        %2875 = vmatprep.subr.mxu0 %v2158
        %2876 = vmatpush2.msra.mxu0 %v2157
        %2877 = vmatprep.subr.mxu0 %v2142
        %2878 = vmatpush2.msra.mxu0 %v2141
        %2879 = vmatprep.subr.mxu0 %v2126
        %2880 = vmatpush2.msra.mxu0 %v2125
        %2881 = vmatprep.subr.mxu0 %v2110
        %2882 = vmatpush2.msra.mxu0 %v2109
        %2883 = vmatprep.subr.mxu0 %v2094
        %2884 = vmatpush2.msra.mxu0 %v2093
        %2885 = vmatprep.subr.mxu0 %v2078
        %2886 = vmatpush2.msra.mxu0 %v2077
        %2887 = vmatprep.subr.mxu0 %v2062
        %2888 = vmatpush2.msra.mxu0 %v2061
        %2889 = vmatprep.subr.mxu0 %v2046
        %2890 = vmatpush2.msra.mxu0 %v2045
        %2891 = vmatprep.subr.mxu0 %v2030
        %2892 = vmatpush2.msra.mxu0 %v2029
        %2893 = vmatprep.subr.mxu0 %v2014
        %2894 = vmatpush2.msra.mxu0 %v2013
        %2895 = vmatprep.subr.mxu0 %v1998
        %2896 = vmatpush2.msra.mxu0 %v1997
        %2897 = vmatprep.subr.mxu0 %v1982
        %2898 = vmatpush2.msra.mxu0 %v1981
        %2899 = vmatprep.subr.mxu0 %v1966
        %2900 = vmatpush2.msra.mxu0 %v1965
        %2901 = vmatprep.subr.mxu0 %v1950
        %2902 = vmatpush2.msra.mxu0 %v1949
        %2903 = vmatprep.subr.mxu0 %v1934
        %2904 = vmatpush2.msra.mxu0 %v1933
        %2905 = vmatprep.mubr.f32.mxu0 %v1672
        %2906 = vmatmul.mubr.f32.gmra.mxu0 %v1671
        %v2907 = vpop.f32.mrf.mxu0
        %v2908 = vadd.f32 0.0, %v2907
        %v2909 = vpop.f32.mrf.mxu0
        %v2910 = vadd.f32 0.0, %v2909
        %2911 = vdwg.mxu0
        %2912 = vmatprep.subr.mxu0 %v2430
        %2913 = vmatpush1.msra.mxu0 %v2429
        %2914 = vmatprep.subr.mxu0 %v2414
        %2915 = vmatpush1.msra.mxu0 %v2413
        %2916 = vmatprep.subr.mxu0 %v2398
        %2917 = vmatpush1.msra.mxu0 %v2397
        %2918 = vmatprep.subr.mxu0 %v2382
        %2919 = vmatpush1.msra.mxu0 %v2381
        %2920 = vmatprep.subr.mxu0 %v2366
        %2921 = vmatpush1.msra.mxu0 %v2365
        %2922 = vmatprep.subr.mxu0 %v2350
        %2923 = vmatpush1.msra.mxu0 %v2349
        %2924 = vmatprep.subr.mxu0 %v2334
        %2925 = vmatpush1.msra.mxu0 %v2333
        %2926 = vmatprep.subr.mxu0 %v2318
        %2927 = vmatpush1.msra.mxu0 %v2317
        %2928 = vmatprep.subr.mxu0 %v2302
        %2929 = vmatpush1.msra.mxu0 %v2301
        %2930 = vmatprep.subr.mxu0 %v2286
        %2931 = vmatpush1.msra.mxu0 %v2285
        %2932 = vmatprep.subr.mxu0 %v2270
        %2933 = vmatpush1.msra.mxu0 %v2269
        %2934 = vmatprep.subr.mxu0 %v2254
        %2935 = vmatpush1.msra.mxu0 %v2253
        %2936 = vmatprep.subr.mxu0 %v2238
        %2937 = vmatpush1.msra.mxu0 %v2237
        %2938 = vmatprep.subr.mxu0 %v2222
        %2939 = vmatpush1.msra.mxu0 %v2221
        %2940 = vmatprep.subr.mxu0 %v2206
        %2941 = vmatpush1.msra.mxu0 %v2205
        %2942 = vmatprep.subr.mxu0 %v2190
        %2943 = vmatpush1.msra.mxu0 %v2189
        %2944 = vmatprep.subr.mxu0 %v2686
        %2945 = vmatpush2.msra.mxu0 %v2685
        %2946 = vmatprep.subr.mxu0 %v2670
        %2947 = vmatpush2.msra.mxu0 %v2669
        %2948 = vmatprep.subr.mxu0 %v2654
        %2949 = vmatpush2.msra.mxu0 %v2653
        %2950 = vmatprep.subr.mxu0 %v2638
        %2951 = vmatpush2.msra.mxu0 %v2637
        %2952 = vmatprep.subr.mxu0 %v2622
        %2953 = vmatpush2.msra.mxu0 %v2621
        %2954 = vmatprep.subr.mxu0 %v2606
        %2955 = vmatpush2.msra.mxu0 %v2605
        %2956 = vmatprep.subr.mxu0 %v2590
        %2957 = vmatpush2.msra.mxu0 %v2589
        %2958 = vmatprep.subr.mxu0 %v2574
        %2959 = vmatpush2.msra.mxu0 %v2573
        %2960 = vmatprep.subr.mxu0 %v2558
        %2961 = vmatpush2.msra.mxu0 %v2557
        %2962 = vmatprep.subr.mxu0 %v2542
        %2963 = vmatpush2.msra.mxu0 %v2541
        %2964 = vmatprep.subr.mxu0 %v2526
        %2965 = vmatpush2.msra.mxu0 %v2525
        %2966 = vmatprep.subr.mxu0 %v2510
        %2967 = vmatpush2.msra.mxu0 %v2509
        %2968 = vmatprep.subr.mxu0 %v2494
        %2969 = vmatpush2.msra.mxu0 %v2493
        %2970 = vmatprep.subr.mxu0 %v2478
        %2971 = vmatpush2.msra.mxu0 %v2477
        %2972 = vmatprep.subr.mxu0 %v2462
        %2973 = vmatpush2.msra.mxu0 %v2461
        %2974 = vmatprep.subr.mxu0 %v2446
        %2975 = vmatpush2.msra.mxu0 %v2445
        %2976 = vmatprep.mubr.f32.mxu0 %v1674
        %2977 = vmatmul.mubr.f32.gmra.mxu0 %v1673
        %v2978 = vpop.f32.mrf.mxu0
        %v2979 = vadd.f32 %v2908, %v2978
        %v2980 = vpop.f32.mrf.mxu0
        %v2981 = vadd.f32 %v2910, %v2980
        %2982 = vdwg.mxu0
        %2983 = vmatprep.subr.mxu0 %v1920
        %2984 = vmatpush1.msra.mxu0 %v1919
        %2985 = vmatprep.subr.mxu0 %v1904
        %2986 = vmatpush1.msra.mxu0 %v1903
        %2987 = vmatprep.subr.mxu0 %v1888
        %2988 = vmatpush1.msra.mxu0 %v1887
        %2989 = vmatprep.subr.mxu0 %v1872
        %2990 = vmatpush1.msra.mxu0 %v1871
        %2991 = vmatprep.subr.mxu0 %v1856
        %2992 = vmatpush1.msra.mxu0 %v1855
        %2993 = vmatprep.subr.mxu0 %v1840
        %2994 = vmatpush1.msra.mxu0 %v1839
        %2995 = vmatprep.subr.mxu0 %v1824
        %2996 = vmatpush1.msra.mxu0 %v1823
        %2997 = vmatprep.subr.mxu0 %v1808
        %2998 = vmatpush1.msra.mxu0 %v1807
        %2999 = vmatprep.subr.mxu0 %v1792
        %3000 = vmatpush1.msra.mxu0 %v1791
        %3001 = vmatprep.subr.mxu0 %v1776
        %3002 = vmatpush1.msra.mxu0 %v1775
        %3003 = vmatprep.subr.mxu0 %v1760
        %3004 = vmatpush1.msra.mxu0 %v1759
        %3005 = vmatprep.subr.mxu0 %v1744
        %3006 = vmatpush1.msra.mxu0 %v1743
        %3007 = vmatprep.subr.mxu0 %v1728
        %3008 = vmatpush1.msra.mxu0 %v1727
        %3009 = vmatprep.subr.mxu0 %v1712
        %3010 = vmatpush1.msra.mxu0 %v1711
        %3011 = vmatprep.subr.mxu0 %v1696
        %3012 = vmatpush1.msra.mxu0 %v1695
        %3013 = vmatprep.subr.mxu0 %v1680
        %3014 = vmatpush1.msra.mxu0 %v1679
        %3015 = vmatprep.subr.mxu0 %v2176
        %3016 = vmatpush2.msra.mxu0 %v2175
        %3017 = vmatprep.subr.mxu0 %v2160
        %3018 = vmatpush2.msra.mxu0 %v2159
        %3019 = vmatprep.subr.mxu0 %v2144
        %3020 = vmatpush2.msra.mxu0 %v2143
        %3021 = vmatprep.subr.mxu0 %v2128
        %3022 = vmatpush2.msra.mxu0 %v2127
        %3023 = vmatprep.subr.mxu0 %v2112
        %3024 = vmatpush2.msra.mxu0 %v2111
        %3025 = vmatprep.subr.mxu0 %v2096
        %3026 = vmatpush2.msra.mxu0 %v2095
        %3027 = vmatprep.subr.mxu0 %v2080
        %3028 = vmatpush2.msra.mxu0 %v2079
        %3029 = vmatprep.subr.mxu0 %v2064
        %3030 = vmatpush2.msra.mxu0 %v2063
        %3031 = vmatprep.subr.mxu0 %v2048
        %3032 = vmatpush2.msra.mxu0 %v2047
        %3033 = vmatprep.subr.mxu0 %v2032
        %3034 = vmatpush2.msra.mxu0 %v2031
        %3035 = vmatprep.subr.mxu0 %v2016
        %3036 = vmatpush2.msra.mxu0 %v2015
        %3037 = vmatprep.subr.mxu0 %v2000
        %3038 = vmatpush2.msra.mxu0 %v1999
        %3039 = vmatprep.subr.mxu0 %v1984
        %3040 = vmatpush2.msra.mxu0 %v1983
        %3041 = vmatprep.subr.mxu0 %v1968
        %3042 = vmatpush2.msra.mxu0 %v1967
        %3043 = vmatprep.subr.mxu0 %v1952
        %3044 = vmatpush2.msra.mxu0 %v1951
        %3045 = vmatprep.subr.mxu0 %v1936
        %3046 = vmatpush2.msra.mxu0 %v1935
        %3047 = vmatprep.mubr.f32.mxu0 %v1672
        %3048 = vmatmul.mubr.f32.gmra.mxu0 %v1671
        %v3049 = vpop.f32.mrf.mxu0
        %v3050 = vadd.f32 0.0, %v3049
        %v3051 = vpop.f32.mrf.mxu0
        %v3052 = vadd.f32 0.0, %v3051
        %3053 = vdwg.mxu0
        %3054 = vmatprep.subr.mxu0 %v2432
        %3055 = vmatpush1.msra.mxu0 %v2431
        %3056 = vmatprep.subr.mxu0 %v2416
        %3057 = vmatpush1.msra.mxu0 %v2415
        %3058 = vmatprep.subr.mxu0 %v2400
        %3059 = vmatpush1.msra.mxu0 %v2399
        %3060 = vmatprep.subr.mxu0 %v2384
        %3061 = vmatpush1.msra.mxu0 %v2383
        %3062 = vmatprep.subr.mxu0 %v2368
        %3063 = vmatpush1.msra.mxu0 %v2367
        %3064 = vmatprep.subr.mxu0 %v2352
        %3065 = vmatpush1.msra.mxu0 %v2351
        %3066 = vmatprep.subr.mxu0 %v2336
        %3067 = vmatpush1.msra.mxu0 %v2335
        %3068 = vmatprep.subr.mxu0 %v2320
        %3069 = vmatpush1.msra.mxu0 %v2319
        %3070 = vmatprep.subr.mxu0 %v2304
        %3071 = vmatpush1.msra.mxu0 %v2303
        %3072 = vmatprep.subr.mxu0 %v2288
        %3073 = vmatpush1.msra.mxu0 %v2287
        %3074 = vmatprep.subr.mxu0 %v2272
        %3075 = vmatpush1.msra.mxu0 %v2271
        %3076 = vmatprep.subr.mxu0 %v2256
        %3077 = vmatpush1.msra.mxu0 %v2255
        %3078 = vmatprep.subr.mxu0 %v2240
        %3079 = vmatpush1.msra.mxu0 %v2239
        %3080 = vmatprep.subr.mxu0 %v2224
        %3081 = vmatpush1.msra.mxu0 %v2223
        %3082 = vmatprep.subr.mxu0 %v2208
        %3083 = vmatpush1.msra.mxu0 %v2207
        %3084 = vmatprep.subr.mxu0 %v2192
        %3085 = vmatpush1.msra.mxu0 %v2191
        %3086 = vmatprep.subr.mxu0 %v2688
        %3087 = vmatpush2.msra.mxu0 %v2687
        %3088 = vmatprep.subr.mxu0 %v2672
        %3089 = vmatpush2.msra.mxu0 %v2671
        %3090 = vmatprep.subr.mxu0 %v2656
        %3091 = vmatpush2.msra.mxu0 %v2655
        %3092 = vmatprep.subr.mxu0 %v2640
        %3093 = vmatpush2.msra.mxu0 %v2639
        %3094 = vmatprep.subr.mxu0 %v2624
        %3095 = vmatpush2.msra.mxu0 %v2623
        %3096 = vmatprep.subr.mxu0 %v2608
        %3097 = vmatpush2.msra.mxu0 %v2607
        %3098 = vmatprep.subr.mxu0 %v2592
        %3099 = vmatpush2.msra.mxu0 %v2591
        %3100 = vmatprep.subr.mxu0 %v2576
        %3101 = vmatpush2.msra.mxu0 %v2575
        %3102 = vmatprep.subr.mxu0 %v2560
        %3103 = vmatpush2.msra.mxu0 %v2559
        %3104 = vmatprep.subr.mxu0 %v2544
        %3105 = vmatpush2.msra.mxu0 %v2543
        %3106 = vmatprep.subr.mxu0 %v2528
        %3107 = vmatpush2.msra.mxu0 %v2527
        %3108 = vmatprep.subr.mxu0 %v2512
        %3109 = vmatpush2.msra.mxu0 %v2511
        %3110 = vmatprep.subr.mxu0 %v2496
        %3111 = vmatpush2.msra.mxu0 %v2495
        %3112 = vmatprep.subr.mxu0 %v2480
        %3113 = vmatpush2.msra.mxu0 %v2479
        %3114 = vmatprep.subr.mxu0 %v2464
        %3115 = vmatpush2.msra.mxu0 %v2463
        %3116 = vmatprep.subr.mxu0 %v2448
        %3117 = vmatpush2.msra.mxu0 %v2447
        %3118 = vmatprep.mubr.f32.mxu0 %v1674
        %3119 = vmatmul.mubr.f32.gmra.mxu0 %v1673
        %v3120 = vpop.f32.mrf.mxu0
        %v3121 = vadd.f32 %v3050, %v3120
        %v3122 = vpop.f32.mrf.mxu0
        %v3123 = vadd.f32 %v3052, %v3122
        %3124 = vdwg.mxu0
        %3125 = vmatprep.subr.mxu0 %v1922
        %3126 = vmatpush1.msra.mxu0 %v1921
        %3127 = vmatprep.subr.mxu0 %v1906
        %3128 = vmatpush1.msra.mxu0 %v1905
        %3129 = vmatprep.subr.mxu0 %v1890
        %3130 = vmatpush1.msra.mxu0 %v1889
        %3131 = vmatprep.subr.mxu0 %v1874
        %3132 = vmatpush1.msra.mxu0 %v1873
        %3133 = vmatprep.subr.mxu0 %v1858
        %3134 = vmatpush1.msra.mxu0 %v1857
        %3135 = vmatprep.subr.mxu0 %v1842
        %3136 = vmatpush1.msra.mxu0 %v1841
        %3137 = vmatprep.subr.mxu0 %v1826
        %3138 = vmatpush1.msra.mxu0 %v1825
        %3139 = vmatprep.subr.mxu0 %v1810
        %3140 = vmatpush1.msra.mxu0 %v1809
        %3141 = vmatprep.subr.mxu0 %v1794
        %3142 = vmatpush1.msra.mxu0 %v1793
        %3143 = vmatprep.subr.mxu0 %v1778
        %3144 = vmatpush1.msra.mxu0 %v1777
        %3145 = vmatprep.subr.mxu0 %v1762
        %3146 = vmatpush1.msra.mxu0 %v1761
        %3147 = vmatprep.subr.mxu0 %v1746
        %3148 = vmatpush1.msra.mxu0 %v1745
        %3149 = vmatprep.subr.mxu0 %v1730
        %3150 = vmatpush1.msra.mxu0 %v1729
        %3151 = vmatprep.subr.mxu0 %v1714
        %3152 = vmatpush1.msra.mxu0 %v1713
        %3153 = vmatprep.subr.mxu0 %v1698
        %3154 = vmatpush1.msra.mxu0 %v1697
        %3155 = vmatprep.subr.mxu0 %v1682
        %3156 = vmatpush1.msra.mxu0 %v1681
        %3157 = vmatprep.subr.mxu0 %v2178
        %3158 = vmatpush2.msra.mxu0 %v2177
        %3159 = vmatprep.subr.mxu0 %v2162
        %3160 = vmatpush2.msra.mxu0 %v2161
        %3161 = vmatprep.subr.mxu0 %v2146
        %3162 = vmatpush2.msra.mxu0 %v2145
        %3163 = vmatprep.subr.mxu0 %v2130
        %3164 = vmatpush2.msra.mxu0 %v2129
        %3165 = vmatprep.subr.mxu0 %v2114
        %3166 = vmatpush2.msra.mxu0 %v2113
        %3167 = vmatprep.subr.mxu0 %v2098
        %3168 = vmatpush2.msra.mxu0 %v2097
        %3169 = vmatprep.subr.mxu0 %v2082
        %3170 = vmatpush2.msra.mxu0 %v2081
        %3171 = vmatprep.subr.mxu0 %v2066
        %3172 = vmatpush2.msra.mxu0 %v2065
        %3173 = vmatprep.subr.mxu0 %v2050
        %3174 = vmatpush2.msra.mxu0 %v2049
        %3175 = vmatprep.subr.mxu0 %v2034
        %3176 = vmatpush2.msra.mxu0 %v2033
        %3177 = vmatprep.subr.mxu0 %v2018
        %3178 = vmatpush2.msra.mxu0 %v2017
        %3179 = vmatprep.subr.mxu0 %v2002
        %3180 = vmatpush2.msra.mxu0 %v2001
        %3181 = vmatprep.subr.mxu0 %v1986
        %3182 = vmatpush2.msra.mxu0 %v1985
        %3183 = vmatprep.subr.mxu0 %v1970
        %3184 = vmatpush2.msra.mxu0 %v1969
        %3185 = vmatprep.subr.mxu0 %v1954
        %3186 = vmatpush2.msra.mxu0 %v1953
        %3187 = vmatprep.subr.mxu0 %v1938
        %3188 = vmatpush2.msra.mxu0 %v1937
        %3189 = vmatprep.mubr.f32.mxu0 %v1672
        %3190 = vmatmul.mubr.f32.gmra.mxu0 %v1671
        %v3191 = vpop.f32.mrf.mxu0
        %v3192 = vadd.f32 0.0, %v3191
        %v3193 = vpop.f32.mrf.mxu0
        %v3194 = vadd.f32 0.0, %v3193
        %3195 = vdwg.mxu0
        %3196 = vmatprep.subr.mxu0 %v2434
        %3197 = vmatpush1.msra.mxu0 %v2433
        %3198 = vmatprep.subr.mxu0 %v2418
        %3199 = vmatpush1.msra.mxu0 %v2417
        %3200 = vmatprep.subr.mxu0 %v2402
        %3201 = vmatpush1.msra.mxu0 %v2401
        %3202 = vmatprep.subr.mxu0 %v2386
        %3203 = vmatpush1.msra.mxu0 %v2385
        %3204 = vmatprep.subr.mxu0 %v2370
        %3205 = vmatpush1.msra.mxu0 %v2369
        %3206 = vmatprep.subr.mxu0 %v2354
        %3207 = vmatpush1.msra.mxu0 %v2353
        %3208 = vmatprep.subr.mxu0 %v2338
        %3209 = vmatpush1.msra.mxu0 %v2337
        %3210 = vmatprep.subr.mxu0 %v2322
        %3211 = vmatpush1.msra.mxu0 %v2321
        %3212 = vmatprep.subr.mxu0 %v2306
        %3213 = vmatpush1.msra.mxu0 %v2305
        %3214 = vmatprep.subr.mxu0 %v2290
        %3215 = vmatpush1.msra.mxu0 %v2289
        %3216 = vmatprep.subr.mxu0 %v2274
        %3217 = vmatpush1.msra.mxu0 %v2273
        %3218 = vmatprep.subr.mxu0 %v2258
        %3219 = vmatpush1.msra.mxu0 %v2257
        %3220 = vmatprep.subr.mxu0 %v2242
        %3221 = vmatpush1.msra.mxu0 %v2241
        %3222 = vmatprep.subr.mxu0 %v2226
        %3223 = vmatpush1.msra.mxu0 %v2225
        %3224 = vmatprep.subr.mxu0 %v2210
        %3225 = vmatpush1.msra.mxu0 %v2209
        %3226 = vmatprep.subr.mxu0 %v2194
        %3227 = vmatpush1.msra.mxu0 %v2193
        %3228 = vmatprep.subr.mxu0 %v2690
        %3229 = vmatpush2.msra.mxu0 %v2689
        %3230 = vmatprep.subr.mxu0 %v2674
        %3231 = vmatpush2.msra.mxu0 %v2673
        %3232 = vmatprep.subr.mxu0 %v2658
        %3233 = vmatpush2.msra.mxu0 %v2657
        %3234 = vmatprep.subr.mxu0 %v2642
        %3235 = vmatpush2.msra.mxu0 %v2641
        %3236 = vmatprep.subr.mxu0 %v2626
        %3237 = vmatpush2.msra.mxu0 %v2625
        %3238 = vmatprep.subr.mxu0 %v2610
        %3239 = vmatpush2.msra.mxu0 %v2609
        %3240 = vmatprep.subr.mxu0 %v2594
        %3241 = vmatpush2.msra.mxu0 %v2593
        %3242 = vmatprep.subr.mxu0 %v2578
        %3243 = vmatpush2.msra.mxu0 %v2577
        %3244 = vmatprep.subr.mxu0 %v2562
        %3245 = vmatpush2.msra.mxu0 %v2561
        %3246 = vmatprep.subr.mxu0 %v2546
        %3247 = vmatpush2.msra.mxu0 %v2545
        %3248 = vmatprep.subr.mxu0 %v2530
        %3249 = vmatpush2.msra.mxu0 %v2529
        %3250 = vmatprep.subr.mxu0 %v2514
        %3251 = vmatpush2.msra.mxu0 %v2513
        %3252 = vmatprep.subr.mxu0 %v2498
        %3253 = vmatpush2.msra.mxu0 %v2497
        %3254 = vmatprep.subr.mxu0 %v2482
        %3255 = vmatpush2.msra.mxu0 %v2481
        %3256 = vmatprep.subr.mxu0 %v2466
        %3257 = vmatpush2.msra.mxu0 %v2465
        %3258 = vmatprep.subr.mxu0 %v2450
        %3259 = vmatpush2.msra.mxu0 %v2449
        %3260 = vmatprep.mubr.f32.mxu0 %v1674
        %3261 = vmatmul.mubr.f32.gmra.mxu0 %v1673
        %v3262 = vpop.f32.mrf.mxu0
        %v3263 = vadd.f32 %v3192, %v3262
        %v3264 = vpop.f32.mrf.mxu0
        %v3265 = vadd.f32 %v3194, %v3264
        %3266 = vdwg.mxu0
        %3267 = vmatprep.subr.mxu0 %v1924
        %3268 = vmatpush1.msra.mxu0 %v1923
        %3269 = vmatprep.subr.mxu0 %v1908
        %3270 = vmatpush1.msra.mxu0 %v1907
        %3271 = vmatprep.subr.mxu0 %v1892
        %3272 = vmatpush1.msra.mxu0 %v1891
        %3273 = vmatprep.subr.mxu0 %v1876
        %3274 = vmatpush1.msra.mxu0 %v1875
        %3275 = vmatprep.subr.mxu0 %v1860
        %3276 = vmatpush1.msra.mxu0 %v1859
        %3277 = vmatprep.subr.mxu0 %v1844
        %3278 = vmatpush1.msra.mxu0 %v1843
        %3279 = vmatprep.subr.mxu0 %v1828
        %3280 = vmatpush1.msra.mxu0 %v1827
        %3281 = vmatprep.subr.mxu0 %v1812
        %3282 = vmatpush1.msra.mxu0 %v1811
        %3283 = vmatprep.subr.mxu0 %v1796
        %3284 = vmatpush1.msra.mxu0 %v1795
        %3285 = vmatprep.subr.mxu0 %v1780
        %3286 = vmatpush1.msra.mxu0 %v1779
        %3287 = vmatprep.subr.mxu0 %v1764
        %3288 = vmatpush1.msra.mxu0 %v1763
        %3289 = vmatprep.subr.mxu0 %v1748
        %3290 = vmatpush1.msra.mxu0 %v1747
        %3291 = vmatprep.subr.mxu0 %v1732
        %3292 = vmatpush1.msra.mxu0 %v1731
        %3293 = vmatprep.subr.mxu0 %v1716
        %3294 = vmatpush1.msra.mxu0 %v1715
        %3295 = vmatprep.subr.mxu0 %v1700
        %3296 = vmatpush1.msra.mxu0 %v1699
        %3297 = vmatprep.subr.mxu0 %v1684
        %3298 = vmatpush1.msra.mxu0 %v1683
        %3299 = vmatprep.subr.mxu0 %v2180
        %3300 = vmatpush2.msra.mxu0 %v2179
        %3301 = vmatprep.subr.mxu0 %v2164
        %3302 = vmatpush2.msra.mxu0 %v2163
        %3303 = vmatprep.subr.mxu0 %v2148
        %3304 = vmatpush2.msra.mxu0 %v2147
        %3305 = vmatprep.subr.mxu0 %v2132
        %3306 = vmatpush2.msra.mxu0 %v2131
        %3307 = vmatprep.subr.mxu0 %v2116
        %3308 = vmatpush2.msra.mxu0 %v2115
        %3309 = vmatprep.subr.mxu0 %v2100
        %3310 = vmatpush2.msra.mxu0 %v2099
        %3311 = vmatprep.subr.mxu0 %v2084
        %3312 = vmatpush2.msra.mxu0 %v2083
        %3313 = vmatprep.subr.mxu0 %v2068
        %3314 = vmatpush2.msra.mxu0 %v2067
        %3315 = vmatprep.subr.mxu0 %v2052
        %3316 = vmatpush2.msra.mxu0 %v2051
        %3317 = vmatprep.subr.mxu0 %v2036
        %3318 = vmatpush2.msra.mxu0 %v2035
        %3319 = vmatprep.subr.mxu0 %v2020
        %3320 = vmatpush2.msra.mxu0 %v2019
        %3321 = vmatprep.subr.mxu0 %v2004
        %3322 = vmatpush2.msra.mxu0 %v2003
        %3323 = vmatprep.subr.mxu0 %v1988
        %3324 = vmatpush2.msra.mxu0 %v1987
        %3325 = vmatprep.subr.mxu0 %v1972
        %3326 = vmatpush2.msra.mxu0 %v1971
        %3327 = vmatprep.subr.mxu0 %v1956
        %3328 = vmatpush2.msra.mxu0 %v1955
        %3329 = vmatprep.subr.mxu0 %v1940
        %3330 = vmatpush2.msra.mxu0 %v1939
        %3331 = vmatprep.mubr.f32.mxu0 %v1672
        %3332 = vmatmul.mubr.f32.gmra.mxu0 %v1671
        %v3333 = vpop.f32.mrf.mxu0
        %v3334 = vadd.f32 0.0, %v3333
        %v3335 = vpop.f32.mrf.mxu0
        %v3336 = vadd.f32 0.0, %v3335
        %3337 = vdwg.mxu0
        %3338 = vmatprep.subr.mxu0 %v2436
        %3339 = vmatpush1.msra.mxu0 %v2435
        %3340 = vmatprep.subr.mxu0 %v2420
        %3341 = vmatpush1.msra.mxu0 %v2419
        %3342 = vmatprep.subr.mxu0 %v2404
        %3343 = vmatpush1.msra.mxu0 %v2403
        %3344 = vmatprep.subr.mxu0 %v2388
        %3345 = vmatpush1.msra.mxu0 %v2387
        %3346 = vmatprep.subr.mxu0 %v2372
        %3347 = vmatpush1.msra.mxu0 %v2371
        %3348 = vmatprep.subr.mxu0 %v2356
        %3349 = vmatpush1.msra.mxu0 %v2355
        %3350 = vmatprep.subr.mxu0 %v2340
        %3351 = vmatpush1.msra.mxu0 %v2339
        %3352 = vmatprep.subr.mxu0 %v2324
        %3353 = vmatpush1.msra.mxu0 %v2323
        %3354 = vmatprep.subr.mxu0 %v2308
        %3355 = vmatpush1.msra.mxu0 %v2307
        %3356 = vmatprep.subr.mxu0 %v2292
        %3357 = vmatpush1.msra.mxu0 %v2291
        %3358 = vmatprep.subr.mxu0 %v2276
        %3359 = vmatpush1.msra.mxu0 %v2275
        %3360 = vmatprep.subr.mxu0 %v2260
        %3361 = vmatpush1.msra.mxu0 %v2259
        %3362 = vmatprep.subr.mxu0 %v2244
        %3363 = vmatpush1.msra.mxu0 %v2243
        %3364 = vmatprep.subr.mxu0 %v2228
        %3365 = vmatpush1.msra.mxu0 %v2227
        %3366 = vmatprep.subr.mxu0 %v2212
        %3367 = vmatpush1.msra.mxu0 %v2211
        %3368 = vmatprep.subr.mxu0 %v2196
        %3369 = vmatpush1.msra.mxu0 %v2195
        %3370 = vmatprep.subr.mxu0 %v2692
        %3371 = vmatpush2.msra.mxu0 %v2691
        %3372 = vmatprep.subr.mxu0 %v2676
        %3373 = vmatpush2.msra.mxu0 %v2675
        %3374 = vmatprep.subr.mxu0 %v2660
        %3375 = vmatpush2.msra.mxu0 %v2659
        %3376 = vmatprep.subr.mxu0 %v2644
        %3377 = vmatpush2.msra.mxu0 %v2643
        %3378 = vmatprep.subr.mxu0 %v2628
        %3379 = vmatpush2.msra.mxu0 %v2627
        %3380 = vmatprep.subr.mxu0 %v2612
        %3381 = vmatpush2.msra.mxu0 %v2611
        %3382 = vmatprep.subr.mxu0 %v2596
        %3383 = vmatpush2.msra.mxu0 %v2595
        %3384 = vmatprep.subr.mxu0 %v2580
        %3385 = vmatpush2.msra.mxu0 %v2579
        %3386 = vmatprep.subr.mxu0 %v2564
        %3387 = vmatpush2.msra.mxu0 %v2563
        %3388 = vmatprep.subr.mxu0 %v2548
        %3389 = vmatpush2.msra.mxu0 %v2547
        %3390 = vmatprep.subr.mxu0 %v2532
        %3391 = vmatpush2.msra.mxu0 %v2531
        %3392 = vmatprep.subr.mxu0 %v2516
        %3393 = vmatpush2.msra.mxu0 %v2515
        %3394 = vmatprep.subr.mxu0 %v2500
        %3395 = vmatpush2.msra.mxu0 %v2499
        %3396 = vmatprep.subr.mxu0 %v2484
        %3397 = vmatpush2.msra.mxu0 %v2483
        %3398 = vmatprep.subr.mxu0 %v2468
        %3399 = vmatpush2.msra.mxu0 %v2467
        %3400 = vmatprep.subr.mxu0 %v2452
        %3401 = vmatpush2.msra.mxu0 %v2451
        %3402 = vmatprep.mubr.f32.mxu0 %v1674
        %3403 = vmatmul.mubr.f32.gmra.mxu0 %v1673
        %v3404 = vpop.f32.mrf.mxu0
        %v3405 = vadd.f32 %v3334, %v3404
        %v3406 = vpop.f32.mrf.mxu0
        %v3407 = vadd.f32 %v3336, %v3406
        %3408 = vdwg.mxu0
        %3409 = vmatprep.subr.mxu0 %v1926
        %3410 = vmatpush1.msra.mxu0 %v1925
        %3411 = vmatprep.subr.mxu0 %v1910
        %3412 = vmatpush1.msra.mxu0 %v1909
        %3413 = vmatprep.subr.mxu0 %v1894
        %3414 = vmatpush1.msra.mxu0 %v1893
        %3415 = vmatprep.subr.mxu0 %v1878
        %3416 = vmatpush1.msra.mxu0 %v1877
        %3417 = vmatprep.subr.mxu0 %v1862
        %3418 = vmatpush1.msra.mxu0 %v1861
        %3419 = vmatprep.subr.mxu0 %v1846
        %3420 = vmatpush1.msra.mxu0 %v1845
        %3421 = vmatprep.subr.mxu0 %v1830
        %3422 = vmatpush1.msra.mxu0 %v1829
        %3423 = vmatprep.subr.mxu0 %v1814
        %3424 = vmatpush1.msra.mxu0 %v1813
        %3425 = vmatprep.subr.mxu0 %v1798
        %3426 = vmatpush1.msra.mxu0 %v1797
        %3427 = vmatprep.subr.mxu0 %v1782
        %3428 = vmatpush1.msra.mxu0 %v1781
        %3429 = vmatprep.subr.mxu0 %v1766
        %3430 = vmatpush1.msra.mxu0 %v1765
        %3431 = vmatprep.subr.mxu0 %v1750
        %3432 = vmatpush1.msra.mxu0 %v1749
        %3433 = vmatprep.subr.mxu0 %v1734
        %3434 = vmatpush1.msra.mxu0 %v1733
        %3435 = vmatprep.subr.mxu0 %v1718
        %3436 = vmatpush1.msra.mxu0 %v1717
        %3437 = vmatprep.subr.mxu0 %v1702
        %3438 = vmatpush1.msra.mxu0 %v1701
        %3439 = vmatprep.subr.mxu0 %v1686
        %3440 = vmatpush1.msra.mxu0 %v1685
        %3441 = vmatprep.subr.mxu0 %v2182
        %3442 = vmatpush2.msra.mxu0 %v2181
        %3443 = vmatprep.subr.mxu0 %v2166
        %3444 = vmatpush2.msra.mxu0 %v2165
        %3445 = vmatprep.subr.mxu0 %v2150
        %3446 = vmatpush2.msra.mxu0 %v2149
        %3447 = vmatprep.subr.mxu0 %v2134
        %3448 = vmatpush2.msra.mxu0 %v2133
        %3449 = vmatprep.subr.mxu0 %v2118
        %3450 = vmatpush2.msra.mxu0 %v2117
        %3451 = vmatprep.subr.mxu0 %v2102
        %3452 = vmatpush2.msra.mxu0 %v2101
        %3453 = vmatprep.subr.mxu0 %v2086
        %3454 = vmatpush2.msra.mxu0 %v2085
        %3455 = vmatprep.subr.mxu0 %v2070
        %3456 = vmatpush2.msra.mxu0 %v2069
        %3457 = vmatprep.subr.mxu0 %v2054
        %3458 = vmatpush2.msra.mxu0 %v2053
        %3459 = vmatprep.subr.mxu0 %v2038
        %3460 = vmatpush2.msra.mxu0 %v2037
        %3461 = vmatprep.subr.mxu0 %v2022
        %3462 = vmatpush2.msra.mxu0 %v2021
        %3463 = vmatprep.subr.mxu0 %v2006
        %3464 = vmatpush2.msra.mxu0 %v2005
        %3465 = vmatprep.subr.mxu0 %v1990
        %3466 = vmatpush2.msra.mxu0 %v1989
        %3467 = vmatprep.subr.mxu0 %v1974
        %3468 = vmatpush2.msra.mxu0 %v1973
        %3469 = vmatprep.subr.mxu0 %v1958
        %3470 = vmatpush2.msra.mxu0 %v1957
        %3471 = vmatprep.subr.mxu0 %v1942
        %3472 = vmatpush2.msra.mxu0 %v1941
        %3473 = vmatprep.mubr.f32.mxu0 %v1672
        %3474 = vmatmul.mubr.f32.gmra.mxu0 %v1671
        %v3475 = vpop.f32.mrf.mxu0
        %v3476 = vadd.f32 0.0, %v3475
        %v3477 = vpop.f32.mrf.mxu0
        %v3478 = vadd.f32 0.0, %v3477
        %3479 = vdwg.mxu0
        %3480 = vmatprep.subr.mxu0 %v2438
        %3481 = vmatpush1.msra.mxu0 %v2437
        %3482 = vmatprep.subr.mxu0 %v2422
        %3483 = vmatpush1.msra.mxu0 %v2421
        %3484 = vmatprep.subr.mxu0 %v2406
        %3485 = vmatpush1.msra.mxu0 %v2405
        %3486 = vmatprep.subr.mxu0 %v2390
        %3487 = vmatpush1.msra.mxu0 %v2389
        %3488 = vmatprep.subr.mxu0 %v2374
        %3489 = vmatpush1.msra.mxu0 %v2373
        %3490 = vmatprep.subr.mxu0 %v2358
        %3491 = vmatpush1.msra.mxu0 %v2357
        %3492 = vmatprep.subr.mxu0 %v2342
        %3493 = vmatpush1.msra.mxu0 %v2341
        %3494 = vmatprep.subr.mxu0 %v2326
        %3495 = vmatpush1.msra.mxu0 %v2325
        %3496 = vmatprep.subr.mxu0 %v2310
        %3497 = vmatpush1.msra.mxu0 %v2309
        %3498 = vmatprep.subr.mxu0 %v2294
        %3499 = vmatpush1.msra.mxu0 %v2293
        %3500 = vmatprep.subr.mxu0 %v2278
        %3501 = vmatpush1.msra.mxu0 %v2277
        %3502 = vmatprep.subr.mxu0 %v2262
        %3503 = vmatpush1.msra.mxu0 %v2261
        %3504 = vmatprep.subr.mxu0 %v2246
        %3505 = vmatpush1.msra.mxu0 %v2245
        %3506 = vmatprep.subr.mxu0 %v2230
        %3507 = vmatpush1.msra.mxu0 %v2229
        %3508 = vmatprep.subr.mxu0 %v2214
        %3509 = vmatpush1.msra.mxu0 %v2213
        %3510 = vmatprep.subr.mxu0 %v2198
        %3511 = vmatpush1.msra.mxu0 %v2197
        %3512 = vmatprep.subr.mxu0 %v2694
        %3513 = vmatpush2.msra.mxu0 %v2693
        %3514 = vmatprep.subr.mxu0 %v2678
        %3515 = vmatpush2.msra.mxu0 %v2677
        %3516 = vmatprep.subr.mxu0 %v2662
        %3517 = vmatpush2.msra.mxu0 %v2661
        %3518 = vmatprep.subr.mxu0 %v2646
        %3519 = vmatpush2.msra.mxu0 %v2645
        %3520 = vmatprep.subr.mxu0 %v2630
        %3521 = vmatpush2.msra.mxu0 %v2629
        %3522 = vmatprep.subr.mxu0 %v2614
        %3523 = vmatpush2.msra.mxu0 %v2613
        %3524 = vmatprep.subr.mxu0 %v2598
        %3525 = vmatpush2.msra.mxu0 %v2597
        %3526 = vmatprep.subr.mxu0 %v2582
        %3527 = vmatpush2.msra.mxu0 %v2581
        %3528 = vmatprep.subr.mxu0 %v2566
        %3529 = vmatpush2.msra.mxu0 %v2565
        %3530 = vmatprep.subr.mxu0 %v2550
        %3531 = vmatpush2.msra.mxu0 %v2549
        %3532 = vmatprep.subr.mxu0 %v2534
        %3533 = vmatpush2.msra.mxu0 %v2533
        %3534 = vmatprep.subr.mxu0 %v2518
        %3535 = vmatpush2.msra.mxu0 %v2517
        %3536 = vmatprep.subr.mxu0 %v2502
        %3537 = vmatpush2.msra.mxu0 %v2501
        %3538 = vmatprep.subr.mxu0 %v2486
        %3539 = vmatpush2.msra.mxu0 %v2485
        %3540 = vmatprep.subr.mxu0 %v2470
        %3541 = vmatpush2.msra.mxu0 %v2469
        %3542 = vmatprep.subr.mxu0 %v2454
        %3543 = vmatpush2.msra.mxu0 %v2453
        %3544 = vmatprep.mubr.f32.mxu0 %v1674
        %3545 = vmatmul.mubr.f32.gmra.mxu0 %v1673
        %v3546 = vpop.f32.mrf.mxu0
        %v3547 = vadd.f32 %v3476, %v3546
        %v3548 = vpop.f32.mrf.mxu0
        %v3549 = vadd.f32 %v3478, %v3548
        %3550 = vdwg.mxu0
        %3551 = vmatprep.subr.mxu0 %v1928
        %3552 = vmatpush1.msra.mxu0 %v1927
        %3553 = vmatprep.subr.mxu0 %v1912
        %3554 = vmatpush1.msra.mxu0 %v1911
        %3555 = vmatprep.subr.mxu0 %v1896
        %3556 = vmatpush1.msra.mxu0 %v1895
        %3557 = vmatprep.subr.mxu0 %v1880
        %3558 = vmatpush1.msra.mxu0 %v1879
        %3559 = vmatprep.subr.mxu0 %v1864
        %3560 = vmatpush1.msra.mxu0 %v1863
        %3561 = vmatprep.subr.mxu0 %v1848
        %3562 = vmatpush1.msra.mxu0 %v1847
        %3563 = vmatprep.subr.mxu0 %v1832
        %3564 = vmatpush1.msra.mxu0 %v1831
        %3565 = vmatprep.subr.mxu0 %v1816
        %3566 = vmatpush1.msra.mxu0 %v1815
        %3567 = vmatprep.subr.mxu0 %v1800
        %3568 = vmatpush1.msra.mxu0 %v1799
        %3569 = vmatprep.subr.mxu0 %v1784
        %3570 = vmatpush1.msra.mxu0 %v1783
        %3571 = vmatprep.subr.mxu0 %v1768
        %3572 = vmatpush1.msra.mxu0 %v1767
        %3573 = vmatprep.subr.mxu0 %v1752
        %3574 = vmatpush1.msra.mxu0 %v1751
        %3575 = vmatprep.subr.mxu0 %v1736
        %3576 = vmatpush1.msra.mxu0 %v1735
        %3577 = vmatprep.subr.mxu0 %v1720
        %3578 = vmatpush1.msra.mxu0 %v1719
        %3579 = vmatprep.subr.mxu0 %v1704
        %3580 = vmatpush1.msra.mxu0 %v1703
        %3581 = vmatprep.subr.mxu0 %v1688
        %3582 = vmatpush1.msra.mxu0 %v1687
        %3583 = vmatprep.subr.mxu0 %v2184
        %3584 = vmatpush2.msra.mxu0 %v2183
        %3585 = vmatprep.subr.mxu0 %v2168
        %3586 = vmatpush2.msra.mxu0 %v2167
        %3587 = vmatprep.subr.mxu0 %v2152
        %3588 = vmatpush2.msra.mxu0 %v2151
        %3589 = vmatprep.subr.mxu0 %v2136
        %3590 = vmatpush2.msra.mxu0 %v2135
        %3591 = vmatprep.subr.mxu0 %v2120
        %3592 = vmatpush2.msra.mxu0 %v2119
        %3593 = vmatprep.subr.mxu0 %v2104
        %3594 = vmatpush2.msra.mxu0 %v2103
        %3595 = vmatprep.subr.mxu0 %v2088
        %3596 = vmatpush2.msra.mxu0 %v2087
        %3597 = vmatprep.subr.mxu0 %v2072
        %3598 = vmatpush2.msra.mxu0 %v2071
        %3599 = vmatprep.subr.mxu0 %v2056
        %3600 = vmatpush2.msra.mxu0 %v2055
        %3601 = vmatprep.subr.mxu0 %v2040
        %3602 = vmatpush2.msra.mxu0 %v2039
        %3603 = vmatprep.subr.mxu0 %v2024
        %3604 = vmatpush2.msra.mxu0 %v2023
        %3605 = vmatprep.subr.mxu0 %v2008
        %3606 = vmatpush2.msra.mxu0 %v2007
        %3607 = vmatprep.subr.mxu0 %v1992
        %3608 = vmatpush2.msra.mxu0 %v1991
        %3609 = vmatprep.subr.mxu0 %v1976
        %3610 = vmatpush2.msra.mxu0 %v1975
        %3611 = vmatprep.subr.mxu0 %v1960
        %3612 = vmatpush2.msra.mxu0 %v1959
        %3613 = vmatprep.subr.mxu0 %v1944
        %3614 = vmatpush2.msra.mxu0 %v1943
        %3615 = vmatprep.mubr.f32.mxu0 %v1672
        %3616 = vmatmul.mubr.f32.gmra.mxu0 %v1671
        %v3617 = vpop.f32.mrf.mxu0
        %v3618 = vadd.f32 0.0, %v3617
        %v3619 = vpop.f32.mrf.mxu0
        %v3620 = vadd.f32 0.0, %v3619
        %3621 = vdwg.mxu0
        %3622 = vmatprep.subr.mxu0 %v2440
        %3623 = vmatpush1.msra.mxu0 %v2439
        %3624 = vmatprep.subr.mxu0 %v2424
        %3625 = vmatpush1.msra.mxu0 %v2423
        %3626 = vmatprep.subr.mxu0 %v2408
        %3627 = vmatpush1.msra.mxu0 %v2407
        %3628 = vmatprep.subr.mxu0 %v2392
        %3629 = vmatpush1.msra.mxu0 %v2391
        %3630 = vmatprep.subr.mxu0 %v2376
        %3631 = vmatpush1.msra.mxu0 %v2375
        %3632 = vmatprep.subr.mxu0 %v2360
        %3633 = vmatpush1.msra.mxu0 %v2359
        %3634 = vmatprep.subr.mxu0 %v2344
        %3635 = vmatpush1.msra.mxu0 %v2343
        %3636 = vmatprep.subr.mxu0 %v2328
        %3637 = vmatpush1.msra.mxu0 %v2327
        %3638 = vmatprep.subr.mxu0 %v2312
        %3639 = vmatpush1.msra.mxu0 %v2311
        %3640 = vmatprep.subr.mxu0 %v2296
        %3641 = vmatpush1.msra.mxu0 %v2295
        %3642 = vmatprep.subr.mxu0 %v2280
        %3643 = vmatpush1.msra.mxu0 %v2279
        %3644 = vmatprep.subr.mxu0 %v2264
        %3645 = vmatpush1.msra.mxu0 %v2263
        %3646 = vmatprep.subr.mxu0 %v2248
        %3647 = vmatpush1.msra.mxu0 %v2247
        %3648 = vmatprep.subr.mxu0 %v2232
        %3649 = vmatpush1.msra.mxu0 %v2231
        %3650 = vmatprep.subr.mxu0 %v2216
        %3651 = vmatpush1.msra.mxu0 %v2215
        %3652 = vmatprep.subr.mxu0 %v2200
        %3653 = vmatpush1.msra.mxu0 %v2199
        %3654 = vmatprep.subr.mxu0 %v2696
        %3655 = vmatpush2.msra.mxu0 %v2695
        %3656 = vmatprep.subr.mxu0 %v2680
        %3657 = vmatpush2.msra.mxu0 %v2679
        %3658 = vmatprep.subr.mxu0 %v2664
        %3659 = vmatpush2.msra.mxu0 %v2663
        %3660 = vmatprep.subr.mxu0 %v2648
        %3661 = vmatpush2.msra.mxu0 %v2647
        %3662 = vmatprep.subr.mxu0 %v2632
        %3663 = vmatpush2.msra.mxu0 %v2631
        %3664 = vmatprep.subr.mxu0 %v2616
        %3665 = vmatpush2.msra.mxu0 %v2615
        %3666 = vmatprep.subr.mxu0 %v2600
        %3667 = vmatpush2.msra.mxu0 %v2599
        %3668 = vmatprep.subr.mxu0 %v2584
        %3669 = vmatpush2.msra.mxu0 %v2583
        %3670 = vmatprep.subr.mxu0 %v2568
        %3671 = vmatpush2.msra.mxu0 %v2567
        %3672 = vmatprep.subr.mxu0 %v2552
        %3673 = vmatpush2.msra.mxu0 %v2551
        %3674 = vmatprep.subr.mxu0 %v2536
        %3675 = vmatpush2.msra.mxu0 %v2535
        %3676 = vmatprep.subr.mxu0 %v2520
        %3677 = vmatpush2.msra.mxu0 %v2519
        %3678 = vmatprep.subr.mxu0 %v2504
        %3679 = vmatpush2.msra.mxu0 %v2503
        %3680 = vmatprep.subr.mxu0 %v2488
        %3681 = vmatpush2.msra.mxu0 %v2487
        %3682 = vmatprep.subr.mxu0 %v2472
        %3683 = vmatpush2.msra.mxu0 %v2471
        %3684 = vmatprep.subr.mxu0 %v2456
        %3685 = vmatpush2.msra.mxu0 %v2455
        %3686 = vmatprep.mubr.f32.mxu0 %v1674
        %3687 = vmatmul.mubr.f32.gmra.mxu0 %v1673
        %v3688 = vpop.f32.mrf.mxu0
        %v3689 = vadd.f32 %v3618, %v3688
        %v3690 = vpop.f32.mrf.mxu0
        %v3691 = vadd.f32 %v3620, %v3690
        %3692 = vdwg.mxu0
        %3693 = vmatprep.subr.mxu0 %v1930
        %3694 = vmatpush1.msra.mxu0 %v1929
        %3695 = vmatprep.subr.mxu0 %v1914
        %3696 = vmatpush1.msra.mxu0 %v1913
        %3697 = vmatprep.subr.mxu0 %v1898
        %3698 = vmatpush1.msra.mxu0 %v1897
        %3699 = vmatprep.subr.mxu0 %v1882
        %3700 = vmatpush1.msra.mxu0 %v1881
        %3701 = vmatprep.subr.mxu0 %v1866
        %3702 = vmatpush1.msra.mxu0 %v1865
        %3703 = vmatprep.subr.mxu0 %v1850
        %3704 = vmatpush1.msra.mxu0 %v1849
        %3705 = vmatprep.subr.mxu0 %v1834
        %3706 = vmatpush1.msra.mxu0 %v1833
        %3707 = vmatprep.subr.mxu0 %v1818
        %3708 = vmatpush1.msra.mxu0 %v1817
        %3709 = vmatprep.subr.mxu0 %v1802
        %3710 = vmatpush1.msra.mxu0 %v1801
        %3711 = vmatprep.subr.mxu0 %v1786
        %3712 = vmatpush1.msra.mxu0 %v1785
        %3713 = vmatprep.subr.mxu0 %v1770
        %3714 = vmatpush1.msra.mxu0 %v1769
        %3715 = vmatprep.subr.mxu0 %v1754
        %3716 = vmatpush1.msra.mxu0 %v1753
        %3717 = vmatprep.subr.mxu0 %v1738
        %3718 = vmatpush1.msra.mxu0 %v1737
        %3719 = vmatprep.subr.mxu0 %v1722
        %3720 = vmatpush1.msra.mxu0 %v1721
        %3721 = vmatprep.subr.mxu0 %v1706
        %3722 = vmatpush1.msra.mxu0 %v1705
        %3723 = vmatprep.subr.mxu0 %v1690
        %3724 = vmatpush1.msra.mxu0 %v1689
        %3725 = vmatprep.subr.mxu0 %v2186
        %3726 = vmatpush2.msra.mxu0 %v2185
        %3727 = vmatprep.subr.mxu0 %v2170
        %3728 = vmatpush2.msra.mxu0 %v2169
        %3729 = vmatprep.subr.mxu0 %v2154
        %3730 = vmatpush2.msra.mxu0 %v2153
        %3731 = vmatprep.subr.mxu0 %v2138
        %3732 = vmatpush2.msra.mxu0 %v2137
        %3733 = vmatprep.subr.mxu0 %v2122
        %3734 = vmatpush2.msra.mxu0 %v2121
        %3735 = vmatprep.subr.mxu0 %v2106
        %3736 = vmatpush2.msra.mxu0 %v2105
        %3737 = vmatprep.subr.mxu0 %v2090
        %3738 = vmatpush2.msra.mxu0 %v2089
        %3739 = vmatprep.subr.mxu0 %v2074
        %3740 = vmatpush2.msra.mxu0 %v2073
        %3741 = vmatprep.subr.mxu0 %v2058
        %3742 = vmatpush2.msra.mxu0 %v2057
        %3743 = vmatprep.subr.mxu0 %v2042
        %3744 = vmatpush2.msra.mxu0 %v2041
        %3745 = vmatprep.subr.mxu0 %v2026
        %3746 = vmatpush2.msra.mxu0 %v2025
        %3747 = vmatprep.subr.mxu0 %v2010
        %3748 = vmatpush2.msra.mxu0 %v2009
        %3749 = vmatprep.subr.mxu0 %v1994
        %3750 = vmatpush2.msra.mxu0 %v1993
        %3751 = vmatprep.subr.mxu0 %v1978
        %3752 = vmatpush2.msra.mxu0 %v1977
        %3753 = vmatprep.subr.mxu0 %v1962
        %3754 = vmatpush2.msra.mxu0 %v1961
        %3755 = vmatprep.subr.mxu0 %v1946
        %3756 = vmatpush2.msra.mxu0 %v1945
        %3757 = vmatprep.mubr.f32.mxu0 %v1672
        %3758 = vmatmul.mubr.f32.gmra.mxu0 %v1671
        %v3759 = vpop.f32.mrf.mxu0
        %v3760 = vadd.f32 0.0, %v3759
        %v3761 = vpop.f32.mrf.mxu0
        %v3762 = vadd.f32 0.0, %v3761
        %3763 = vdwg.mxu0
        %3764 = vmatprep.subr.mxu0 %v2442
        %3765 = vmatpush1.msra.mxu0 %v2441
        %3766 = vmatprep.subr.mxu0 %v2426
        %3767 = vmatpush1.msra.mxu0 %v2425
        %3768 = vmatprep.subr.mxu0 %v2410
        %3769 = vmatpush1.msra.mxu0 %v2409
        %3770 = vmatprep.subr.mxu0 %v2394
        %3771 = vmatpush1.msra.mxu0 %v2393
        %3772 = vmatprep.subr.mxu0 %v2378
        %3773 = vmatpush1.msra.mxu0 %v2377
        %3774 = vmatprep.subr.mxu0 %v2362
        %3775 = vmatpush1.msra.mxu0 %v2361
        %3776 = vmatprep.subr.mxu0 %v2346
        %3777 = vmatpush1.msra.mxu0 %v2345
        %3778 = vmatprep.subr.mxu0 %v2330
        %3779 = vmatpush1.msra.mxu0 %v2329
        %3780 = vmatprep.subr.mxu0 %v2314
        %3781 = vmatpush1.msra.mxu0 %v2313
        %3782 = vmatprep.subr.mxu0 %v2298
        %3783 = vmatpush1.msra.mxu0 %v2297
        %3784 = vmatprep.subr.mxu0 %v2282
        %3785 = vmatpush1.msra.mxu0 %v2281
        %3786 = vmatprep.subr.mxu0 %v2266
        %3787 = vmatpush1.msra.mxu0 %v2265
        %3788 = vmatprep.subr.mxu0 %v2250
        %3789 = vmatpush1.msra.mxu0 %v2249
        %3790 = vmatprep.subr.mxu0 %v2234
        %3791 = vmatpush1.msra.mxu0 %v2233
        %3792 = vmatprep.subr.mxu0 %v2218
        %3793 = vmatpush1.msra.mxu0 %v2217
        %3794 = vmatprep.subr.mxu0 %v2202
        %3795 = vmatpush1.msra.mxu0 %v2201
        %3796 = vmatprep.subr.mxu0 %v2698
        %3797 = vmatpush2.msra.mxu0 %v2697
        %3798 = vmatprep.subr.mxu0 %v2682
        %3799 = vmatpush2.msra.mxu0 %v2681
        %3800 = vmatprep.subr.mxu0 %v2666
        %3801 = vmatpush2.msra.mxu0 %v2665
        %3802 = vmatprep.subr.mxu0 %v2650
        %3803 = vmatpush2.msra.mxu0 %v2649
        %3804 = vmatprep.subr.mxu0 %v2634
        %3805 = vmatpush2.msra.mxu0 %v2633
        %3806 = vmatprep.subr.mxu0 %v2618
        %3807 = vmatpush2.msra.mxu0 %v2617
        %3808 = vmatprep.subr.mxu0 %v2602
        %3809 = vmatpush2.msra.mxu0 %v2601
        %3810 = vmatprep.subr.mxu0 %v2586
        %3811 = vmatpush2.msra.mxu0 %v2585
        %3812 = vmatprep.subr.mxu0 %v2570
        %3813 = vmatpush2.msra.mxu0 %v2569
        %3814 = vmatprep.subr.mxu0 %v2554
        %3815 = vmatpush2.msra.mxu0 %v2553
        %3816 = vmatprep.subr.mxu0 %v2538
        %3817 = vmatpush2.msra.mxu0 %v2537
        %3818 = vmatprep.subr.mxu0 %v2522
        %3819 = vmatpush2.msra.mxu0 %v2521
        %3820 = vmatprep.subr.mxu0 %v2506
        %3821 = vmatpush2.msra.mxu0 %v2505
        %3822 = vmatprep.subr.mxu0 %v2490
        %3823 = vmatpush2.msra.mxu0 %v2489
        %3824 = vmatprep.subr.mxu0 %v2474
        %3825 = vmatpush2.msra.mxu0 %v2473
        %3826 = vmatprep.subr.mxu0 %v2458
        %3827 = vmatpush2.msra.mxu0 %v2457
        %3828 = vmatprep.mubr.f32.mxu0 %v1674
        %3829 = vmatmul.mubr.f32.gmra.mxu0 %v1673
        %v3830 = vpop.f32.mrf.mxu0
        %v3831 = vadd.f32 %v3760, %v3830
        %v3832 = vpop.f32.mrf.mxu0
        %v3833 = vadd.f32 %v3762, %v3832
        %3834 = vdwg.mxu0
        %v3835 = vadd.f32 %v1651, %v2837
        %v3836 = vadd.f32 %v1652, %v2839
        %v3837 = vadd.f32 %v1653, %v2979
        %v3838 = vadd.f32 %v1654, %v2981
        %v3839 = vadd.f32 %v1655, %v3121
        %v3840 = vadd.f32 %v1656, %v3123
        %v3841 = vadd.f32 %v1657, %v3263
        %v3842 = vadd.f32 %v1658, %v3265
        %v3843 = vadd.f32 %v1659, %v3405
        %v3844 = vadd.f32 %v1660, %v3407
        %v3845 = vadd.f32 %v1661, %v3547
        %v3846 = vadd.f32 %v1662, %v3549
        %v3847 = vadd.f32 %v1663, %v3689
        %v3848 = vadd.f32 %v1664, %v3691
        %v3849 = vadd.f32 %v1665, %v3831
        %v3850 = vadd.f32 %v1666, %v3833
        %3851 = vst [vmem:[#allocation3] sm:$0xff] %v3835
        %3852 = vst [vmem:[#allocation3 + $0x8] sm:$0xff] %v3836
        %3853 = vst [vmem:[#allocation3 + $0x10] sm:$0xff] %v3837
        %3854 = vst [vmem:[#allocation3 + $0x18] sm:$0xff] %v3838
        %3855 = vst [vmem:[#allocation3 + $0x20] sm:$0xff] %v3839
        %3856 = vst [vmem:[#allocation3 + $0x28] sm:$0xff] %v3840
        %3857 = vst [vmem:[#allocation3 + $0x30] sm:$0xff] %v3841
        %3858 = vst [vmem:[#allocation3 + $0x38] sm:$0xff] %v3842
        %3859 = vst [vmem:[#allocation3 + $0x40] sm:$0xff] %v3843
        %3860 = vst [vmem:[#allocation3 + $0x48] sm:$0xff] %v3844
        %3861 = vst [vmem:[#allocation3 + $0x50] sm:$0xff] %v3845
        %3862 = vst [vmem:[#allocation3 + $0x58] sm:$0xff] %v3846
        %3863 = vst [vmem:[#allocation3 + $0x60] sm:$0xff] %v3847
        %3864 = vst [vmem:[#allocation3 + $0x68] sm:$0xff] %v3848
        %3865 = vst [vmem:[#allocation3 + $0x70] sm:$0xff] %v3849
        %3866 = vst [vmem:[#allocation3 + $0x78] sm:$0xff] %v3850
        %p3867 = scmp.eq.s32.totalorder %s25, 3
        // Predicated region
        $region77: #{mlp_forward_pallas.1} parent=47 // pred_check
          %p3868 = pneg %p3867
        $region78: #{mlp_forward_pallas.1} parent=47 // pred_check_branch
          %3870 = sbr.rel (%p3868) target = $region80
        $region79: #{mlp_forward_pallas.1} parent=47 // pred_region
          %v3871 = vld [vmem:[#allocation3] sm:$0xff]
          %v3872 = vld [vmem:[#allocation3 + $0x8] sm:$0xff]
          %v3873 = vld [vmem:[#allocation3 + $0x10] sm:$0xff]
          %v3874 = vld [vmem:[#allocation3 + $0x18] sm:$0xff]
          %v3875 = vld [vmem:[#allocation3 + $0x20] sm:$0xff]
          %v3876 = vld [vmem:[#allocation3 + $0x28] sm:$0xff]
          %v3877 = vld [vmem:[#allocation3 + $0x30] sm:$0xff]
          %v3878 = vld [vmem:[#allocation3 + $0x38] sm:$0xff]
          %v3879 = vld [vmem:[#allocation3 + $0x40] sm:$0xff]
          %v3880 = vld [vmem:[#allocation3 + $0x48] sm:$0xff]
          %v3881 = vld [vmem:[#allocation3 + $0x50] sm:$0xff]
          %v3882 = vld [vmem:[#allocation3 + $0x58] sm:$0xff]
          %v3883 = vld [vmem:[#allocation3 + $0x60] sm:$0xff]
          %v3884 = vld [vmem:[#allocation3 + $0x68] sm:$0xff]
          %v3885 = vld [vmem:[#allocation3 + $0x70] sm:$0xff]
          %v3886 = vld [vmem:[#allocation3 + $0x78] sm:$0xff]
          %v3887 = vld [vmem:[#allocation12] sm:$0xff]
          %v3888 = vld [vmem:[#allocation12 + $0x8] sm:$0xff]
          %v3891 = vlaneseq
          %v3892 = vshrl.u32 %v3891, 7
          %v3893 = vsub.s32 0, %v3892
          %v3894 = vrot.slane %v3887, %v3893
          %v3895 = vlaneseq
          %v3896 = vshrl.u32 %v3895, 7
          %v3897 = vsub.s32 1, %v3896
          %v3898 = vrot.slane %v3887, %v3897
          %v3899 = vlaneseq
          %v3900 = vshrl.u32 %v3899, 7
          %v3901 = vsub.s32 2, %v3900
          %v3902 = vrot.slane %v3887, %v3901
          %v3903 = vlaneseq
          %v3904 = vshrl.u32 %v3903, 7
          %v3905 = vsub.s32 3, %v3904
          %v3906 = vrot.slane %v3887, %v3905
          %v3907 = vlaneseq
          %v3908 = vshrl.u32 %v3907, 7
          %v3909 = vsub.s32 4, %v3908
          %v3910 = vrot.slane %v3887, %v3909
          %v3911 = vlaneseq
          %v3912 = vshrl.u32 %v3911, 7
          %v3913 = vsub.s32 5, %v3912
          %v3914 = vrot.slane %v3887, %v3913
          %v3915 = vlaneseq
          %v3916 = vshrl.u32 %v3915, 7
          %v3917 = vsub.s32 6, %v3916
          %v3918 = vrot.slane %v3887, %v3917
          %v3919 = vlaneseq
          %v3920 = vshrl.u32 %v3919, 7
          %v3921 = vsub.s32 7, %v3920
          %v3922 = vrot.slane %v3887, %v3921
          %v3923 = vlaneseq
          %v3924 = vshrl.u32 %v3923, 7
          %v3925 = vsub.s32 0, %v3924
          %v3926 = vrot.slane %v3888, %v3925
          %v3927 = vlaneseq
          %v3928 = vshrl.u32 %v3927, 7
          %v3929 = vsub.s32 1, %v3928
          %v3930 = vrot.slane %v3888, %v3929
          %v3931 = vlaneseq
          %v3932 = vshrl.u32 %v3931, 7
          %v3933 = vsub.s32 2, %v3932
          %v3934 = vrot.slane %v3888, %v3933
          %v3935 = vlaneseq
          %v3936 = vshrl.u32 %v3935, 7
          %v3937 = vsub.s32 3, %v3936
          %v3938 = vrot.slane %v3888, %v3937
          %v3939 = vlaneseq
          %v3940 = vshrl.u32 %v3939, 7
          %v3941 = vsub.s32 4, %v3940
          %v3942 = vrot.slane %v3888, %v3941
          %v3943 = vlaneseq
          %v3944 = vshrl.u32 %v3943, 7
          %v3945 = vsub.s32 5, %v3944
          %v3946 = vrot.slane %v3888, %v3945
          %v3947 = vlaneseq
          %v3948 = vshrl.u32 %v3947, 7
          %v3949 = vsub.s32 6, %v3948
          %v3950 = vrot.slane %v3888, %v3949
          %v3951 = vlaneseq
          %v3952 = vshrl.u32 %v3951, 7
          %v3953 = vsub.s32 7, %v3952
          %v3954 = vrot.slane %v3888, %v3953
          %v3971 = vadd.f32 %v3871, %v3894
          %v3972 = vadd.f32 %v3872, %v3898
          %v3973 = vadd.f32 %v3873, %v3902
          %v3974 = vadd.f32 %v3874, %v3906
          %v3975 = vadd.f32 %v3875, %v3910
          %v3976 = vadd.f32 %v3876, %v3914
          %v3977 = vadd.f32 %v3877, %v3918
          %v3978 = vadd.f32 %v3878, %v3922
          %v3979 = vadd.f32 %v3879, %v3926
          %v3980 = vadd.f32 %v3880, %v3930
          %v3981 = vadd.f32 %v3881, %v3934
          %v3982 = vadd.f32 %v3882, %v3938
          %v3983 = vadd.f32 %v3883, %v3942
          %v3984 = vadd.f32 %v3884, %v3946
          %v3985 = vadd.f32 %v3885, %v3950
          %v3986 = vadd.f32 %v3886, %v3954
          %v3987 = vxor.u32 %v3971, 2147483648
          %v3988 = vxor.u32 %v3972, 2147483648
          %v3989 = vxor.u32 %v3973, 2147483648
          %v3990 = vxor.u32 %v3974, 2147483648
          %v3991 = vxor.u32 %v3975, 2147483648
          %v3992 = vxor.u32 %v3976, 2147483648
          %v3993 = vxor.u32 %v3977, 2147483648
          %v3994 = vxor.u32 %v3978, 2147483648
          %v3995 = vxor.u32 %v3979, 2147483648
          %v3996 = vxor.u32 %v3980, 2147483648
          %v3997 = vxor.u32 %v3981, 2147483648
          %v3998 = vxor.u32 %v3982, 2147483648
          %v3999 = vxor.u32 %v3983, 2147483648
          %v4000 = vxor.u32 %v3984, 2147483648
          %v4001 = vxor.u32 %v3985, 2147483648
          %v4002 = vxor.u32 %v3986, 2147483648
          %v4003 = vmul.f32 %v3987, 1.442695
          %v4004 = vpow.pop %v4003
          %v4005 = vmul.f32 %v3988, 1.442695
          %v4006 = vpow.pop %v4005
          %v4007 = vmul.f32 %v3989, 1.442695
          %v4008 = vpow.pop %v4007
          %v4009 = vmul.f32 %v3990, 1.442695
          %v4010 = vpow.pop %v4009
          %v4011 = vmul.f32 %v3991, 1.442695
          %v4012 = vpow.pop %v4011
          %v4013 = vmul.f32 %v3992, 1.442695
          %v4014 = vpow.pop %v4013
          %v4015 = vmul.f32 %v3993, 1.442695
          %v4016 = vpow.pop %v4015
          %v4017 = vmul.f32 %v3994, 1.442695
          %v4018 = vpow.pop %v4017
          %v4019 = vmul.f32 %v3995, 1.442695
          %v4020 = vpow.pop %v4019
          %v4021 = vmul.f32 %v3996, 1.442695
          %v4022 = vpow.pop %v4021
          %v4023 = vmul.f32 %v3997, 1.442695
          %v4024 = vpow.pop %v4023
          %v4025 = vmul.f32 %v3998, 1.442695
          %v4026 = vpow.pop %v4025
          %v4027 = vmul.f32 %v3999, 1.442695
          %v4028 = vpow.pop %v4027
          %v4029 = vmul.f32 %v4000, 1.442695
          %v4030 = vpow.pop %v4029
          %v4031 = vmul.f32 %v4001, 1.442695
          %v4032 = vpow.pop %v4031
          %v4033 = vmul.f32 %v4002, 1.442695
          %v4034 = vpow.pop %v4033
          %v4035 = vadd.f32 %v4004, 1.0
          %v4036 = vadd.f32 %v4006, 1.0
          %v4037 = vadd.f32 %v4008, 1.0
          %v4038 = vadd.f32 %v4010, 1.0
          %v4039 = vadd.f32 %v4012, 1.0
          %v4040 = vadd.f32 %v4014, 1.0
          %v4041 = vadd.f32 %v4016, 1.0
          %v4042 = vadd.f32 %v4018, 1.0
          %v4043 = vadd.f32 %v4020, 1.0
          %v4044 = vadd.f32 %v4022, 1.0
          %v4045 = vadd.f32 %v4024, 1.0
          %v4046 = vadd.f32 %v4026, 1.0
          %v4047 = vadd.f32 %v4028, 1.0
          %v4048 = vadd.f32 %v4030, 1.0
          %v4049 = vadd.f32 %v4032, 1.0
          %v4050 = vadd.f32 %v4034, 1.0
          %v4051 = vrcp.pop %v4035
          %v4052 = vmul.f32 1.0, %v4051
          %v4053 = vrcp.pop %v4036
          %v4054 = vmul.f32 1.0, %v4053
          %v4055 = vrcp.pop %v4037
          %v4056 = vmul.f32 1.0, %v4055
          %v4057 = vrcp.pop %v4038
          %v4058 = vmul.f32 1.0, %v4057
          %v4059 = vrcp.pop %v4039
          %v4060 = vmul.f32 1.0, %v4059
          %v4061 = vrcp.pop %v4040
          %v4062 = vmul.f32 1.0, %v4061
          %v4063 = vrcp.pop %v4041
          %v4064 = vmul.f32 1.0, %v4063
          %v4065 = vrcp.pop %v4042
          %v4066 = vmul.f32 1.0, %v4065
          %v4067 = vrcp.pop %v4043
          %v4068 = vmul.f32 1.0, %v4067
          %v4069 = vrcp.pop %v4044
          %v4070 = vmul.f32 1.0, %v4069
          %v4071 = vrcp.pop %v4045
          %v4072 = vmul.f32 1.0, %v4071
          %v4073 = vrcp.pop %v4046
          %v4074 = vmul.f32 1.0, %v4073
          %v4075 = vrcp.pop %v4047
          %v4076 = vmul.f32 1.0, %v4075
          %v4077 = vrcp.pop %v4048
          %v4078 = vmul.f32 1.0, %v4077
          %v4079 = vrcp.pop %v4049
          %v4080 = vmul.f32 1.0, %v4079
          %v4081 = vrcp.pop %v4050
          %v4082 = vmul.f32 1.0, %v4081
          %v4083 = vld [vmem:[%s5] sm:$0xff]
          %v4084 = vld [vmem:[%s5 + $0x8] sm:$0xff]
          %v4085 = vld [vmem:[%s5 + $0x10] sm:$0xff]
          %v4086 = vld [vmem:[%s5 + $0x18] sm:$0xff]
          %v4087 = vld [vmem:[%s5 + $0x20] sm:$0xff]
          %v4088 = vld [vmem:[%s5 + $0x28] sm:$0xff]
          %v4089 = vld [vmem:[%s5 + $0x30] sm:$0xff]
          %v4090 = vld [vmem:[%s5 + $0x38] sm:$0xff]
          %v4091 = vld [vmem:[%s5 + $0x40] sm:$0xff]
          %v4092 = vld [vmem:[%s5 + $0x48] sm:$0xff]
          %v4093 = vld [vmem:[%s5 + $0x50] sm:$0xff]
          %v4094 = vld [vmem:[%s5 + $0x58] sm:$0xff]
          %v4095 = vld [vmem:[%s5 + $0x60] sm:$0xff]
          %v4096 = vld [vmem:[%s5 + $0x68] sm:$0xff]
          %v4097 = vld [vmem:[%s5 + $0x70] sm:$0xff]
          %v4098 = vld [vmem:[%s5 + $0x78] sm:$0xff]
          %v4099 = vld [vmem:[%s5 + $0x80] sm:$0xff]
          %v4100 = vld [vmem:[%s5 + $0x88] sm:$0xff]
          %v4101 = vld [vmem:[%s5 + $0x90] sm:$0xff]
          %v4102 = vld [vmem:[%s5 + $0x98] sm:$0xff]
          %v4103 = vld [vmem:[%s5 + $0xa0] sm:$0xff]
          %v4104 = vld [vmem:[%s5 + $0xa8] sm:$0xff]
          %v4105 = vld [vmem:[%s5 + $0xb0] sm:$0xff]
          %v4106 = vld [vmem:[%s5 + $0xb8] sm:$0xff]
          %v4107 = vld [vmem:[%s5 + $0xc0] sm:$0xff]
          %v4108 = vld [vmem:[%s5 + $0xc8] sm:$0xff]
          %v4109 = vld [vmem:[%s5 + $0xd0] sm:$0xff]
          %v4110 = vld [vmem:[%s5 + $0xd8] sm:$0xff]
          %v4111 = vld [vmem:[%s5 + $0xe0] sm:$0xff]
          %v4112 = vld [vmem:[%s5 + $0xe8] sm:$0xff]
          %v4113 = vld [vmem:[%s5 + $0xf0] sm:$0xff]
          %v4114 = vld [vmem:[%s5 + $0xf8] sm:$0xff]
          %v4115 = vld [vmem:[%s5 + $0x100] sm:$0xff]
          %v4116 = vld [vmem:[%s5 + $0x108] sm:$0xff]
          %v4117 = vld [vmem:[%s5 + $0x110] sm:$0xff]
          %v4118 = vld [vmem:[%s5 + $0x118] sm:$0xff]
          %v4119 = vld [vmem:[%s5 + $0x120] sm:$0xff]
          %v4120 = vld [vmem:[%s5 + $0x128] sm:$0xff]
          %v4121 = vld [vmem:[%s5 + $0x130] sm:$0xff]
          %v4122 = vld [vmem:[%s5 + $0x138] sm:$0xff]
          %v4123 = vld [vmem:[%s5 + $0x140] sm:$0xff]
          %v4124 = vld [vmem:[%s5 + $0x148] sm:$0xff]
          %v4125 = vld [vmem:[%s5 + $0x150] sm:$0xff]
          %v4126 = vld [vmem:[%s5 + $0x158] sm:$0xff]
          %v4127 = vld [vmem:[%s5 + $0x160] sm:$0xff]
          %v4128 = vld [vmem:[%s5 + $0x168] sm:$0xff]
          %v4129 = vld [vmem:[%s5 + $0x170] sm:$0xff]
          %v4130 = vld [vmem:[%s5 + $0x178] sm:$0xff]
          %v4131 = vld [vmem:[%s5 + $0x180] sm:$0xff]
          %v4132 = vld [vmem:[%s5 + $0x188] sm:$0xff]
          %v4133 = vld [vmem:[%s5 + $0x190] sm:$0xff]
          %v4134 = vld [vmem:[%s5 + $0x198] sm:$0xff]
          %v4135 = vld [vmem:[%s5 + $0x1a0] sm:$0xff]
          %v4136 = vld [vmem:[%s5 + $0x1a8] sm:$0xff]
          %v4137 = vld [vmem:[%s5 + $0x1b0] sm:$0xff]
          %v4138 = vld [vmem:[%s5 + $0x1b8] sm:$0xff]
          %v4139 = vld [vmem:[%s5 + $0x1c0] sm:$0xff]
          %v4140 = vld [vmem:[%s5 + $0x1c8] sm:$0xff]
          %v4141 = vld [vmem:[%s5 + $0x1d0] sm:$0xff]
          %v4142 = vld [vmem:[%s5 + $0x1d8] sm:$0xff]
          %v4143 = vld [vmem:[%s5 + $0x1e0] sm:$0xff]
          %v4144 = vld [vmem:[%s5 + $0x1e8] sm:$0xff]
          %v4145 = vld [vmem:[%s5 + $0x1f0] sm:$0xff]
          %v4146 = vld [vmem:[%s5 + $0x1f8] sm:$0xff]
          %v4147 = vld [vmem:[%s5 + $0x200] sm:$0xff]
          %v4148 = vld [vmem:[%s5 + $0x208] sm:$0xff]
          %v4149 = vld [vmem:[%s5 + $0x210] sm:$0xff]
          %v4150 = vld [vmem:[%s5 + $0x218] sm:$0xff]
          %v4151 = vld [vmem:[%s5 + $0x220] sm:$0xff]
          %v4152 = vld [vmem:[%s5 + $0x228] sm:$0xff]
          %v4153 = vld [vmem:[%s5 + $0x230] sm:$0xff]
          %v4154 = vld [vmem:[%s5 + $0x238] sm:$0xff]
          %v4155 = vld [vmem:[%s5 + $0x240] sm:$0xff]
          %v4156 = vld [vmem:[%s5 + $0x248] sm:$0xff]
          %v4157 = vld [vmem:[%s5 + $0x250] sm:$0xff]
          %v4158 = vld [vmem:[%s5 + $0x258] sm:$0xff]
          %v4159 = vld [vmem:[%s5 + $0x260] sm:$0xff]
          %v4160 = vld [vmem:[%s5 + $0x268] sm:$0xff]
          %v4161 = vld [vmem:[%s5 + $0x270] sm:$0xff]
          %v4162 = vld [vmem:[%s5 + $0x278] sm:$0xff]
          %v4163 = vld [vmem:[%s5 + $0x280] sm:$0xff]
          %v4164 = vld [vmem:[%s5 + $0x288] sm:$0xff]
          %v4165 = vld [vmem:[%s5 + $0x290] sm:$0xff]
          %v4166 = vld [vmem:[%s5 + $0x298] sm:$0xff]
          %v4167 = vld [vmem:[%s5 + $0x2a0] sm:$0xff]
          %v4168 = vld [vmem:[%s5 + $0x2a8] sm:$0xff]
          %v4169 = vld [vmem:[%s5 + $0x2b0] sm:$0xff]
          %v4170 = vld [vmem:[%s5 + $0x2b8] sm:$0xff]
          %v4171 = vld [vmem:[%s5 + $0x2c0] sm:$0xff]
          %v4172 = vld [vmem:[%s5 + $0x2c8] sm:$0xff]
          %v4173 = vld [vmem:[%s5 + $0x2d0] sm:$0xff]
          %v4174 = vld [vmem:[%s5 + $0x2d8] sm:$0xff]
          %v4175 = vld [vmem:[%s5 + $0x2e0] sm:$0xff]
          %v4176 = vld [vmem:[%s5 + $0x2e8] sm:$0xff]
          %v4177 = vld [vmem:[%s5 + $0x2f0] sm:$0xff]
          %v4178 = vld [vmem:[%s5 + $0x2f8] sm:$0xff]
          %v4179 = vld [vmem:[%s5 + $0x300] sm:$0xff]
          %v4180 = vld [vmem:[%s5 + $0x308] sm:$0xff]
          %v4181 = vld [vmem:[%s5 + $0x310] sm:$0xff]
          %v4182 = vld [vmem:[%s5 + $0x318] sm:$0xff]
          %v4183 = vld [vmem:[%s5 + $0x320] sm:$0xff]
          %v4184 = vld [vmem:[%s5 + $0x328] sm:$0xff]
          %v4185 = vld [vmem:[%s5 + $0x330] sm:$0xff]
          %v4186 = vld [vmem:[%s5 + $0x338] sm:$0xff]
          %v4187 = vld [vmem:[%s5 + $0x340] sm:$0xff]
          %v4188 = vld [vmem:[%s5 + $0x348] sm:$0xff]
          %v4189 = vld [vmem:[%s5 + $0x350] sm:$0xff]
          %v4190 = vld [vmem:[%s5 + $0x358] sm:$0xff]
          %v4191 = vld [vmem:[%s5 + $0x360] sm:$0xff]
          %v4192 = vld [vmem:[%s5 + $0x368] sm:$0xff]
          %v4193 = vld [vmem:[%s5 + $0x370] sm:$0xff]
          %v4194 = vld [vmem:[%s5 + $0x378] sm:$0xff]
          %v4195 = vld [vmem:[%s5 + $0x380] sm:$0xff]
          %v4196 = vld [vmem:[%s5 + $0x388] sm:$0xff]
          %v4197 = vld [vmem:[%s5 + $0x390] sm:$0xff]
          %v4198 = vld [vmem:[%s5 + $0x398] sm:$0xff]
          %v4199 = vld [vmem:[%s5 + $0x3a0] sm:$0xff]
          %v4200 = vld [vmem:[%s5 + $0x3a8] sm:$0xff]
          %v4201 = vld [vmem:[%s5 + $0x3b0] sm:$0xff]
          %v4202 = vld [vmem:[%s5 + $0x3b8] sm:$0xff]
          %v4203 = vld [vmem:[%s5 + $0x3c0] sm:$0xff]
          %v4204 = vld [vmem:[%s5 + $0x3c8] sm:$0xff]
          %v4205 = vld [vmem:[%s5 + $0x3d0] sm:$0xff]
          %v4206 = vld [vmem:[%s5 + $0x3d8] sm:$0xff]
          %v4207 = vld [vmem:[%s5 + $0x3e0] sm:$0xff]
          %v4208 = vld [vmem:[%s5 + $0x3e8] sm:$0xff]
          %v4209 = vld [vmem:[%s5 + $0x3f0] sm:$0xff]
          %v4210 = vld [vmem:[%s5 + $0x3f8] sm:$0xff]
          %v4211 = vld [vmem:[%s5 + $0x400] sm:$0xff]
          %v4212 = vld [vmem:[%s5 + $0x408] sm:$0xff]
          %v4213 = vld [vmem:[%s5 + $0x410] sm:$0xff]
          %v4214 = vld [vmem:[%s5 + $0x418] sm:$0xff]
          %v4215 = vld [vmem:[%s5 + $0x420] sm:$0xff]
          %v4216 = vld [vmem:[%s5 + $0x428] sm:$0xff]
          %v4217 = vld [vmem:[%s5 + $0x430] sm:$0xff]
          %v4218 = vld [vmem:[%s5 + $0x438] sm:$0xff]
          %v4219 = vld [vmem:[%s5 + $0x440] sm:$0xff]
          %v4220 = vld [vmem:[%s5 + $0x448] sm:$0xff]
          %v4221 = vld [vmem:[%s5 + $0x450] sm:$0xff]
          %v4222 = vld [vmem:[%s5 + $0x458] sm:$0xff]
          %v4223 = vld [vmem:[%s5 + $0x460] sm:$0xff]
          %v4224 = vld [vmem:[%s5 + $0x468] sm:$0xff]
          %v4225 = vld [vmem:[%s5 + $0x470] sm:$0xff]
          %v4226 = vld [vmem:[%s5 + $0x478] sm:$0xff]
          %v4227 = vld [vmem:[%s5 + $0x480] sm:$0xff]
          %v4228 = vld [vmem:[%s5 + $0x488] sm:$0xff]
          %v4229 = vld [vmem:[%s5 + $0x490] sm:$0xff]
          %v4230 = vld [vmem:[%s5 + $0x498] sm:$0xff]
          %v4231 = vld [vmem:[%s5 + $0x4a0] sm:$0xff]
          %v4232 = vld [vmem:[%s5 + $0x4a8] sm:$0xff]
          %v4233 = vld [vmem:[%s5 + $0x4b0] sm:$0xff]
          %v4234 = vld [vmem:[%s5 + $0x4b8] sm:$0xff]
          %v4235 = vld [vmem:[%s5 + $0x4c0] sm:$0xff]
          %v4236 = vld [vmem:[%s5 + $0x4c8] sm:$0xff]
          %v4237 = vld [vmem:[%s5 + $0x4d0] sm:$0xff]
          %v4238 = vld [vmem:[%s5 + $0x4d8] sm:$0xff]
          %v4239 = vld [vmem:[%s5 + $0x4e0] sm:$0xff]
          %v4240 = vld [vmem:[%s5 + $0x4e8] sm:$0xff]
          %v4241 = vld [vmem:[%s5 + $0x4f0] sm:$0xff]
          %v4242 = vld [vmem:[%s5 + $0x4f8] sm:$0xff]
          %v4243 = vld [vmem:[%s5 + $0x500] sm:$0xff]
          %v4244 = vld [vmem:[%s5 + $0x508] sm:$0xff]
          %v4245 = vld [vmem:[%s5 + $0x510] sm:$0xff]
          %v4246 = vld [vmem:[%s5 + $0x518] sm:$0xff]
          %v4247 = vld [vmem:[%s5 + $0x520] sm:$0xff]
          %v4248 = vld [vmem:[%s5 + $0x528] sm:$0xff]
          %v4249 = vld [vmem:[%s5 + $0x530] sm:$0xff]
          %v4250 = vld [vmem:[%s5 + $0x538] sm:$0xff]
          %v4251 = vld [vmem:[%s5 + $0x540] sm:$0xff]
          %v4252 = vld [vmem:[%s5 + $0x548] sm:$0xff]
          %v4253 = vld [vmem:[%s5 + $0x550] sm:$0xff]
          %v4254 = vld [vmem:[%s5 + $0x558] sm:$0xff]
          %v4255 = vld [vmem:[%s5 + $0x560] sm:$0xff]
          %v4256 = vld [vmem:[%s5 + $0x568] sm:$0xff]
          %v4257 = vld [vmem:[%s5 + $0x570] sm:$0xff]
          %v4258 = vld [vmem:[%s5 + $0x578] sm:$0xff]
          %v4259 = vld [vmem:[%s5 + $0x580] sm:$0xff]
          %v4260 = vld [vmem:[%s5 + $0x588] sm:$0xff]
          %v4261 = vld [vmem:[%s5 + $0x590] sm:$0xff]
          %v4262 = vld [vmem:[%s5 + $0x598] sm:$0xff]
          %v4263 = vld [vmem:[%s5 + $0x5a0] sm:$0xff]
          %v4264 = vld [vmem:[%s5 + $0x5a8] sm:$0xff]
          %v4265 = vld [vmem:[%s5 + $0x5b0] sm:$0xff]
          %v4266 = vld [vmem:[%s5 + $0x5b8] sm:$0xff]
          %v4267 = vld [vmem:[%s5 + $0x5c0] sm:$0xff]
          %v4268 = vld [vmem:[%s5 + $0x5c8] sm:$0xff]
          %v4269 = vld [vmem:[%s5 + $0x5d0] sm:$0xff]
          %v4270 = vld [vmem:[%s5 + $0x5d8] sm:$0xff]
          %v4271 = vld [vmem:[%s5 + $0x5e0] sm:$0xff]
          %v4272 = vld [vmem:[%s5 + $0x5e8] sm:$0xff]
          %v4273 = vld [vmem:[%s5 + $0x5f0] sm:$0xff]
          %v4274 = vld [vmem:[%s5 + $0x5f8] sm:$0xff]
          %v4275 = vld [vmem:[%s5 + $0x600] sm:$0xff]
          %v4276 = vld [vmem:[%s5 + $0x608] sm:$0xff]
          %v4277 = vld [vmem:[%s5 + $0x610] sm:$0xff]
          %v4278 = vld [vmem:[%s5 + $0x618] sm:$0xff]
          %v4279 = vld [vmem:[%s5 + $0x620] sm:$0xff]
          %v4280 = vld [vmem:[%s5 + $0x628] sm:$0xff]
          %v4281 = vld [vmem:[%s5 + $0x630] sm:$0xff]
          %v4282 = vld [vmem:[%s5 + $0x638] sm:$0xff]
          %v4283 = vld [vmem:[%s5 + $0x640] sm:$0xff]
          %v4284 = vld [vmem:[%s5 + $0x648] sm:$0xff]
          %v4285 = vld [vmem:[%s5 + $0x650] sm:$0xff]
          %v4286 = vld [vmem:[%s5 + $0x658] sm:$0xff]
          %v4287 = vld [vmem:[%s5 + $0x660] sm:$0xff]
          %v4288 = vld [vmem:[%s5 + $0x668] sm:$0xff]
          %v4289 = vld [vmem:[%s5 + $0x670] sm:$0xff]
          %v4290 = vld [vmem:[%s5 + $0x678] sm:$0xff]
          %v4291 = vld [vmem:[%s5 + $0x680] sm:$0xff]
          %v4292 = vld [vmem:[%s5 + $0x688] sm:$0xff]
          %v4293 = vld [vmem:[%s5 + $0x690] sm:$0xff]
          %v4294 = vld [vmem:[%s5 + $0x698] sm:$0xff]
          %v4295 = vld [vmem:[%s5 + $0x6a0] sm:$0xff]
          %v4296 = vld [vmem:[%s5 + $0x6a8] sm:$0xff]
          %v4297 = vld [vmem:[%s5 + $0x6b0] sm:$0xff]
          %v4298 = vld [vmem:[%s5 + $0x6b8] sm:$0xff]
          %v4299 = vld [vmem:[%s5 + $0x6c0] sm:$0xff]
          %v4300 = vld [vmem:[%s5 + $0x6c8] sm:$0xff]
          %v4301 = vld [vmem:[%s5 + $0x6d0] sm:$0xff]
          %v4302 = vld [vmem:[%s5 + $0x6d8] sm:$0xff]
          %v4303 = vld [vmem:[%s5 + $0x6e0] sm:$0xff]
          %v4304 = vld [vmem:[%s5 + $0x6e8] sm:$0xff]
          %v4305 = vld [vmem:[%s5 + $0x6f0] sm:$0xff]
          %v4306 = vld [vmem:[%s5 + $0x6f8] sm:$0xff]
          %v4307 = vld [vmem:[%s5 + $0x700] sm:$0xff]
          %v4308 = vld [vmem:[%s5 + $0x708] sm:$0xff]
          %v4309 = vld [vmem:[%s5 + $0x710] sm:$0xff]
          %v4310 = vld [vmem:[%s5 + $0x718] sm:$0xff]
          %v4311 = vld [vmem:[%s5 + $0x720] sm:$0xff]
          %v4312 = vld [vmem:[%s5 + $0x728] sm:$0xff]
          %v4313 = vld [vmem:[%s5 + $0x730] sm:$0xff]
          %v4314 = vld [vmem:[%s5 + $0x738] sm:$0xff]
          %v4315 = vld [vmem:[%s5 + $0x740] sm:$0xff]
          %v4316 = vld [vmem:[%s5 + $0x748] sm:$0xff]
          %v4317 = vld [vmem:[%s5 + $0x750] sm:$0xff]
          %v4318 = vld [vmem:[%s5 + $0x758] sm:$0xff]
          %v4319 = vld [vmem:[%s5 + $0x760] sm:$0xff]
          %v4320 = vld [vmem:[%s5 + $0x768] sm:$0xff]
          %v4321 = vld [vmem:[%s5 + $0x770] sm:$0xff]
          %v4322 = vld [vmem:[%s5 + $0x778] sm:$0xff]
          %v4323 = vld [vmem:[%s5 + $0x780] sm:$0xff]
          %v4324 = vld [vmem:[%s5 + $0x788] sm:$0xff]
          %v4325 = vld [vmem:[%s5 + $0x790] sm:$0xff]
          %v4326 = vld [vmem:[%s5 + $0x798] sm:$0xff]
          %v4327 = vld [vmem:[%s5 + $0x7a0] sm:$0xff]
          %v4328 = vld [vmem:[%s5 + $0x7a8] sm:$0xff]
          %v4329 = vld [vmem:[%s5 + $0x7b0] sm:$0xff]
          %v4330 = vld [vmem:[%s5 + $0x7b8] sm:$0xff]
          %v4331 = vld [vmem:[%s5 + $0x7c0] sm:$0xff]
          %v4332 = vld [vmem:[%s5 + $0x7c8] sm:$0xff]
          %v4333 = vld [vmem:[%s5 + $0x7d0] sm:$0xff]
          %v4334 = vld [vmem:[%s5 + $0x7d8] sm:$0xff]
          %v4335 = vld [vmem:[%s5 + $0x7e0] sm:$0xff]
          %v4336 = vld [vmem:[%s5 + $0x7e8] sm:$0xff]
          %v4337 = vld [vmem:[%s5 + $0x7f0] sm:$0xff]
          %v4338 = vld [vmem:[%s5 + $0x7f8] sm:$0xff]
          %v4339 = vld [vmem:[#allocation13] sm:$0x1]
          %v4341 = vlaneseq
          %v4342 = vshrl.u32 %v4341, 7
          %v4343 = vsub.s32 0, %v4342
          %v4344 = vrot.slane %v4339, %v4343
          %4346 = vmatprep.subr.mxu0 0.0
          %4347 = vmatpush1.msra.mxu0 %v4098
          %4348 = vmatprep.subr.mxu0 0.0
          %4349 = vmatpush1.msra.mxu0 %v4097
          %4350 = vmatprep.subr.mxu0 0.0
          %4351 = vmatpush1.msra.mxu0 %v4096
          %4352 = vmatprep.subr.mxu0 0.0
          %4353 = vmatpush1.msra.mxu0 %v4095
          %4354 = vmatprep.subr.mxu0 0.0
          %4355 = vmatpush1.msra.mxu0 %v4094
          %4356 = vmatprep.subr.mxu0 0.0
          %4357 = vmatpush1.msra.mxu0 %v4093
          %4358 = vmatprep.subr.mxu0 0.0
          %4359 = vmatpush1.msra.mxu0 %v4092
          %4360 = vmatprep.subr.mxu0 0.0
          %4361 = vmatpush1.msra.mxu0 %v4091
          %4362 = vmatprep.subr.mxu0 0.0
          %4363 = vmatpush1.msra.mxu0 %v4090
          %4364 = vmatprep.subr.mxu0 0.0
          %4365 = vmatpush1.msra.mxu0 %v4089
          %4366 = vmatprep.subr.mxu0 0.0
          %4367 = vmatpush1.msra.mxu0 %v4088
          %4368 = vmatprep.subr.mxu0 0.0
          %4369 = vmatpush1.msra.mxu0 %v4087
          %4370 = vmatprep.subr.mxu0 0.0
          %4371 = vmatpush1.msra.mxu0 %v4086
          %4372 = vmatprep.subr.mxu0 0.0
          %4373 = vmatpush1.msra.mxu0 %v4085
          %4374 = vmatprep.subr.mxu0 0.0
          %4375 = vmatpush1.msra.mxu0 %v4084
          %4376 = vmatprep.subr.mxu0 0.0
          %4377 = vmatpush1.msra.mxu0 %v4083
          %4378 = vmatprep.subr.mxu0 0.0
          %4379 = vmatpush2.msra.mxu0 %v4114
          %4380 = vmatprep.subr.mxu0 0.0
          %4381 = vmatpush2.msra.mxu0 %v4113
          %4382 = vmatprep.subr.mxu0 0.0
          %4383 = vmatpush2.msra.mxu0 %v4112
          %4384 = vmatprep.subr.mxu0 0.0
          %4385 = vmatpush2.msra.mxu0 %v4111
          %4386 = vmatprep.subr.mxu0 0.0
          %4387 = vmatpush2.msra.mxu0 %v4110
          %4388 = vmatprep.subr.mxu0 0.0
          %4389 = vmatpush2.msra.mxu0 %v4109
          %4390 = vmatprep.subr.mxu0 0.0
          %4391 = vmatpush2.msra.mxu0 %v4108
          %4392 = vmatprep.subr.mxu0 0.0
          %4393 = vmatpush2.msra.mxu0 %v4107
          %4394 = vmatprep.subr.mxu0 0.0
          %4395 = vmatpush2.msra.mxu0 %v4106
          %4396 = vmatprep.subr.mxu0 0.0
          %4397 = vmatpush2.msra.mxu0 %v4105
          %4398 = vmatprep.subr.mxu0 0.0
          %4399 = vmatpush2.msra.mxu0 %v4104
          %4400 = vmatprep.subr.mxu0 0.0
          %4401 = vmatpush2.msra.mxu0 %v4103
          %4402 = vmatprep.subr.mxu0 0.0
          %4403 = vmatpush2.msra.mxu0 %v4102
          %4404 = vmatprep.subr.mxu0 0.0
          %4405 = vmatpush2.msra.mxu0 %v4101
          %4406 = vmatprep.subr.mxu0 0.0
          %4407 = vmatpush2.msra.mxu0 %v4100
          %4408 = vmatprep.subr.mxu0 0.0
          %4409 = vmatpush2.msra.mxu0 %v4099
          %4410 = vmatprep.mubr.f32.mxu0 %v4054
          %4411 = vmatmul.mubr.f32.gmra.mxu0 %v4052
          %v4412 = vpop.f32.mrf.mxu0
          %v4413 = vadd.f32 %v4344, %v4412
          %v4414 = vpop.f32.mrf.mxu0
          %4415 = vdwg.mxu0
          %4416 = vmatprep.subr.mxu0 0.0
          %4417 = vmatpush1.msra.mxu0 %v4130
          %4418 = vmatprep.subr.mxu0 0.0
          %4419 = vmatpush1.msra.mxu0 %v4129
          %4420 = vmatprep.subr.mxu0 0.0
          %4421 = vmatpush1.msra.mxu0 %v4128
          %4422 = vmatprep.subr.mxu0 0.0
          %4423 = vmatpush1.msra.mxu0 %v4127
          %4424 = vmatprep.subr.mxu0 0.0
          %4425 = vmatpush1.msra.mxu0 %v4126
          %4426 = vmatprep.subr.mxu0 0.0
          %4427 = vmatpush1.msra.mxu0 %v4125
          %4428 = vmatprep.subr.mxu0 0.0
          %4429 = vmatpush1.msra.mxu0 %v4124
          %4430 = vmatprep.subr.mxu0 0.0
          %4431 = vmatpush1.msra.mxu0 %v4123
          %4432 = vmatprep.subr.mxu0 0.0
          %4433 = vmatpush1.msra.mxu0 %v4122
          %4434 = vmatprep.subr.mxu0 0.0
          %4435 = vmatpush1.msra.mxu0 %v4121
          %4436 = vmatprep.subr.mxu0 0.0
          %4437 = vmatpush1.msra.mxu0 %v4120
          %4438 = vmatprep.subr.mxu0 0.0
          %4439 = vmatpush1.msra.mxu0 %v4119
          %4440 = vmatprep.subr.mxu0 0.0
          %4441 = vmatpush1.msra.mxu0 %v4118
          %4442 = vmatprep.subr.mxu0 0.0
          %4443 = vmatpush1.msra.mxu0 %v4117
          %4444 = vmatprep.subr.mxu0 0.0
          %4445 = vmatpush1.msra.mxu0 %v4116
          %4446 = vmatprep.subr.mxu0 0.0
          %4447 = vmatpush1.msra.mxu0 %v4115
          %4448 = vmatprep.subr.mxu0 0.0
          %4449 = vmatpush2.msra.mxu0 %v4146
          %4450 = vmatprep.subr.mxu0 0.0
          %4451 = vmatpush2.msra.mxu0 %v4145
          %4452 = vmatprep.subr.mxu0 0.0
          %4453 = vmatpush2.msra.mxu0 %v4144
          %4454 = vmatprep.subr.mxu0 0.0
          %4455 = vmatpush2.msra.mxu0 %v4143
          %4456 = vmatprep.subr.mxu0 0.0
          %4457 = vmatpush2.msra.mxu0 %v4142
          %4458 = vmatprep.subr.mxu0 0.0
          %4459 = vmatpush2.msra.mxu0 %v4141
          %4460 = vmatprep.subr.mxu0 0.0
          %4461 = vmatpush2.msra.mxu0 %v4140
          %4462 = vmatprep.subr.mxu0 0.0
          %4463 = vmatpush2.msra.mxu0 %v4139
          %4464 = vmatprep.subr.mxu0 0.0
          %4465 = vmatpush2.msra.mxu0 %v4138
          %4466 = vmatprep.subr.mxu0 0.0
          %4467 = vmatpush2.msra.mxu0 %v4137
          %4468 = vmatprep.subr.mxu0 0.0
          %4469 = vmatpush2.msra.mxu0 %v4136
          %4470 = vmatprep.subr.mxu0 0.0
          %4471 = vmatpush2.msra.mxu0 %v4135
          %4472 = vmatprep.subr.mxu0 0.0
          %4473 = vmatpush2.msra.mxu0 %v4134
          %4474 = vmatprep.subr.mxu0 0.0
          %4475 = vmatpush2.msra.mxu0 %v4133
          %4476 = vmatprep.subr.mxu0 0.0
          %4477 = vmatpush2.msra.mxu0 %v4132
          %4478 = vmatprep.subr.mxu0 0.0
          %4479 = vmatpush2.msra.mxu0 %v4131
          %4480 = vmatprep.mubr.f32.mxu0 %v4058
          %4481 = vmatmul.mubr.f32.gmra.mxu0 %v4056
          %v4482 = vpop.f32.mrf.mxu0
          %v4483 = vadd.f32 %v4413, %v4482
          %v4484 = vpop.f32.mrf.mxu0
          %4485 = vdwg.mxu0
          %4486 = vmatprep.subr.mxu0 0.0
          %4487 = vmatpush1.msra.mxu0 %v4162
          %4488 = vmatprep.subr.mxu0 0.0
          %4489 = vmatpush1.msra.mxu0 %v4161
          %4490 = vmatprep.subr.mxu0 0.0
          %4491 = vmatpush1.msra.mxu0 %v4160
          %4492 = vmatprep.subr.mxu0 0.0
          %4493 = vmatpush1.msra.mxu0 %v4159
          %4494 = vmatprep.subr.mxu0 0.0
          %4495 = vmatpush1.msra.mxu0 %v4158
          %4496 = vmatprep.subr.mxu0 0.0
          %4497 = vmatpush1.msra.mxu0 %v4157
          %4498 = vmatprep.subr.mxu0 0.0
          %4499 = vmatpush1.msra.mxu0 %v4156
          %4500 = vmatprep.subr.mxu0 0.0
          %4501 = vmatpush1.msra.mxu0 %v4155
          %4502 = vmatprep.subr.mxu0 0.0
          %4503 = vmatpush1.msra.mxu0 %v4154
          %4504 = vmatprep.subr.mxu0 0.0
          %4505 = vmatpush1.msra.mxu0 %v4153
          %4506 = vmatprep.subr.mxu0 0.0
          %4507 = vmatpush1.msra.mxu0 %v4152
          %4508 = vmatprep.subr.mxu0 0.0
          %4509 = vmatpush1.msra.mxu0 %v4151
          %4510 = vmatprep.subr.mxu0 0.0
          %4511 = vmatpush1.msra.mxu0 %v4150
          %4512 = vmatprep.subr.mxu0 0.0
          %4513 = vmatpush1.msra.mxu0 %v4149
          %4514 = vmatprep.subr.mxu0 0.0
          %4515 = vmatpush1.msra.mxu0 %v4148
          %4516 = vmatprep.subr.mxu0 0.0
          %4517 = vmatpush1.msra.mxu0 %v4147
          %4518 = vmatprep.subr.mxu0 0.0
          %4519 = vmatpush2.msra.mxu0 %v4178
          %4520 = vmatprep.subr.mxu0 0.0
          %4521 = vmatpush2.msra.mxu0 %v4177
          %4522 = vmatprep.subr.mxu0 0.0
          %4523 = vmatpush2.msra.mxu0 %v4176
          %4524 = vmatprep.subr.mxu0 0.0
          %4525 = vmatpush2.msra.mxu0 %v4175
          %4526 = vmatprep.subr.mxu0 0.0
          %4527 = vmatpush2.msra.mxu0 %v4174
          %4528 = vmatprep.subr.mxu0 0.0
          %4529 = vmatpush2.msra.mxu0 %v4173
          %4530 = vmatprep.subr.mxu0 0.0
          %4531 = vmatpush2.msra.mxu0 %v4172
          %4532 = vmatprep.subr.mxu0 0.0
          %4533 = vmatpush2.msra.mxu0 %v4171
          %4534 = vmatprep.subr.mxu0 0.0
          %4535 = vmatpush2.msra.mxu0 %v4170
          %4536 = vmatprep.subr.mxu0 0.0
          %4537 = vmatpush2.msra.mxu0 %v4169
          %4538 = vmatprep.subr.mxu0 0.0
          %4539 = vmatpush2.msra.mxu0 %v4168
          %4540 = vmatprep.subr.mxu0 0.0
          %4541 = vmatpush2.msra.mxu0 %v4167
          %4542 = vmatprep.subr.mxu0 0.0
          %4543 = vmatpush2.msra.mxu0 %v4166
          %4544 = vmatprep.subr.mxu0 0.0
          %4545 = vmatpush2.msra.mxu0 %v4165
          %4546 = vmatprep.subr.mxu0 0.0
          %4547 = vmatpush2.msra.mxu0 %v4164
          %4548 = vmatprep.subr.mxu0 0.0
          %4549 = vmatpush2.msra.mxu0 %v4163
          %4550 = vmatprep.mubr.f32.mxu0 %v4062
          %4551 = vmatmul.mubr.f32.gmra.mxu0 %v4060
          %v4552 = vpop.f32.mrf.mxu0
          %v4553 = vadd.f32 %v4483, %v4552
          %v4554 = vpop.f32.mrf.mxu0
          %4555 = vdwg.mxu0
          %4556 = vmatprep.subr.mxu0 0.0
          %4557 = vmatpush1.msra.mxu0 %v4194
          %4558 = vmatprep.subr.mxu0 0.0
          %4559 = vmatpush1.msra.mxu0 %v4193
          %4560 = vmatprep.subr.mxu0 0.0
          %4561 = vmatpush1.msra.mxu0 %v4192
          %4562 = vmatprep.subr.mxu0 0.0
          %4563 = vmatpush1.msra.mxu0 %v4191
          %4564 = vmatprep.subr.mxu0 0.0
          %4565 = vmatpush1.msra.mxu0 %v4190
          %4566 = vmatprep.subr.mxu0 0.0
          %4567 = vmatpush1.msra.mxu0 %v4189
          %4568 = vmatprep.subr.mxu0 0.0
          %4569 = vmatpush1.msra.mxu0 %v4188
          %4570 = vmatprep.subr.mxu0 0.0
          %4571 = vmatpush1.msra.mxu0 %v4187
          %4572 = vmatprep.subr.mxu0 0.0
          %4573 = vmatpush1.msra.mxu0 %v4186
          %4574 = vmatprep.subr.mxu0 0.0
          %4575 = vmatpush1.msra.mxu0 %v4185
          %4576 = vmatprep.subr.mxu0 0.0
          %4577 = vmatpush1.msra.mxu0 %v4184
          %4578 = vmatprep.subr.mxu0 0.0
          %4579 = vmatpush1.msra.mxu0 %v4183
          %4580 = vmatprep.subr.mxu0 0.0
          %4581 = vmatpush1.msra.mxu0 %v4182
          %4582 = vmatprep.subr.mxu0 0.0
          %4583 = vmatpush1.msra.mxu0 %v4181
          %4584 = vmatprep.subr.mxu0 0.0
          %4585 = vmatpush1.msra.mxu0 %v4180
          %4586 = vmatprep.subr.mxu0 0.0
          %4587 = vmatpush1.msra.mxu0 %v4179
          %4588 = vmatprep.subr.mxu0 0.0
          %4589 = vmatpush2.msra.mxu0 %v4210
          %4590 = vmatprep.subr.mxu0 0.0
          %4591 = vmatpush2.msra.mxu0 %v4209
          %4592 = vmatprep.subr.mxu0 0.0
          %4593 = vmatpush2.msra.mxu0 %v4208
          %4594 = vmatprep.subr.mxu0 0.0
          %4595 = vmatpush2.msra.mxu0 %v4207
          %4596 = vmatprep.subr.mxu0 0.0
          %4597 = vmatpush2.msra.mxu0 %v4206
          %4598 = vmatprep.subr.mxu0 0.0
          %4599 = vmatpush2.msra.mxu0 %v4205
          %4600 = vmatprep.subr.mxu0 0.0
          %4601 = vmatpush2.msra.mxu0 %v4204
          %4602 = vmatprep.subr.mxu0 0.0
          %4603 = vmatpush2.msra.mxu0 %v4203
          %4604 = vmatprep.subr.mxu0 0.0
          %4605 = vmatpush2.msra.mxu0 %v4202
          %4606 = vmatprep.subr.mxu0 0.0
          %4607 = vmatpush2.msra.mxu0 %v4201
          %4608 = vmatprep.subr.mxu0 0.0
          %4609 = vmatpush2.msra.mxu0 %v4200
          %4610 = vmatprep.subr.mxu0 0.0
          %4611 = vmatpush2.msra.mxu0 %v4199
          %4612 = vmatprep.subr.mxu0 0.0
          %4613 = vmatpush2.msra.mxu0 %v4198
          %4614 = vmatprep.subr.mxu0 0.0
          %4615 = vmatpush2.msra.mxu0 %v4197
          %4616 = vmatprep.subr.mxu0 0.0
          %4617 = vmatpush2.msra.mxu0 %v4196
          %4618 = vmatprep.subr.mxu0 0.0
          %4619 = vmatpush2.msra.mxu0 %v4195
          %4620 = vmatprep.mubr.f32.mxu0 %v4066
          %4621 = vmatmul.mubr.f32.gmra.mxu0 %v4064
          %v4622 = vpop.f32.mrf.mxu0
          %v4623 = vadd.f32 %v4553, %v4622
          %v4624 = vpop.f32.mrf.mxu0
          %4625 = vdwg.mxu0
          %4626 = vmatprep.subr.mxu0 0.0
          %4627 = vmatpush1.msra.mxu0 %v4226
          %4628 = vmatprep.subr.mxu0 0.0
          %4629 = vmatpush1.msra.mxu0 %v4225
          %4630 = vmatprep.subr.mxu0 0.0
          %4631 = vmatpush1.msra.mxu0 %v4224
          %4632 = vmatprep.subr.mxu0 0.0
          %4633 = vmatpush1.msra.mxu0 %v4223
          %4634 = vmatprep.subr.mxu0 0.0
          %4635 = vmatpush1.msra.mxu0 %v4222
          %4636 = vmatprep.subr.mxu0 0.0
          %4637 = vmatpush1.msra.mxu0 %v4221
          %4638 = vmatprep.subr.mxu0 0.0
          %4639 = vmatpush1.msra.mxu0 %v4220
          %4640 = vmatprep.subr.mxu0 0.0
          %4641 = vmatpush1.msra.mxu0 %v4219
          %4642 = vmatprep.subr.mxu0 0.0
          %4643 = vmatpush1.msra.mxu0 %v4218
          %4644 = vmatprep.subr.mxu0 0.0
          %4645 = vmatpush1.msra.mxu0 %v4217
          %4646 = vmatprep.subr.mxu0 0.0
          %4647 = vmatpush1.msra.mxu0 %v4216
          %4648 = vmatprep.subr.mxu0 0.0
          %4649 = vmatpush1.msra.mxu0 %v4215
          %4650 = vmatprep.subr.mxu0 0.0
          %4651 = vmatpush1.msra.mxu0 %v4214
          %4652 = vmatprep.subr.mxu0 0.0
          %4653 = vmatpush1.msra.mxu0 %v4213
          %4654 = vmatprep.subr.mxu0 0.0
          %4655 = vmatpush1.msra.mxu0 %v4212
          %4656 = vmatprep.subr.mxu0 0.0
          %4657 = vmatpush1.msra.mxu0 %v4211
          %4658 = vmatprep.subr.mxu0 0.0
          %4659 = vmatpush2.msra.mxu0 %v4242
          %4660 = vmatprep.subr.mxu0 0.0
          %4661 = vmatpush2.msra.mxu0 %v4241
          %4662 = vmatprep.subr.mxu0 0.0
          %4663 = vmatpush2.msra.mxu0 %v4240
          %4664 = vmatprep.subr.mxu0 0.0
          %4665 = vmatpush2.msra.mxu0 %v4239
          %4666 = vmatprep.subr.mxu0 0.0
          %4667 = vmatpush2.msra.mxu0 %v4238
          %4668 = vmatprep.subr.mxu0 0.0
          %4669 = vmatpush2.msra.mxu0 %v4237
          %4670 = vmatprep.subr.mxu0 0.0
          %4671 = vmatpush2.msra.mxu0 %v4236
          %4672 = vmatprep.subr.mxu0 0.0
          %4673 = vmatpush2.msra.mxu0 %v4235
          %4674 = vmatprep.subr.mxu0 0.0
          %4675 = vmatpush2.msra.mxu0 %v4234
          %4676 = vmatprep.subr.mxu0 0.0
          %4677 = vmatpush2.msra.mxu0 %v4233
          %4678 = vmatprep.subr.mxu0 0.0
          %4679 = vmatpush2.msra.mxu0 %v4232
          %4680 = vmatprep.subr.mxu0 0.0
          %4681 = vmatpush2.msra.mxu0 %v4231
          %4682 = vmatprep.subr.mxu0 0.0
          %4683 = vmatpush2.msra.mxu0 %v4230
          %4684 = vmatprep.subr.mxu0 0.0
          %4685 = vmatpush2.msra.mxu0 %v4229
          %4686 = vmatprep.subr.mxu0 0.0
          %4687 = vmatpush2.msra.mxu0 %v4228
          %4688 = vmatprep.subr.mxu0 0.0
          %4689 = vmatpush2.msra.mxu0 %v4227
          %4690 = vmatprep.mubr.f32.mxu0 %v4070
          %4691 = vmatmul.mubr.f32.gmra.mxu0 %v4068
          %v4692 = vpop.f32.mrf.mxu0
          %v4693 = vadd.f32 %v4623, %v4692
          %v4694 = vpop.f32.mrf.mxu0
          %4695 = vdwg.mxu0
          %4696 = vmatprep.subr.mxu0 0.0
          %4697 = vmatpush1.msra.mxu0 %v4258
          %4698 = vmatprep.subr.mxu0 0.0
          %4699 = vmatpush1.msra.mxu0 %v4257
          %4700 = vmatprep.subr.mxu0 0.0
          %4701 = vmatpush1.msra.mxu0 %v4256
          %4702 = vmatprep.subr.mxu0 0.0
          %4703 = vmatpush1.msra.mxu0 %v4255
          %4704 = vmatprep.subr.mxu0 0.0
          %4705 = vmatpush1.msra.mxu0 %v4254
          %4706 = vmatprep.subr.mxu0 0.0
          %4707 = vmatpush1.msra.mxu0 %v4253
          %4708 = vmatprep.subr.mxu0 0.0
          %4709 = vmatpush1.msra.mxu0 %v4252
          %4710 = vmatprep.subr.mxu0 0.0
          %4711 = vmatpush1.msra.mxu0 %v4251
          %4712 = vmatprep.subr.mxu0 0.0
          %4713 = vmatpush1.msra.mxu0 %v4250
          %4714 = vmatprep.subr.mxu0 0.0
          %4715 = vmatpush1.msra.mxu0 %v4249
          %4716 = vmatprep.subr.mxu0 0.0
          %4717 = vmatpush1.msra.mxu0 %v4248
          %4718 = vmatprep.subr.mxu0 0.0
          %4719 = vmatpush1.msra.mxu0 %v4247
          %4720 = vmatprep.subr.mxu0 0.0
          %4721 = vmatpush1.msra.mxu0 %v4246
          %4722 = vmatprep.subr.mxu0 0.0
          %4723 = vmatpush1.msra.mxu0 %v4245
          %4724 = vmatprep.subr.mxu0 0.0
          %4725 = vmatpush1.msra.mxu0 %v4244
          %4726 = vmatprep.subr.mxu0 0.0
          %4727 = vmatpush1.msra.mxu0 %v4243
          %4728 = vmatprep.subr.mxu0 0.0
          %4729 = vmatpush2.msra.mxu0 %v4274
          %4730 = vmatprep.subr.mxu0 0.0
          %4731 = vmatpush2.msra.mxu0 %v4273
          %4732 = vmatprep.subr.mxu0 0.0
          %4733 = vmatpush2.msra.mxu0 %v4272
          %4734 = vmatprep.subr.mxu0 0.0
          %4735 = vmatpush2.msra.mxu0 %v4271
          %4736 = vmatprep.subr.mxu0 0.0
          %4737 = vmatpush2.msra.mxu0 %v4270
          %4738 = vmatprep.subr.mxu0 0.0
          %4739 = vmatpush2.msra.mxu0 %v4269
          %4740 = vmatprep.subr.mxu0 0.0
          %4741 = vmatpush2.msra.mxu0 %v4268
          %4742 = vmatprep.subr.mxu0 0.0
          %4743 = vmatpush2.msra.mxu0 %v4267
          %4744 = vmatprep.subr.mxu0 0.0
          %4745 = vmatpush2.msra.mxu0 %v4266
          %4746 = vmatprep.subr.mxu0 0.0
          %4747 = vmatpush2.msra.mxu0 %v4265
          %4748 = vmatprep.subr.mxu0 0.0
          %4749 = vmatpush2.msra.mxu0 %v4264
          %4750 = vmatprep.subr.mxu0 0.0
          %4751 = vmatpush2.msra.mxu0 %v4263
          %4752 = vmatprep.subr.mxu0 0.0
          %4753 = vmatpush2.msra.mxu0 %v4262
          %4754 = vmatprep.subr.mxu0 0.0
          %4755 = vmatpush2.msra.mxu0 %v4261
          %4756 = vmatprep.subr.mxu0 0.0
          %4757 = vmatpush2.msra.mxu0 %v4260
          %4758 = vmatprep.subr.mxu0 0.0
          %4759 = vmatpush2.msra.mxu0 %v4259
          %4760 = vmatprep.mubr.f32.mxu0 %v4074
          %4761 = vmatmul.mubr.f32.gmra.mxu0 %v4072
          %v4762 = vpop.f32.mrf.mxu0
          %v4763 = vadd.f32 %v4693, %v4762
          %v4764 = vpop.f32.mrf.mxu0
          %4765 = vdwg.mxu0
          %4766 = vmatprep.subr.mxu0 0.0
          %4767 = vmatpush1.msra.mxu0 %v4290
          %4768 = vmatprep.subr.mxu0 0.0
          %4769 = vmatpush1.msra.mxu0 %v4289
          %4770 = vmatprep.subr.mxu0 0.0
          %4771 = vmatpush1.msra.mxu0 %v4288
          %4772 = vmatprep.subr.mxu0 0.0
          %4773 = vmatpush1.msra.mxu0 %v4287
          %4774 = vmatprep.subr.mxu0 0.0
          %4775 = vmatpush1.msra.mxu0 %v4286
          %4776 = vmatprep.subr.mxu0 0.0
          %4777 = vmatpush1.msra.mxu0 %v4285
          %4778 = vmatprep.subr.mxu0 0.0
          %4779 = vmatpush1.msra.mxu0 %v4284
          %4780 = vmatprep.subr.mxu0 0.0
          %4781 = vmatpush1.msra.mxu0 %v4283
          %4782 = vmatprep.subr.mxu0 0.0
          %4783 = vmatpush1.msra.mxu0 %v4282
          %4784 = vmatprep.subr.mxu0 0.0
          %4785 = vmatpush1.msra.mxu0 %v4281
          %4786 = vmatprep.subr.mxu0 0.0
          %4787 = vmatpush1.msra.mxu0 %v4280
          %4788 = vmatprep.subr.mxu0 0.0
          %4789 = vmatpush1.msra.mxu0 %v4279
          %4790 = vmatprep.subr.mxu0 0.0
          %4791 = vmatpush1.msra.mxu0 %v4278
          %4792 = vmatprep.subr.mxu0 0.0
          %4793 = vmatpush1.msra.mxu0 %v4277
          %4794 = vmatprep.subr.mxu0 0.0
          %4795 = vmatpush1.msra.mxu0 %v4276
          %4796 = vmatprep.subr.mxu0 0.0
          %4797 = vmatpush1.msra.mxu0 %v4275
          %4798 = vmatprep.subr.mxu0 0.0
          %4799 = vmatpush2.msra.mxu0 %v4306
          %4800 = vmatprep.subr.mxu0 0.0
          %4801 = vmatpush2.msra.mxu0 %v4305
          %4802 = vmatprep.subr.mxu0 0.0
          %4803 = vmatpush2.msra.mxu0 %v4304
          %4804 = vmatprep.subr.mxu0 0.0
          %4805 = vmatpush2.msra.mxu0 %v4303
          %4806 = vmatprep.subr.mxu0 0.0
          %4807 = vmatpush2.msra.mxu0 %v4302
          %4808 = vmatprep.subr.mxu0 0.0
          %4809 = vmatpush2.msra.mxu0 %v4301
          %4810 = vmatprep.subr.mxu0 0.0
          %4811 = vmatpush2.msra.mxu0 %v4300
          %4812 = vmatprep.subr.mxu0 0.0
          %4813 = vmatpush2.msra.mxu0 %v4299
          %4814 = vmatprep.subr.mxu0 0.0
          %4815 = vmatpush2.msra.mxu0 %v4298
          %4816 = vmatprep.subr.mxu0 0.0
          %4817 = vmatpush2.msra.mxu0 %v4297
          %4818 = vmatprep.subr.mxu0 0.0
          %4819 = vmatpush2.msra.mxu0 %v4296
          %4820 = vmatprep.subr.mxu0 0.0
          %4821 = vmatpush2.msra.mxu0 %v4295
          %4822 = vmatprep.subr.mxu0 0.0
          %4823 = vmatpush2.msra.mxu0 %v4294
          %4824 = vmatprep.subr.mxu0 0.0
          %4825 = vmatpush2.msra.mxu0 %v4293
          %4826 = vmatprep.subr.mxu0 0.0
          %4827 = vmatpush2.msra.mxu0 %v4292
          %4828 = vmatprep.subr.mxu0 0.0
          %4829 = vmatpush2.msra.mxu0 %v4291
          %4830 = vmatprep.mubr.f32.mxu0 %v4078
          %4831 = vmatmul.mubr.f32.gmra.mxu0 %v4076
          %v4832 = vpop.f32.mrf.mxu0
          %v4833 = vadd.f32 %v4763, %v4832
          %v4834 = vpop.f32.mrf.mxu0
          %4835 = vdwg.mxu0
          %4836 = vmatprep.subr.mxu0 0.0
          %4837 = vmatpush1.msra.mxu0 %v4322
          %4838 = vmatprep.subr.mxu0 0.0
          %4839 = vmatpush1.msra.mxu0 %v4321
          %4840 = vmatprep.subr.mxu0 0.0
          %4841 = vmatpush1.msra.mxu0 %v4320
          %4842 = vmatprep.subr.mxu0 0.0
          %4843 = vmatpush1.msra.mxu0 %v4319
          %4844 = vmatprep.subr.mxu0 0.0
          %4845 = vmatpush1.msra.mxu0 %v4318
          %4846 = vmatprep.subr.mxu0 0.0
          %4847 = vmatpush1.msra.mxu0 %v4317
          %4848 = vmatprep.subr.mxu0 0.0
          %4849 = vmatpush1.msra.mxu0 %v4316
          %4850 = vmatprep.subr.mxu0 0.0
          %4851 = vmatpush1.msra.mxu0 %v4315
          %4852 = vmatprep.subr.mxu0 0.0
          %4853 = vmatpush1.msra.mxu0 %v4314
          %4854 = vmatprep.subr.mxu0 0.0
          %4855 = vmatpush1.msra.mxu0 %v4313
          %4856 = vmatprep.subr.mxu0 0.0
          %4857 = vmatpush1.msra.mxu0 %v4312
          %4858 = vmatprep.subr.mxu0 0.0
          %4859 = vmatpush1.msra.mxu0 %v4311
          %4860 = vmatprep.subr.mxu0 0.0
          %4861 = vmatpush1.msra.mxu0 %v4310
          %4862 = vmatprep.subr.mxu0 0.0
          %4863 = vmatpush1.msra.mxu0 %v4309
          %4864 = vmatprep.subr.mxu0 0.0
          %4865 = vmatpush1.msra.mxu0 %v4308
          %4866 = vmatprep.subr.mxu0 0.0
          %4867 = vmatpush1.msra.mxu0 %v4307
          %4868 = vmatprep.subr.mxu0 0.0
          %4869 = vmatpush2.msra.mxu0 %v4338
          %4870 = vmatprep.subr.mxu0 0.0
          %4871 = vmatpush2.msra.mxu0 %v4337
          %4872 = vmatprep.subr.mxu0 0.0
          %4873 = vmatpush2.msra.mxu0 %v4336
          %4874 = vmatprep.subr.mxu0 0.0
          %4875 = vmatpush2.msra.mxu0 %v4335
          %4876 = vmatprep.subr.mxu0 0.0
          %4877 = vmatpush2.msra.mxu0 %v4334
          %4878 = vmatprep.subr.mxu0 0.0
          %4879 = vmatpush2.msra.mxu0 %v4333
          %4880 = vmatprep.subr.mxu0 0.0
          %4881 = vmatpush2.msra.mxu0 %v4332
          %4882 = vmatprep.subr.mxu0 0.0
          %4883 = vmatpush2.msra.mxu0 %v4331
          %4884 = vmatprep.subr.mxu0 0.0
          %4885 = vmatpush2.msra.mxu0 %v4330
          %4886 = vmatprep.subr.mxu0 0.0
          %4887 = vmatpush2.msra.mxu0 %v4329
          %4888 = vmatprep.subr.mxu0 0.0
          %4889 = vmatpush2.msra.mxu0 %v4328
          %4890 = vmatprep.subr.mxu0 0.0
          %4891 = vmatpush2.msra.mxu0 %v4327
          %4892 = vmatprep.subr.mxu0 0.0
          %4893 = vmatpush2.msra.mxu0 %v4326
          %4894 = vmatprep.subr.mxu0 0.0
          %4895 = vmatpush2.msra.mxu0 %v4325
          %4896 = vmatprep.subr.mxu0 0.0
          %4897 = vmatpush2.msra.mxu0 %v4324
          %4898 = vmatprep.subr.mxu0 0.0
          %4899 = vmatpush2.msra.mxu0 %v4323
          %4900 = vmatprep.mubr.f32.mxu0 %v4082
          %4901 = vmatmul.mubr.f32.gmra.mxu0 %v4080
          %v4902 = vpop.f32.mrf.mxu0
          %v4903 = vadd.f32 %v4833, %v4902
          %v4904 = vpop.f32.mrf.mxu0
          %4905 = vdwg.mxu0
          %vm4906 = vcmask 130048
          %v4907 = vsel %vm4906, %v4903, -inf
          %4908 = vmax.xlane.f32.xlu0 %v4907
          %v4909 = vpop.xlane.xlu0 %4908
          %v4910 = vsub.f32 %v4903, %v4909
          %v4911 = vmul.f32 %v4910, 1.442695
          %v4912 = vpow.pop %v4911
          %v4913 = vsel %vm4906, %v4912, 0.0
          %4914 = vadd.xlane.f32.xlu0 %v4913
          %v4915 = vpop.xlane.xlu0 %4914
          %v4916 = vrcp.pop %v4915
          %v4917 = vmul.f32 %v4912, %v4916
          %4918 = vst.msk [vmem:[#allocation15] sm:$0xff] %vm4906, %v4917
        $region80: #{mlp_forward_pallas.1} parent=47 // pred_fallthru
          _
        // Predicated region
        $region81: #{mlp_forward_pallas.1} parent=47 // pred_check
          %p4919 = pneg %p190
        $region82: #{mlp_forward_pallas.1} parent=47 // pred_check_branch
          %4921 = sbr.rel (%p4919) target = $region84
        $region83: #{mlp_forward_pallas.1} parent=47 // pred_region
          %s4923 = ssub.s32 128, 128
          %4924 = vsyncadd [#allocation6], %s4923
          %s4926 = sshll.u32 [#allocation15], 4
          %s4927 = int_to_ptr.vmem [resolvable:$true] %s4926
          %4929 = dma.vmem_to_hbm [thread:$0]  %s4927, 128, %s7, [#allocation6]
        $region84: #{mlp_forward_pallas.1} parent=47 // pred_fallthru
          _
        // Predicated region
        $region85: #{mlp_forward_pallas.1} parent=47 // pred_check
          %p4930 = pneg %p190
        $region86: #{mlp_forward_pallas.1} parent=47 // pred_check_branch
          %4932 = sbr.rel (%p4930) target = $region88
        $region87: #{mlp_forward_pallas.1} parent=47 // pred_region
          %4933 = dma.done [#allocation6], 128
        $region88: #{mlp_forward_pallas.1} parent=47 // pred_fallthru
          _
      $region48: #{mlp_forward_pallas.1} parent=5 // pred_fallthru
        _
      %p4934 = scmp.le.s32.totalorder 2, %s20
      // Predicated region
      $region89: #{mlp_forward_pallas.1} parent=5 // pred_check
        %p4935 = pneg %p4934
      $region90: #{mlp_forward_pallas.1} parent=5 // pred_check_branch
        %4937 = sbr.rel (%p4935) target = $region92
      $region91: #{mlp_forward_pallas.1} parent=5 // pred_region
        %s4938 = ssub.s32 %s20, 2
      $region92: #{mlp_forward_pallas.1} parent=5 // pred_fallthru
        _
    $region6: #{mlp_forward_pallas.1} parent=1 // loop_footer
      %s24 = sadd.s32 1, %s20
    $region7: #{mlp_forward_pallas.1} parent=1 // loop_footer_branch
      %19 = sbr.rel target = $region3
    $region8: #{mlp_forward_pallas.1} parent=1 // loop_exit
      _
    %4939 = vsyncpa [#allocation5], 1
    %s4940 = scalar_lea.sflag [#allocation5], 1
    %4941 = vsyncpa %s4940, 1
    %4942 = vsyncpa [#allocation8], 1
    %4943 = vsyncpa [#allocation11], 1
    %s4944 = scalar_lea.sflag [#allocation11], 1
    %4945 = vsyncpa %s4944, 1
    %4946 = vsyncpa [#allocation14], 1
    %4947 = vsyncpa [#allocation6], 1
    %s4948 = scalar_lea.sflag [#allocation6], 1
    %4949 = vsyncpa %s4948, 1

</llo_original>
